<compile_context>
chip_gen: v7x
topology: tpu7x:2x2x1
jax: 0.10.0
libtpu: 0.0.40
codegen_flags: <defaults>
</compile_context>

<pallas_src>
import functools
import math

import jax
import jax.numpy as jnp
import numpy as np
from jax.experimental import pallas as pl
from jax.experimental.pallas import tpu as pltpu

# ---- small config (consistent with the module: vocab, d_model, nhead, layers, ff trimmed) ----
VOCAB = 64
D_MODEL = 32
NHEAD = 4
HEAD_DIM = D_MODEL // NHEAD
NUM_LAYERS = 2
D_FF = 64
BATCH = 4
SEQ = 8
MAX_LEN = 64
EPS = 1e-5
BIAS_ROWS = 8      # packed bias/LN slab: (NUM_LAYERS, 8, 128)
BIAS_LANES = 128


# ---------------------------------------------------------------------------
# Fused Pallas kernel: all encoder layers + output projection in one shot
# ---------------------------------------------------------------------------
def titan_mac_kernel(x_ref, wqkv_ref, wo_ref, w1_ref, w2_ref, bias_ref,
                     ow_ref, ob_ref, o_ref, *, seq_len):
    """x_ref: (N, D) with N = B*T rows in (b, t) row-major order.

    Row r belongs to token position t = r % seq_len; attention only mixes rows
    that share a token position (PyTorch batch_first=False semantics).
    """
    n = x_ref.shape[0]
    x = x_ref[...]                                                    # (N, D)

    # Same-token-position attention mask, built once and reused by every layer/head.
    row_t = jax.lax.broadcasted_iota(jnp.int32, (n, n), 0) % seq_len
    col_t = jax.lax.broadcasted_iota(jnp.int32, (n, n), 1) % seq_len
    same_t = row_t == col_t
    neg_inf = jnp.float32(-1e30)

    def layer_norm(z, g, b):
        mu = jnp.mean(z, axis=-1, keepdims=True)
        var = jnp.mean((z - mu) ** 2, axis=-1, keepdims=True)
        return (z - mu) * jax.lax.rsqrt(var + EPS) * g + b

    for layer in range(NUM_LAYERS):                                   # static unroll (2 layers)
        wqkv = wqkv_ref[layer]                                        # (D, 3D), Q pre-scaled
        wo = wo_ref[layer]                                            # (D, D)
        w1 = w1_ref[layer]                                            # (D, D_FF)
        w2 = w2_ref[layer]                                            # (D_FF, D)
        biases = bias_ref[layer]                                      # (8, 128) packed slab
        b_qkv = biases[0:1, :3 * D_MODEL]                             # (1, 3D), Q part pre-scaled
        b_o   = biases[1:2, :D_MODEL]
        b_1   = biases[2:3, :D_FF]
        b_2   = biases[3:4, :D_MODEL]
        g1    = biases[4:5, :D_MODEL]
        beta1 = biases[5:6, :D_MODEL]
        g2    = biases[6:7, :D_MODEL]
        beta2 = biases[7:8, :D_MODEL]

        # Fused QKV projection: one MXU push for all of Q, K, V.
        qkv = jnp.dot(x, wqkv, preferred_element_type=jnp.float32) + b_qkv   # (N, 3D)

        ctx_heads = []
        for h in range(NHEAD):                                        # static unroll over heads
            lo = h * HEAD_DIM
            qh = qkv[:, lo:lo + HEAD_DIM]                             # (N, Hd), already scaled
            kh = qkv[:, D_MODEL + lo:D_MODEL + lo + HEAD_DIM]
            vh = qkv[:, 2 * D_MODEL + lo:2 * D_MODEL + lo + HEAD_DIM]
            # scores: contract last axes directly (no explicit transpose).
            s = jax.lax.dot_general(qh, kh, (((1,), (1,)), ((), ())),
                                    preferred_element_type=jnp.float32)      # (N, N)
            s = jnp.where(same_t, s, neg_inf)
            s = s - jnp.max(s, axis=-1, keepdims=True)
            p = jnp.exp(s)
            p = p * pl.reciprocal(jnp.sum(p, axis=-1, keepdims=True))
            ctx_heads.append(jnp.dot(p, vh, preferred_element_type=jnp.float32))
        ctx = jnp.concatenate(ctx_heads, axis=-1)                     # (N, D), stays in vregs

        a = jnp.dot(ctx, wo, preferred_element_type=jnp.float32) + b_o
        h1 = layer_norm(x + a, g1, beta1)

        f = jnp.dot(h1, w1, preferred_element_type=jnp.float32) + b_1
        f = jnp.maximum(f, 0.0)                                       # ReLU
        f = jnp.dot(f, w2, preferred_element_type=jnp.float32) + b_2

        x = layer_norm(h1 + f, g2, beta2)

    # Vocab projection, single store of the full (N, V) slab.
    o_ref[...] = (jnp.dot(x, ow_ref[...], preferred_element_type=jnp.float32)
                  + ob_ref[...])


# ---------------------------------------------------------------------------
# Wrapper
# ---------------------------------------------------------------------------
def titan_mac_forward(tokens, packed):
    """tokens: (B, T) int32 -> logits (B, T, VOCAB) float32."""
    B, T = tokens.shape
    N = B * T
    # Embedding gather * sqrt(d_model) + positional encoding (fused by XLA into one gather op).
    x = (packed["embedding"][tokens] * jnp.sqrt(jnp.float32(D_MODEL))
         + packed["pe"][:T][None, :, :]).reshape(N, D_MODEL)

    in_specs = [
        pl.BlockSpec((N, D_MODEL), lambda i: (0, 0)),
        pl.BlockSpec((NUM_LAYERS, D_MODEL, 3 * D_MODEL), lambda i: (0, 0, 0)),
        pl.BlockSpec((NUM_LAYERS, D_MODEL, D_MODEL), lambda i: (0, 0, 0)),
        pl.BlockSpec((NUM_LAYERS, D_MODEL, D_FF), lambda i: (0, 0, 0)),
        pl.BlockSpec((NUM_LAYERS, D_FF, D_MODEL), lambda i: (0, 0, 0)),
        pl.BlockSpec((NUM_LAYERS, BIAS_ROWS, BIAS_LANES), lambda i: (0, 0, 0)),
        pl.BlockSpec((D_MODEL, VOCAB), lambda i: (0, 0)),
        pl.BlockSpec((1, VOCAB), lambda i: (0, 0)),
    ]
    out_spec = pl.BlockSpec((N, VOCAB), lambda i: (0, 0))

    logits2d = pl.pallas_call(
        functools.partial(titan_mac_kernel, seq_len=T),
        out_shape=jax.ShapeDtypeStruct((N, VOCAB), jnp.float32),
        grid_spec=pltpu.PrefetchScalarGridSpec(
            num_scalar_prefetch=0,
            grid=(1,),
            in_specs=in_specs,
            out_specs=out_spec,
        ),
        compiler_params=pltpu.CompilerParams(dimension_semantics=("arbitrary",)),
    )(x, packed["wqkv"], packed["wo"], packed["w1"], packed["w2"],
      packed["bias"], packed["out_w_t"], packed["out_b"])

    return logits2d.reshape(B, T, VOCAB)


# ---------------------------------------------------------------------------
# Deterministic parameter init (shapes follow the PyTorch module __init__)
# ---------------------------------------------------------------------------
def _xavier(key, shape):  # shape = (out, in)
    bound = math.sqrt(6.0 / (shape[0] + shape[1]))
    return jax.random.uniform(key, shape, jnp.float32, -bound, bound)


def init_params(key):
    keys = jax.random.split(key, 4 + NUM_LAYERS)
    params = {}
    params["embedding"] = jax.random.uniform(keys[0], (VOCAB, D_MODEL), jnp.float32, -0.1, 0.1)
    out_w = jax.random.uniform(keys[1], (VOCAB, D_MODEL), jnp.float32, -0.1, 0.1)
    params["out_w_t"] = jnp.transpose(out_w)                # (D, V)
    params["out_b"] = jnp.zeros((1, VOCAB), jnp.float32)

    # sinusoidal positional encoding (PositionalEncoding buffer)
    pos = np.arange(MAX_LEN, dtype=np.float32)[:, None]
    div = np.exp(np.arange(0, D_MODEL, 2, dtype=np.float32) * (-np.log(10000.0) / D_MODEL))
    pe = np.zeros((MAX_LEN, D_MODEL), np.float32)
    pe[:, 0::2] = np.sin(pos * div)
    pe[:, 1::2] = np.cos(pos * div)
    params["pe"] = jnp.asarray(pe)

    layers = []
    for i in range(NUM_LAYERS):
        k = jax.random.split(keys[4 + i], 8)
        in_proj = _xavier(k[0], (3 * D_MODEL, D_MODEL))     # MHA in_proj_weight
        wq, wk, wv = in_proj[:D_MODEL], in_proj[D_MODEL:2 * D_MODEL], in_proj[2 * D_MODEL:]
        layers.append(dict(
            wq=jnp.transpose(wq), bq=jnp.zeros((1, D_MODEL), jnp.float32),
            wk=jnp.transpose(wk), bk=jnp.zeros((1, D_MODEL), jnp.float32),
            wv=jnp.transpose(wv), bv=jnp.zeros((1, D_MODEL), jnp.float32),
            wo=jnp.transpose(_xavier(k[1], (D_MODEL, D_MODEL))), bo=jnp.zeros((1, D_MODEL), jnp.float32),
            g1=jnp.ones((1, D_MODEL), jnp.float32), beta1=jnp.zeros((1, D_MODEL), jnp.float32),
            w1=jnp.transpose(_xavier(k[2], (D_FF, D_MODEL))),
            b1=jax.random.uniform(k[3], (1, D_FF), jnp.float32, -0.05, 0.05),
            w2=jnp.transpose(_xavier(k[4], (D_MODEL, D_FF))),
            b2=jax.random.uniform(k[5], (1, D_MODEL), jnp.float32, -0.05, 0.05),
            g2=jnp.ones((1, D_MODEL), jnp.float32), beta2=jnp.zeros((1, D_MODEL), jnp.float32),
        ))
    params["layers"] = layers
    return params


def pack_params(params):
    """Pack the logical per-layer params into the few stacked arrays the fused kernel consumes.

    Folds the 1/sqrt(head_dim) attention scale into the Q projection weights/bias.
    """
    scale = 1.0 / math.sqrt(HEAD_DIM)
    wqkv_l, wo_l, w1_l, w2_l, bias_l = [], [], [], [], []
    for lp in params["layers"]:
        wqkv_l.append(jnp.concatenate([lp["wq"] * scale, lp["wk"], lp["wv"]], axis=1))  # (D, 3D)
        wo_l.append(lp["wo"])
        w1_l.append(lp["w1"])
        w2_l.append(lp["w2"])
        bias = jnp.zeros((BIAS_ROWS, BIAS_LANES), jnp.float32)
        bias = bias.at[0, :3 * D_MODEL].set(
            jnp.concatenate([lp["bq"][0] * scale, lp["bk"][0], lp["bv"][0]]))
        bias = bias.at[1, :D_MODEL].set(lp["bo"][0])
        bias = bias.at[2, :D_FF].set(lp["b1"][0])
        bias = bias.at[3, :D_MODEL].set(lp["b2"][0])
        bias = bias.at[4, :D_MODEL].set(lp["g1"][0])
        bias = bias.at[5, :D_MODEL].set(lp["beta1"][0])
        bias = bias.at[6, :D_MODEL].set(lp["g2"][0])
        bias = bias.at[7, :D_MODEL].set(lp["beta2"][0])
        bias_l.append(bias)
    return dict(
        embedding=params["embedding"], pe=params["pe"],
        out_w_t=params["out_w_t"], out_b=params["out_b"],
        wqkv=jnp.stack(wqkv_l), wo=jnp.stack(wo_l),
        w1=jnp.stack(w1_l), w2=jnp.stack(w2_l), bias=jnp.stack(bias_l),
    )


# ---------------------------------------------------------------------------
# Pure-JAX reference (independent formulation) for a sanity check of the kernel
# ---------------------------------------------------------------------------
def ref_forward(tokens, params):
    emb = params["embedding"][tokens] * jnp.sqrt(jnp.float32(D_MODEL))
    emb = emb + params["pe"][:tokens.shape[1]][None]
    x = jnp.transpose(emb, (1, 0, 2))                       # (T, L, D): attention over L (=batch)
    for lp in params["layers"]:
        T, L, D = x.shape
        q = x @ lp["wq"] + lp["bq"]
        k = x @ lp["wk"] + lp["bk"]
        v = x @ lp["wv"] + lp["bv"]
        qh = q.reshape(T, L, NHEAD, HEAD_DIM)
        kh = k.reshape(T, L, NHEAD, HEAD_DIM)
        vh = v.reshape(T, L, NHEAD, HEAD_DIM)
        s = jnp.einsum("tlhd,tmhd->thlm", qh, kh) / math.sqrt(HEAD_DIM)
        p = jax.nn.softmax(s, axis=-1)
        a = jnp.einsum("thlm,tmhd->tlhd", p, vh).reshape(T, L, D)
        a = a @ lp["wo"] + lp["bo"]

        def ln(z, g, b):
            mu = z.mean(-1, keepdims=True)
            var = ((z - mu) ** 2).mean(-1, keepdims=True)
            return (z - mu) / jnp.sqrt(var + EPS) * g + b

        h1 = ln(x + a, lp["g1"], lp["beta1"])
        f = jnp.maximum(h1 @ lp["w1"] + lp["b1"], 0.0)
        f = f @ lp["w2"] + lp["b2"]
        x = ln(h1 + f, lp["g2"], lp["beta2"])
    logits = x @ params["out_w_t"] + params["out_b"]
    return jnp.transpose(logits, (1, 0, 2))                 # (B, T, V)


# ---------------------------------------------------------------------------
if __name__ == "__main__":
    key = jax.random.PRNGKey(0)
    pkey, tkey = jax.random.split(key)
    params = init_params(pkey)
    packed = pack_params(params)
    tokens = jax.random.randint(tkey, (BATCH, SEQ), 0, VOCAB, dtype=jnp.int32)

    logits = titan_mac_forward(tokens, packed)
    logits = jax.block_until_ready(logits)
    assert logits.shape == (BATCH, SEQ, VOCAB)

    ref = jax.block_until_ready(ref_forward(tokens, params))
    if not np.allclose(np.asarray(logits), np.asarray(ref), rtol=1e-3, atol=1e-3):
        raise SystemExit("Pallas output does not match reference")

    print("KERNEL_OK")
</pallas_src>

<mosaic_0001>
module attributes {stable_mosaic.version = 11 : i64} {
  func.func @titan_mac_kernel(%arg0: i32, %arg1: memref<32x32xf32, #tpu.memory_space<vmem>>, %arg2: memref<2x32x96xf32, #tpu.memory_space<vmem>>, %arg3: memref<2x32x32xf32, #tpu.memory_space<vmem>>, %arg4: memref<2x32x64xf32, #tpu.memory_space<vmem>>, %arg5: memref<2x64x32xf32, #tpu.memory_space<vmem>>, %arg6: memref<2x8x128xf32, #tpu.memory_space<vmem>>, %arg7: memref<32x64xf32, #tpu.memory_space<vmem>>, %arg8: memref<1x64xf32, #tpu.memory_space<vmem>>, %arg9: memref<32x64xf32, #tpu.memory_space<vmem>>) attributes {dimension_semantics = [#tpu.dimension_semantics<arbitrary>], iteration_bounds = array<i64: 1>, scalar_prefetch = 0 : i64, scratch_operands = 0 : i64, tpu.core_type = #tpu.core_type<tc>, window_params = [{pipeline_mode = #tpu.pipeline_mode<synchronous>, transform_indices = @transform_0, window_bounds = array<i64: 32, 32>}, {pipeline_mode = #tpu.pipeline_mode<synchronous>, transform_indices = @transform_1, window_bounds = array<i64: 2, 32, 96>}, {pipeline_mode = #tpu.pipeline_mode<synchronous>, transform_indices = @transform_2, window_bounds = array<i64: 2, 32, 32>}, {pipeline_mode = #tpu.pipeline_mode<synchronous>, transform_indices = @transform_3, window_bounds = array<i64: 2, 32, 64>}, {pipeline_mode = #tpu.pipeline_mode<synchronous>, transform_indices = @transform_4, window_bounds = array<i64: 2, 64, 32>}, {pipeline_mode = #tpu.pipeline_mode<synchronous>, transform_indices = @transform_5, window_bounds = array<i64: 2, 8, 128>}, {pipeline_mode = #tpu.pipeline_mode<synchronous>, transform_indices = @transform_6, window_bounds = array<i64: 32, 64>}, {pipeline_mode = #tpu.pipeline_mode<synchronous>, transform_indices = @transform_7, window_bounds = array<i64: 1, 64>}, {pipeline_mode = #tpu.pipeline_mode<synchronous>, transform_indices = @transform_8, window_bounds = array<i64: 32, 64>}]} {
    %c0 = arith.constant 0 : index
    %c0_0 = arith.constant 0 : index
    %0 = vector.load %arg1[%c0, %c0_0] : memref<32x32xf32, #tpu.memory_space<vmem>>, vector<32x32xf32>
    %1 = tpu.iota {dimensions = array<i32: 0>} : vector<32x32xi32>
    %c8_i32 = arith.constant 8 : i32
    %c0_i32 = arith.constant 0 : i32
    %2 = arith.cmpi eq, %c8_i32, %c0_i32 : i32
    %c1_i32 = arith.constant 1 : i32
    %3 = arith.select %2, %c1_i32, %c8_i32 : i32
    %4 = vector.broadcast %3 : i32 to vector<32x32xi32>
    %5 = arith.remsi %1, %4 : vector<32x32xi32>
    %c0_i32_1 = arith.constant 0 : i32
    %6 = vector.broadcast %c0_i32_1 : i32 to vector<32x32xi32>
    %7 = arith.cmpi ne, %5, %6 : vector<32x32xi32>
    %c0_i32_2 = arith.constant 0 : i32
    %8 = vector.broadcast %c0_i32_2 : i32 to vector<32x32xi32>
    %9 = arith.cmpi slt, %5, %8 : vector<32x32xi32>
    %c0_i32_3 = arith.constant 0 : i32
    %10 = arith.cmpi slt, %3, %c0_i32_3 : i32
    %11 = vector.broadcast %10 : i1 to vector<32x32xi1>
    %12 = vector.broadcast %11 : vector<32x32xi1> to vector<32x32xi1>
    %13 = arith.xori %9, %12 : vector<32x32xi1>
    %14 = arith.andi %13, %7 : vector<32x32xi1>
    %15 = vector.broadcast %3 : i32 to vector<32x32xi32>
    %16 = arith.addi %5, %15 : vector<32x32xi32>
    %17 = arith.select %14, %16, %5 : vector<32x32xi1>, vector<32x32xi32>
    %18 = tpu.iota {dimensions = array<i32: 1>} : vector<32x32xi32>
    %c8_i32_4 = arith.constant 8 : i32
    %c0_i32_5 = arith.constant 0 : i32
    %19 = arith.cmpi eq, %c8_i32_4, %c0_i32_5 : i32
    %c1_i32_6 = arith.constant 1 : i32
    %20 = arith.select %19, %c1_i32_6, %c8_i32_4 : i32
    %21 = vector.broadcast %20 : i32 to vector<32x32xi32>
    %22 = arith.remsi %18, %21 : vector<32x32xi32>
    %c0_i32_7 = arith.constant 0 : i32
    %23 = vector.broadcast %c0_i32_7 : i32 to vector<32x32xi32>
    %24 = arith.cmpi ne, %22, %23 : vector<32x32xi32>
    %c0_i32_8 = arith.constant 0 : i32
    %25 = vector.broadcast %c0_i32_8 : i32 to vector<32x32xi32>
    %26 = arith.cmpi slt, %22, %25 : vector<32x32xi32>
    %c0_i32_9 = arith.constant 0 : i32
    %27 = arith.cmpi slt, %20, %c0_i32_9 : i32
    %28 = vector.broadcast %27 : i1 to vector<32x32xi1>
    %29 = vector.broadcast %28 : vector<32x32xi1> to vector<32x32xi1>
    %30 = arith.xori %26, %29 : vector<32x32xi1>
    %31 = arith.andi %30, %24 : vector<32x32xi1>
    %32 = vector.broadcast %20 : i32 to vector<32x32xi32>
    %33 = arith.addi %22, %32 : vector<32x32xi32>
    %34 = arith.select %31, %33, %22 : vector<32x32xi1>, vector<32x32xi32>
    %35 = arith.cmpi eq, %17, %34 : vector<32x32xi32>
    %c0_10 = arith.constant 0 : index
    %c0_11 = arith.constant 0 : index
    %c0_12 = arith.constant 0 : index
    %36 = vector.load %arg2[%c0_10, %c0_11, %c0_12] : memref<2x32x96xf32, #tpu.memory_space<vmem>>, vector<1x32x96xf32>
    %37 = vector.shape_cast %36 : vector<1x32x96xf32> to vector<32x96xf32>
    %c0_13 = arith.constant 0 : index
    %c0_14 = arith.constant 0 : index
    %c0_15 = arith.constant 0 : index
    %38 = vector.load %arg3[%c0_13, %c0_14, %c0_15] : memref<2x32x32xf32, #tpu.memory_space<vmem>>, vector<1x32x32xf32>
    %39 = vector.shape_cast %38 : vector<1x32x32xf32> to vector<32x32xf32>
    %c0_16 = arith.constant 0 : index
    %c0_17 = arith.constant 0 : index
    %c0_18 = arith.constant 0 : index
    %40 = vector.load %arg4[%c0_16, %c0_17, %c0_18] : memref<2x32x64xf32, #tpu.memory_space<vmem>>, vector<1x32x64xf32>
    %41 = vector.shape_cast %40 : vector<1x32x64xf32> to vector<32x64xf32>
    %c0_19 = arith.constant 0 : index
    %c0_20 = arith.constant 0 : index
    %c0_21 = arith.constant 0 : index
    %42 = vector.load %arg5[%c0_19, %c0_20, %c0_21] : memref<2x64x32xf32, #tpu.memory_space<vmem>>, vector<1x64x32xf32>
    %43 = vector.shape_cast %42 : vector<1x64x32xf32> to vector<64x32xf32>
    %c0_22 = arith.constant 0 : index
    %c0_23 = arith.constant 0 : index
    %c0_24 = arith.constant 0 : index
    %44 = vector.load %arg6[%c0_22, %c0_23, %c0_24] : memref<2x8x128xf32, #tpu.memory_space<vmem>>, vector<1x8x128xf32>
    %45 = vector.shape_cast %44 : vector<1x8x128xf32> to vector<8x128xf32>
    %46 = vector.extract_strided_slice %45 {offsets = [0, 0], sizes = [1, 96], strides = [1, 1]} : vector<8x128xf32> to vector<1x96xf32>
    %47 = vector.extract_strided_slice %45 {offsets = [1, 0], sizes = [1, 32], strides = [1, 1]} : vector<8x128xf32> to vector<1x32xf32>
    %48 = vector.extract_strided_slice %45 {offsets = [2, 0], sizes = [1, 64], strides = [1, 1]} : vector<8x128xf32> to vector<1x64xf32>
    %49 = vector.extract_strided_slice %45 {offsets = [3, 0], sizes = [1, 32], strides = [1, 1]} : vector<8x128xf32> to vector<1x32xf32>
    %50 = vector.extract_strided_slice %45 {offsets = [4, 0], sizes = [1, 32], strides = [1, 1]} : vector<8x128xf32> to vector<1x32xf32>
    %51 = vector.extract_strided_slice %45 {offsets = [5, 0], sizes = [1, 32], strides = [1, 1]} : vector<8x128xf32> to vector<1x32xf32>
    %52 = vector.extract_strided_slice %45 {offsets = [6, 0], sizes = [1, 32], strides = [1, 1]} : vector<8x128xf32> to vector<1x32xf32>
    %53 = vector.extract_strided_slice %45 {offsets = [7, 0], sizes = [1, 32], strides = [1, 1]} : vector<8x128xf32> to vector<1x32xf32>
    %cst = arith.constant dense<0.000000e+00> : vector<32x96xf32>
    %54 = tpu.matmul %0, %37, %cst {dimension_numbers = #tpu.dot_dimension_numbers<[1], [0], [0], [1], [0, 0, 1, 1], [], []>} : vector<32x32xf32>, vector<32x96xf32>, vector<32x96xf32> -> vector<32x96xf32>
    %55 = vector.broadcast %46 : vector<1x96xf32> to vector<32x96xf32>
    %56 = arith.addf %54, %55 : vector<32x96xf32>
    %57 = vector.extract_strided_slice %56 {offsets = [0, 0], sizes = [32, 8], strides = [1, 1]} : vector<32x96xf32> to vector<32x8xf32>
    %58 = vector.extract_strided_slice %56 {offsets = [0, 32], sizes = [32, 8], strides = [1, 1]} : vector<32x96xf32> to vector<32x8xf32>
    %59 = vector.extract_strided_slice %56 {offsets = [0, 64], sizes = [32, 8], strides = [1, 1]} : vector<32x96xf32> to vector<32x8xf32>
    %cst_25 = arith.constant dense<0.000000e+00> : vector<32x32xf32>
    %60 = tpu.matmul %57, %58, %cst_25 {dimension_numbers = #tpu.dot_dimension_numbers<[1], [1], [0], [0], [0, 0, 1, 0], [], []>} : vector<32x8xf32>, vector<32x8xf32>, vector<32x32xf32> -> vector<32x32xf32>
    %cst_26 = arith.constant -1.000000e+30 : f32
    %61 = vector.broadcast %cst_26 : f32 to vector<32x32xf32>
    %62 = arith.select %35, %60, %61 : vector<32x32xi1>, vector<32x32xf32>
    %cst_27 = arith.constant dense<0xFF800000> : vector<32xf32>
    %63 = vector.multi_reduction <maximumf>, %62, %cst_27 [1] : vector<32x32xf32> to vector<32xf32>
    %64 = vector.shape_cast %63 : vector<32xf32> to vector<32x1xf32>
    %65 = vector.broadcast %64 : vector<32x1xf32> to vector<32x32xf32>
    %66 = arith.subf %62, %65 : vector<32x32xf32>
    %67 = math.exp %66 : vector<32x32xf32>
    %cst_28 = arith.constant dense<0.000000e+00> : vector<32xf32>
    %68 = vector.multi_reduction <add>, %67, %cst_28 [1] : vector<32x32xf32> to vector<32xf32>
    %69 = vector.shape_cast %68 : vector<32xf32> to vector<32x1xf32>
    %70 = tpu.reciprocal %69 : vector<32x1xf32> -> vector<32x1xf32>
    %71 = vector.broadcast %70 : vector<32x1xf32> to vector<32x32xf32>
    %72 = arith.mulf %67, %71 : vector<32x32xf32>
    %cst_29 = arith.constant dense<0.000000e+00> : vector<32x8xf32>
    %73 = tpu.matmul %72, %59, %cst_29 {dimension_numbers = #tpu.dot_dimension_numbers<[1], [0], [0], [1], [0, 0, 1, 1], [], []>} : vector<32x32xf32>, vector<32x8xf32>, vector<32x8xf32> -> vector<32x8xf32>
    %74 = vector.extract_strided_slice %56 {offsets = [0, 8], sizes = [32, 8], strides = [1, 1]} : vector<32x96xf32> to vector<32x8xf32>
    %75 = vector.extract_strided_slice %56 {offsets = [0, 40], sizes = [32, 8], strides = [1, 1]} : vector<32x96xf32> to vector<32x8xf32>
    %76 = vector.extract_strided_slice %56 {offsets = [0, 72], sizes = [32, 8], strides = [1, 1]} : vector<32x96xf32> to vector<32x8xf32>
    %cst_30 = arith.constant dense<0.000000e+00> : vector<32x32xf32>
    %77 = tpu.matmul %74, %75, %cst_30 {dimension_numbers = #tpu.dot_dimension_numbers<[1], [1], [0], [0], [0, 0, 1, 0], [], []>} : vector<32x8xf32>, vector<32x8xf32>, vector<32x32xf32> -> vector<32x32xf32>
    %cst_31 = arith.constant -1.000000e+30 : f32
    %78 = vector.broadcast %cst_31 : f32 to vector<32x32xf32>
    %79 = arith.select %35, %77, %78 : vector<32x32xi1>, vector<32x32xf32>
    %cst_32 = arith.constant dense<0xFF800000> : vector<32xf32>
    %80 = vector.multi_reduction <maximumf>, %79, %cst_32 [1] : vector<32x32xf32> to vector<32xf32>
    %81 = vector.shape_cast %80 : vector<32xf32> to vector<32x1xf32>
    %82 = vector.broadcast %81 : vector<32x1xf32> to vector<32x32xf32>
    %83 = arith.subf %79, %82 : vector<32x32xf32>
    %84 = math.exp %83 : vector<32x32xf32>
    %cst_33 = arith.constant dense<0.000000e+00> : vector<32xf32>
    %85 = vector.multi_reduction <add>, %84, %cst_33 [1] : vector<32x32xf32> to vector<32xf32>
    %86 = vector.shape_cast %85 : vector<32xf32> to vector<32x1xf32>
    %87 = tpu.reciprocal %86 : vector<32x1xf32> -> vector<32x1xf32>
    %88 = vector.broadcast %87 : vector<32x1xf32> to vector<32x32xf32>
    %89 = arith.mulf %84, %88 : vector<32x32xf32>
    %cst_34 = arith.constant dense<0.000000e+00> : vector<32x8xf32>
    %90 = tpu.matmul %89, %76, %cst_34 {dimension_numbers = #tpu.dot_dimension_numbers<[1], [0], [0], [1], [0, 0, 1, 1], [], []>} : vector<32x32xf32>, vector<32x8xf32>, vector<32x8xf32> -> vector<32x8xf32>
    %91 = vector.extract_strided_slice %56 {offsets = [0, 16], sizes = [32, 8], strides = [1, 1]} : vector<32x96xf32> to vector<32x8xf32>
    %92 = vector.extract_strided_slice %56 {offsets = [0, 48], sizes = [32, 8], strides = [1, 1]} : vector<32x96xf32> to vector<32x8xf32>
    %93 = vector.extract_strided_slice %56 {offsets = [0, 80], sizes = [32, 8], strides = [1, 1]} : vector<32x96xf32> to vector<32x8xf32>
    %cst_35 = arith.constant dense<0.000000e+00> : vector<32x32xf32>
    %94 = tpu.matmul %91, %92, %cst_35 {dimension_numbers = #tpu.dot_dimension_numbers<[1], [1], [0], [0], [0, 0, 1, 0], [], []>} : vector<32x8xf32>, vector<32x8xf32>, vector<32x32xf32> -> vector<32x32xf32>
    %cst_36 = arith.constant -1.000000e+30 : f32
    %95 = vector.broadcast %cst_36 : f32 to vector<32x32xf32>
    %96 = arith.select %35, %94, %95 : vector<32x32xi1>, vector<32x32xf32>
    %cst_37 = arith.constant dense<0xFF800000> : vector<32xf32>
    %97 = vector.multi_reduction <maximumf>, %96, %cst_37 [1] : vector<32x32xf32> to vector<32xf32>
    %98 = vector.shape_cast %97 : vector<32xf32> to vector<32x1xf32>
    %99 = vector.broadcast %98 : vector<32x1xf32> to vector<32x32xf32>
    %100 = arith.subf %96, %99 : vector<32x32xf32>
    %101 = math.exp %100 : vector<32x32xf32>
    %cst_38 = arith.constant dense<0.000000e+00> : vector<32xf32>
    %102 = vector.multi_reduction <add>, %101, %cst_38 [1] : vector<32x32xf32> to vector<32xf32>
    %103 = vector.shape_cast %102 : vector<32xf32> to vector<32x1xf32>
    %104 = tpu.reciprocal %103 : vector<32x1xf32> -> vector<32x1xf32>
    %105 = vector.broadcast %104 : vector<32x1xf32> to vector<32x32xf32>
    %106 = arith.mulf %101, %105 : vector<32x32xf32>
    %cst_39 = arith.constant dense<0.000000e+00> : vector<32x8xf32>
    %107 = tpu.matmul %106, %93, %cst_39 {dimension_numbers = #tpu.dot_dimension_numbers<[1], [0], [0], [1], [0, 0, 1, 1], [], []>} : vector<32x32xf32>, vector<32x8xf32>, vector<32x8xf32> -> vector<32x8xf32>
    %108 = vector.extract_strided_slice %56 {offsets = [0, 24], sizes = [32, 8], strides = [1, 1]} : vector<32x96xf32> to vector<32x8xf32>
    %109 = vector.extract_strided_slice %56 {offsets = [0, 56], sizes = [32, 8], strides = [1, 1]} : vector<32x96xf32> to vector<32x8xf32>
    %110 = vector.extract_strided_slice %56 {offsets = [0, 88], sizes = [32, 8], strides = [1, 1]} : vector<32x96xf32> to vector<32x8xf32>
    %cst_40 = arith.constant dense<0.000000e+00> : vector<32x32xf32>
    %111 = tpu.matmul %108, %109, %cst_40 {dimension_numbers = #tpu.dot_dimension_numbers<[1], [1], [0], [0], [0, 0, 1, 0], [], []>} : vector<32x8xf32>, vector<32x8xf32>, vector<32x32xf32> -> vector<32x32xf32>
    %cst_41 = arith.constant -1.000000e+30 : f32
    %112 = vector.broadcast %cst_41 : f32 to vector<32x32xf32>
    %113 = arith.select %35, %111, %112 : vector<32x32xi1>, vector<32x32xf32>
    %cst_42 = arith.constant dense<0xFF800000> : vector<32xf32>
    %114 = vector.multi_reduction <maximumf>, %113, %cst_42 [1] : vector<32x32xf32> to vector<32xf32>
    %115 = vector.shape_cast %114 : vector<32xf32> to vector<32x1xf32>
    %116 = vector.broadcast %115 : vector<32x1xf32> to vector<32x32xf32>
    %117 = arith.subf %113, %116 : vector<32x32xf32>
    %118 = math.exp %117 : vector<32x32xf32>
    %cst_43 = arith.constant dense<0.000000e+00> : vector<32xf32>
    %119 = vector.multi_reduction <add>, %118, %cst_43 [1] : vector<32x32xf32> to vector<32xf32>
    %120 = vector.shape_cast %119 : vector<32xf32> to vector<32x1xf32>
    %121 = tpu.reciprocal %120 : vector<32x1xf32> -> vector<32x1xf32>
    %122 = vector.broadcast %121 : vector<32x1xf32> to vector<32x32xf32>
    %123 = arith.mulf %118, %122 : vector<32x32xf32>
    %cst_44 = arith.constant dense<0.000000e+00> : vector<32x8xf32>
    %124 = tpu.matmul %123, %110, %cst_44 {dimension_numbers = #tpu.dot_dimension_numbers<[1], [0], [0], [1], [0, 0, 1, 1], [], []>} : vector<32x32xf32>, vector<32x8xf32>, vector<32x8xf32> -> vector<32x8xf32>
    %125 = tpu.concatenate %73, %90, %107, %124 in 1 : vector<32x8xf32>, vector<32x8xf32>, vector<32x8xf32>, vector<32x8xf32> -> vector<32x32xf32>
    %cst_45 = arith.constant dense<0.000000e+00> : vector<32x32xf32>
    %126 = tpu.matmul %125, %39, %cst_45 {dimension_numbers = #tpu.dot_dimension_numbers<[1], [0], [0], [1], [0, 0, 1, 1], [], []>} : vector<32x32xf32>, vector<32x32xf32>, vector<32x32xf32> -> vector<32x32xf32>
    %127 = vector.broadcast %47 : vector<1x32xf32> to vector<32x32xf32>
    %128 = arith.addf %126, %127 : vector<32x32xf32>
    %129 = arith.addf %0, %128 : vector<32x32xf32>
    %cst_46 = arith.constant dense<0.000000e+00> : vector<32xf32>
    %130 = vector.multi_reduction <add>, %129, %cst_46 [1] : vector<32x32xf32> to vector<32xf32>
    %131 = vector.shape_cast %130 : vector<32xf32> to vector<32x1xf32>
    %cst_47 = arith.constant 3.200000e+01 : f32
    %132 = vector.broadcast %cst_47 : f32 to vector<32x1xf32>
    %133 = arith.divf %131, %132 : vector<32x1xf32>
    %134 = vector.broadcast %133 : vector<32x1xf32> to vector<32x32xf32>
    %135 = arith.subf %129, %134 : vector<32x32xf32>
    %136 = arith.mulf %135, %135 : vector<32x32xf32>
    %cst_48 = arith.constant dense<0.000000e+00> : vector<32xf32>
    %137 = vector.multi_reduction <add>, %136, %cst_48 [1] : vector<32x32xf32> to vector<32xf32>
    %138 = vector.shape_cast %137 : vector<32xf32> to vector<32x1xf32>
    %cst_49 = arith.constant 3.200000e+01 : f32
    %139 = vector.broadcast %cst_49 : f32 to vector<32x1xf32>
    %140 = arith.divf %138, %139 : vector<32x1xf32>
    %141 = vector.broadcast %133 : vector<32x1xf32> to vector<32x32xf32>
    %142 = arith.subf %129, %141 : vector<32x32xf32>
    %cst_50 = arith.constant 9.99999974E-6 : f32
    %143 = vector.broadcast %cst_50 : f32 to vector<32x1xf32>
    %144 = arith.addf %140, %143 : vector<32x1xf32>
    %145 = math.rsqrt %144 : vector<32x1xf32>
    %146 = vector.broadcast %145 : vector<32x1xf32> to vector<32x32xf32>
    %147 = arith.mulf %142, %146 : vector<32x32xf32>
    %148 = vector.broadcast %50 : vector<1x32xf32> to vector<32x32xf32>
    %149 = arith.mulf %147, %148 : vector<32x32xf32>
    %150 = vector.broadcast %51 : vector<1x32xf32> to vector<32x32xf32>
    %151 = arith.addf %149, %150 : vector<32x32xf32>
    %cst_51 = arith.constant dense<0.000000e+00> : vector<32x64xf32>
    %152 = tpu.matmul %151, %41, %cst_51 {dimension_numbers = #tpu.dot_dimension_numbers<[1], [0], [0], [1], [0, 0, 1, 1], [], []>} : vector<32x32xf32>, vector<32x64xf32>, vector<32x64xf32> -> vector<32x64xf32>
    %153 = vector.broadcast %48 : vector<1x64xf32> to vector<32x64xf32>
    %154 = arith.addf %152, %153 : vector<32x64xf32>
    %cst_52 = arith.constant 0.000000e+00 : f32
    %155 = vector.broadcast %cst_52 : f32 to vector<32x64xf32>
    %156 = arith.maximumf %154, %155 : vector<32x64xf32>
    %cst_53 = arith.constant dense<0.000000e+00> : vector<32x32xf32>
    %157 = tpu.matmul %156, %43, %cst_53 {dimension_numbers = #tpu.dot_dimension_numbers<[1], [0], [0], [1], [0, 0, 1, 1], [], []>} : vector<32x64xf32>, vector<64x32xf32>, vector<32x32xf32> -> vector<32x32xf32>
    %158 = vector.broadcast %49 : vector<1x32xf32> to vector<32x32xf32>
    %159 = arith.addf %157, %158 : vector<32x32xf32>
    %160 = arith.addf %151, %159 : vector<32x32xf32>
    %cst_54 = arith.constant dense<0.000000e+00> : vector<32xf32>
    %161 = vector.multi_reduction <add>, %160, %cst_54 [1] : vector<32x32xf32> to vector<32xf32>
    %162 = vector.shape_cast %161 : vector<32xf32> to vector<32x1xf32>
    %cst_55 = arith.constant 3.200000e+01 : f32
    %163 = vector.broadcast %cst_55 : f32 to vector<32x1xf32>
    %164 = arith.divf %162, %163 : vector<32x1xf32>
    %165 = vector.broadcast %164 : vector<32x1xf32> to vector<32x32xf32>
    %166 = arith.subf %160, %165 : vector<32x32xf32>
    %167 = arith.mulf %166, %166 : vector<32x32xf32>
    %cst_56 = arith.constant dense<0.000000e+00> : vector<32xf32>
    %168 = vector.multi_reduction <add>, %167, %cst_56 [1] : vector<32x32xf32> to vector<32xf32>
    %169 = vector.shape_cast %168 : vector<32xf32> to vector<32x1xf32>
    %cst_57 = arith.constant 3.200000e+01 : f32
    %170 = vector.broadcast %cst_57 : f32 to vector<32x1xf32>
    %171 = arith.divf %169, %170 : vector<32x1xf32>
    %172 = vector.broadcast %164 : vector<32x1xf32> to vector<32x32xf32>
    %173 = arith.subf %160, %172 : vector<32x32xf32>
    %cst_58 = arith.constant 9.99999974E-6 : f32
    %174 = vector.broadcast %cst_58 : f32 to vector<32x1xf32>
    %175 = arith.addf %171, %174 : vector<32x1xf32>
    %176 = math.rsqrt %175 : vector<32x1xf32>
    %177 = vector.broadcast %176 : vector<32x1xf32> to vector<32x32xf32>
    %178 = arith.mulf %173, %177 : vector<32x32xf32>
    %179 = vector.broadcast %52 : vector<1x32xf32> to vector<32x32xf32>
    %180 = arith.mulf %178, %179 : vector<32x32xf32>
    %181 = vector.broadcast %53 : vector<1x32xf32> to vector<32x32xf32>
    %182 = arith.addf %180, %181 : vector<32x32xf32>
    %c1 = arith.constant 1 : index
    %c0_59 = arith.constant 0 : index
    %c0_60 = arith.constant 0 : index
    %183 = vector.load %arg2[%c1, %c0_59, %c0_60] : memref<2x32x96xf32, #tpu.memory_space<vmem>>, vector<1x32x96xf32>
    %184 = vector.shape_cast %183 : vector<1x32x96xf32> to vector<32x96xf32>
    %c1_61 = arith.constant 1 : index
    %c0_62 = arith.constant 0 : index
    %c0_63 = arith.constant 0 : index
    %185 = vector.load %arg3[%c1_61, %c0_62, %c0_63] : memref<2x32x32xf32, #tpu.memory_space<vmem>>, vector<1x32x32xf32>
    %186 = vector.shape_cast %185 : vector<1x32x32xf32> to vector<32x32xf32>
    %c1_64 = arith.constant 1 : index
    %c0_65 = arith.constant 0 : index
    %c0_66 = arith.constant 0 : index
    %187 = vector.load %arg4[%c1_64, %c0_65, %c0_66] : memref<2x32x64xf32, #tpu.memory_space<vmem>>, vector<1x32x64xf32>
    %188 = vector.shape_cast %187 : vector<1x32x64xf32> to vector<32x64xf32>
    %c1_67 = arith.constant 1 : index
    %c0_68 = arith.constant 0 : index
    %c0_69 = arith.constant 0 : index
    %189 = vector.load %arg5[%c1_67, %c0_68, %c0_69] : memref<2x64x32xf32, #tpu.memory_space<vmem>>, vector<1x64x32xf32>
    %190 = vector.shape_cast %189 : vector<1x64x32xf32> to vector<64x32xf32>
    %c1_70 = arith.constant 1 : index
    %c0_71 = arith.constant 0 : index
    %c0_72 = arith.constant 0 : index
    %191 = vector.load %arg6[%c1_70, %c0_71, %c0_72] : memref<2x8x128xf32, #tpu.memory_space<vmem>>, vector<1x8x128xf32>
    %192 = vector.shape_cast %191 : vector<1x8x128xf32> to vector<8x128xf32>
    %193 = vector.extract_strided_slice %192 {offsets = [0, 0], sizes = [1, 96], strides = [1, 1]} : vector<8x128xf32> to vector<1x96xf32>
    %194 = vector.extract_strided_slice %192 {offsets = [1, 0], sizes = [1, 32], strides = [1, 1]} : vector<8x128xf32> to vector<1x32xf32>
    %195 = vector.extract_strided_slice %192 {offsets = [2, 0], sizes = [1, 64], strides = [1, 1]} : vector<8x128xf32> to vector<1x64xf32>
    %196 = vector.extract_strided_slice %192 {offsets = [3, 0], sizes = [1, 32], strides = [1, 1]} : vector<8x128xf32> to vector<1x32xf32>
    %197 = vector.extract_strided_slice %192 {offsets = [4, 0], sizes = [1, 32], strides = [1, 1]} : vector<8x128xf32> to vector<1x32xf32>
    %198 = vector.extract_strided_slice %192 {offsets = [5, 0], sizes = [1, 32], strides = [1, 1]} : vector<8x128xf32> to vector<1x32xf32>
    %199 = vector.extract_strided_slice %192 {offsets = [6, 0], sizes = [1, 32], strides = [1, 1]} : vector<8x128xf32> to vector<1x32xf32>
    %200 = vector.extract_strided_slice %192 {offsets = [7, 0], sizes = [1, 32], strides = [1, 1]} : vector<8x128xf32> to vector<1x32xf32>
    %cst_73 = arith.constant dense<0.000000e+00> : vector<32x96xf32>
    %201 = tpu.matmul %182, %184, %cst_73 {dimension_numbers = #tpu.dot_dimension_numbers<[1], [0], [0], [1], [0, 0, 1, 1], [], []>} : vector<32x32xf32>, vector<32x96xf32>, vector<32x96xf32> -> vector<32x96xf32>
    %202 = vector.broadcast %193 : vector<1x96xf32> to vector<32x96xf32>
    %203 = arith.addf %201, %202 : vector<32x96xf32>
    %204 = vector.extract_strided_slice %203 {offsets = [0, 0], sizes = [32, 8], strides = [1, 1]} : vector<32x96xf32> to vector<32x8xf32>
    %205 = vector.extract_strided_slice %203 {offsets = [0, 32], sizes = [32, 8], strides = [1, 1]} : vector<32x96xf32> to vector<32x8xf32>
    %206 = vector.extract_strided_slice %203 {offsets = [0, 64], sizes = [32, 8], strides = [1, 1]} : vector<32x96xf32> to vector<32x8xf32>
    %cst_74 = arith.constant dense<0.000000e+00> : vector<32x32xf32>
    %207 = tpu.matmul %204, %205, %cst_74 {dimension_numbers = #tpu.dot_dimension_numbers<[1], [1], [0], [0], [0, 0, 1, 0], [], []>} : vector<32x8xf32>, vector<32x8xf32>, vector<32x32xf32> -> vector<32x32xf32>
    %cst_75 = arith.constant -1.000000e+30 : f32
    %208 = vector.broadcast %cst_75 : f32 to vector<32x32xf32>
    %209 = arith.select %35, %207, %208 : vector<32x32xi1>, vector<32x32xf32>
    %cst_76 = arith.constant dense<0xFF800000> : vector<32xf32>
    %210 = vector.multi_reduction <maximumf>, %209, %cst_76 [1] : vector<32x32xf32> to vector<32xf32>
    %211 = vector.shape_cast %210 : vector<32xf32> to vector<32x1xf32>
    %212 = vector.broadcast %211 : vector<32x1xf32> to vector<32x32xf32>
    %213 = arith.subf %209, %212 : vector<32x32xf32>
    %214 = math.exp %213 : vector<32x32xf32>
    %cst_77 = arith.constant dense<0.000000e+00> : vector<32xf32>
    %215 = vector.multi_reduction <add>, %214, %cst_77 [1] : vector<32x32xf32> to vector<32xf32>
    %216 = vector.shape_cast %215 : vector<32xf32> to vector<32x1xf32>
    %217 = tpu.reciprocal %216 : vector<32x1xf32> -> vector<32x1xf32>
    %218 = vector.broadcast %217 : vector<32x1xf32> to vector<32x32xf32>
    %219 = arith.mulf %214, %218 : vector<32x32xf32>
    %cst_78 = arith.constant dense<0.000000e+00> : vector<32x8xf32>
    %220 = tpu.matmul %219, %206, %cst_78 {dimension_numbers = #tpu.dot_dimension_numbers<[1], [0], [0], [1], [0, 0, 1, 1], [], []>} : vector<32x32xf32>, vector<32x8xf32>, vector<32x8xf32> -> vector<32x8xf32>
    %221 = vector.extract_strided_slice %203 {offsets = [0, 8], sizes = [32, 8], strides = [1, 1]} : vector<32x96xf32> to vector<32x8xf32>
    %222 = vector.extract_strided_slice %203 {offsets = [0, 40], sizes = [32, 8], strides = [1, 1]} : vector<32x96xf32> to vector<32x8xf32>
    %223 = vector.extract_strided_slice %203 {offsets = [0, 72], sizes = [32, 8], strides = [1, 1]} : vector<32x96xf32> to vector<32x8xf32>
    %cst_79 = arith.constant dense<0.000000e+00> : vector<32x32xf32>
    %224 = tpu.matmul %221, %222, %cst_79 {dimension_numbers = #tpu.dot_dimension_numbers<[1], [1], [0], [0], [0, 0, 1, 0], [], []>} : vector<32x8xf32>, vector<32x8xf32>, vector<32x32xf32> -> vector<32x32xf32>
    %cst_80 = arith.constant -1.000000e+30 : f32
    %225 = vector.broadcast %cst_80 : f32 to vector<32x32xf32>
    %226 = arith.select %35, %224, %225 : vector<32x32xi1>, vector<32x32xf32>
    %cst_81 = arith.constant dense<0xFF800000> : vector<32xf32>
    %227 = vector.multi_reduction <maximumf>, %226, %cst_81 [1] : vector<32x32xf32> to vector<32xf32>
    %228 = vector.shape_cast %227 : vector<32xf32> to vector<32x1xf32>
    %229 = vector.broadcast %228 : vector<32x1xf32> to vector<32x32xf32>
    %230 = arith.subf %226, %229 : vector<32x32xf32>
    %231 = math.exp %230 : vector<32x32xf32>
    %cst_82 = arith.constant dense<0.000000e+00> : vector<32xf32>
    %232 = vector.multi_reduction <add>, %231, %cst_82 [1] : vector<32x32xf32> to vector<32xf32>
    %233 = vector.shape_cast %232 : vector<32xf32> to vector<32x1xf32>
    %234 = tpu.reciprocal %233 : vector<32x1xf32> -> vector<32x1xf32>
    %235 = vector.broadcast %234 : vector<32x1xf32> to vector<32x32xf32>
    %236 = arith.mulf %231, %235 : vector<32x32xf32>
    %cst_83 = arith.constant dense<0.000000e+00> : vector<32x8xf32>
    %237 = tpu.matmul %236, %223, %cst_83 {dimension_numbers = #tpu.dot_dimension_numbers<[1], [0], [0], [1], [0, 0, 1, 1], [], []>} : vector<32x32xf32>, vector<32x8xf32>, vector<32x8xf32> -> vector<32x8xf32>
    %238 = vector.extract_strided_slice %203 {offsets = [0, 16], sizes = [32, 8], strides = [1, 1]} : vector<32x96xf32> to vector<32x8xf32>
    %239 = vector.extract_strided_slice %203 {offsets = [0, 48], sizes = [32, 8], strides = [1, 1]} : vector<32x96xf32> to vector<32x8xf32>
    %240 = vector.extract_strided_slice %203 {offsets = [0, 80], sizes = [32, 8], strides = [1, 1]} : vector<32x96xf32> to vector<32x8xf32>
    %cst_84 = arith.constant dense<0.000000e+00> : vector<32x32xf32>
    %241 = tpu.matmul %238, %239, %cst_84 {dimension_numbers = #tpu.dot_dimension_numbers<[1], [1], [0], [0], [0, 0, 1, 0], [], []>} : vector<32x8xf32>, vector<32x8xf32>, vector<32x32xf32> -> vector<32x32xf32>
    %cst_85 = arith.constant -1.000000e+30 : f32
    %242 = vector.broadcast %cst_85 : f32 to vector<32x32xf32>
    %243 = arith.select %35, %241, %242 : vector<32x32xi1>, vector<32x32xf32>
    %cst_86 = arith.constant dense<0xFF800000> : vector<32xf32>
    %244 = vector.multi_reduction <maximumf>, %243, %cst_86 [1] : vector<32x32xf32> to vector<32xf32>
    %245 = vector.shape_cast %244 : vector<32xf32> to vector<32x1xf32>
    %246 = vector.broadcast %245 : vector<32x1xf32> to vector<32x32xf32>
    %247 = arith.subf %243, %246 : vector<32x32xf32>
    %248 = math.exp %247 : vector<32x32xf32>
    %cst_87 = arith.constant dense<0.000000e+00> : vector<32xf32>
    %249 = vector.multi_reduction <add>, %248, %cst_87 [1] : vector<32x32xf32> to vector<32xf32>
    %250 = vector.shape_cast %249 : vector<32xf32> to vector<32x1xf32>
    %251 = tpu.reciprocal %250 : vector<32x1xf32> -> vector<32x1xf32>
    %252 = vector.broadcast %251 : vector<32x1xf32> to vector<32x32xf32>
    %253 = arith.mulf %248, %252 : vector<32x32xf32>
    %cst_88 = arith.constant dense<0.000000e+00> : vector<32x8xf32>
    %254 = tpu.matmul %253, %240, %cst_88 {dimension_numbers = #tpu.dot_dimension_numbers<[1], [0], [0], [1], [0, 0, 1, 1], [], []>} : vector<32x32xf32>, vector<32x8xf32>, vector<32x8xf32> -> vector<32x8xf32>
    %255 = vector.extract_strided_slice %203 {offsets = [0, 24], sizes = [32, 8], strides = [1, 1]} : vector<32x96xf32> to vector<32x8xf32>
    %256 = vector.extract_strided_slice %203 {offsets = [0, 56], sizes = [32, 8], strides = [1, 1]} : vector<32x96xf32> to vector<32x8xf32>
    %257 = vector.extract_strided_slice %203 {offsets = [0, 88], sizes = [32, 8], strides = [1, 1]} : vector<32x96xf32> to vector<32x8xf32>
    %cst_89 = arith.constant dense<0.000000e+00> : vector<32x32xf32>
    %258 = tpu.matmul %255, %256, %cst_89 {dimension_numbers = #tpu.dot_dimension_numbers<[1], [1], [0], [0], [0, 0, 1, 0], [], []>} : vector<32x8xf32>, vector<32x8xf32>, vector<32x32xf32> -> vector<32x32xf32>
    %cst_90 = arith.constant -1.000000e+30 : f32
    %259 = vector.broadcast %cst_90 : f32 to vector<32x32xf32>
    %260 = arith.select %35, %258, %259 : vector<32x32xi1>, vector<32x32xf32>
    %cst_91 = arith.constant dense<0xFF800000> : vector<32xf32>
    %261 = vector.multi_reduction <maximumf>, %260, %cst_91 [1] : vector<32x32xf32> to vector<32xf32>
    %262 = vector.shape_cast %261 : vector<32xf32> to vector<32x1xf32>
    %263 = vector.broadcast %262 : vector<32x1xf32> to vector<32x32xf32>
    %264 = arith.subf %260, %263 : vector<32x32xf32>
    %265 = math.exp %264 : vector<32x32xf32>
    %cst_92 = arith.constant dense<0.000000e+00> : vector<32xf32>
    %266 = vector.multi_reduction <add>, %265, %cst_92 [1] : vector<32x32xf32> to vector<32xf32>
    %267 = vector.shape_cast %266 : vector<32xf32> to vector<32x1xf32>
    %268 = tpu.reciprocal %267 : vector<32x1xf32> -> vector<32x1xf32>
    %269 = vector.broadcast %268 : vector<32x1xf32> to vector<32x32xf32>
    %270 = arith.mulf %265, %269 : vector<32x32xf32>
    %cst_93 = arith.constant dense<0.000000e+00> : vector<32x8xf32>
    %271 = tpu.matmul %270, %257, %cst_93 {dimension_numbers = #tpu.dot_dimension_numbers<[1], [0], [0], [1], [0, 0, 1, 1], [], []>} : vector<32x32xf32>, vector<32x8xf32>, vector<32x8xf32> -> vector<32x8xf32>
    %272 = tpu.concatenate %220, %237, %254, %271 in 1 : vector<32x8xf32>, vector<32x8xf32>, vector<32x8xf32>, vector<32x8xf32> -> vector<32x32xf32>
    %cst_94 = arith.constant dense<0.000000e+00> : vector<32x32xf32>
    %273 = tpu.matmul %272, %186, %cst_94 {dimension_numbers = #tpu.dot_dimension_numbers<[1], [0], [0], [1], [0, 0, 1, 1], [], []>} : vector<32x32xf32>, vector<32x32xf32>, vector<32x32xf32> -> vector<32x32xf32>
    %274 = vector.broadcast %194 : vector<1x32xf32> to vector<32x32xf32>
    %275 = arith.addf %273, %274 : vector<32x32xf32>
    %276 = arith.addf %182, %275 : vector<32x32xf32>
    %cst_95 = arith.constant dense<0.000000e+00> : vector<32xf32>
    %277 = vector.multi_reduction <add>, %276, %cst_95 [1] : vector<32x32xf32> to vector<32xf32>
    %278 = vector.shape_cast %277 : vector<32xf32> to vector<32x1xf32>
    %cst_96 = arith.constant 3.200000e+01 : f32
    %279 = vector.broadcast %cst_96 : f32 to vector<32x1xf32>
    %280 = arith.divf %278, %279 : vector<32x1xf32>
    %281 = vector.broadcast %280 : vector<32x1xf32> to vector<32x32xf32>
    %282 = arith.subf %276, %281 : vector<32x32xf32>
    %283 = arith.mulf %282, %282 : vector<32x32xf32>
    %cst_97 = arith.constant dense<0.000000e+00> : vector<32xf32>
    %284 = vector.multi_reduction <add>, %283, %cst_97 [1] : vector<32x32xf32> to vector<32xf32>
    %285 = vector.shape_cast %284 : vector<32xf32> to vector<32x1xf32>
    %cst_98 = arith.constant 3.200000e+01 : f32
    %286 = vector.broadcast %cst_98 : f32 to vector<32x1xf32>
    %287 = arith.divf %285, %286 : vector<32x1xf32>
    %288 = vector.broadcast %280 : vector<32x1xf32> to vector<32x32xf32>
    %289 = arith.subf %276, %288 : vector<32x32xf32>
    %cst_99 = arith.constant 9.99999974E-6 : f32
    %290 = vector.broadcast %cst_99 : f32 to vector<32x1xf32>
    %291 = arith.addf %287, %290 : vector<32x1xf32>
    %292 = math.rsqrt %291 : vector<32x1xf32>
    %293 = vector.broadcast %292 : vector<32x1xf32> to vector<32x32xf32>
    %294 = arith.mulf %289, %293 : vector<32x32xf32>
    %295 = vector.broadcast %197 : vector<1x32xf32> to vector<32x32xf32>
    %296 = arith.mulf %294, %295 : vector<32x32xf32>
    %297 = vector.broadcast %198 : vector<1x32xf32> to vector<32x32xf32>
    %298 = arith.addf %296, %297 : vector<32x32xf32>
    %cst_100 = arith.constant dense<0.000000e+00> : vector<32x64xf32>
    %299 = tpu.matmul %298, %188, %cst_100 {dimension_numbers = #tpu.dot_dimension_numbers<[1], [0], [0], [1], [0, 0, 1, 1], [], []>} : vector<32x32xf32>, vector<32x64xf32>, vector<32x64xf32> -> vector<32x64xf32>
    %300 = vector.broadcast %195 : vector<1x64xf32> to vector<32x64xf32>
    %301 = arith.addf %299, %300 : vector<32x64xf32>
    %cst_101 = arith.constant 0.000000e+00 : f32
    %302 = vector.broadcast %cst_101 : f32 to vector<32x64xf32>
    %303 = arith.maximumf %301, %302 : vector<32x64xf32>
    %cst_102 = arith.constant dense<0.000000e+00> : vector<32x32xf32>
    %304 = tpu.matmul %303, %190, %cst_102 {dimension_numbers = #tpu.dot_dimension_numbers<[1], [0], [0], [1], [0, 0, 1, 1], [], []>} : vector<32x64xf32>, vector<64x32xf32>, vector<32x32xf32> -> vector<32x32xf32>
    %305 = vector.broadcast %196 : vector<1x32xf32> to vector<32x32xf32>
    %306 = arith.addf %304, %305 : vector<32x32xf32>
    %307 = arith.addf %298, %306 : vector<32x32xf32>
    %cst_103 = arith.constant dense<0.000000e+00> : vector<32xf32>
    %308 = vector.multi_reduction <add>, %307, %cst_103 [1] : vector<32x32xf32> to vector<32xf32>
    %309 = vector.shape_cast %308 : vector<32xf32> to vector<32x1xf32>
    %cst_104 = arith.constant 3.200000e+01 : f32
    %310 = vector.broadcast %cst_104 : f32 to vector<32x1xf32>
    %311 = arith.divf %309, %310 : vector<32x1xf32>
    %312 = vector.broadcast %311 : vector<32x1xf32> to vector<32x32xf32>
    %313 = arith.subf %307, %312 : vector<32x32xf32>
    %314 = arith.mulf %313, %313 : vector<32x32xf32>
    %cst_105 = arith.constant dense<0.000000e+00> : vector<32xf32>
    %315 = vector.multi_reduction <add>, %314, %cst_105 [1] : vector<32x32xf32> to vector<32xf32>
    %316 = vector.shape_cast %315 : vector<32xf32> to vector<32x1xf32>
    %cst_106 = arith.constant 3.200000e+01 : f32
    %317 = vector.broadcast %cst_106 : f32 to vector<32x1xf32>
    %318 = arith.divf %316, %317 : vector<32x1xf32>
    %319 = vector.broadcast %311 : vector<32x1xf32> to vector<32x32xf32>
    %320 = arith.subf %307, %319 : vector<32x32xf32>
    %cst_107 = arith.constant 9.99999974E-6 : f32
    %321 = vector.broadcast %cst_107 : f32 to vector<32x1xf32>
    %322 = arith.addf %318, %321 : vector<32x1xf32>
    %323 = math.rsqrt %322 : vector<32x1xf32>
    %324 = vector.broadcast %323 : vector<32x1xf32> to vector<32x32xf32>
    %325 = arith.mulf %320, %324 : vector<32x32xf32>
    %326 = vector.broadcast %199 : vector<1x32xf32> to vector<32x32xf32>
    %327 = arith.mulf %325, %326 : vector<32x32xf32>
    %328 = vector.broadcast %200 : vector<1x32xf32> to vector<32x32xf32>
    %329 = arith.addf %327, %328 : vector<32x32xf32>
    %c0_108 = arith.constant 0 : index
    %c0_109 = arith.constant 0 : index
    %330 = vector.load %arg7[%c0_108, %c0_109] : memref<32x64xf32, #tpu.memory_space<vmem>>, vector<32x64xf32>
    %cst_110 = arith.constant dense<0.000000e+00> : vector<32x64xf32>
    %331 = tpu.matmul %329, %330, %cst_110 {dimension_numbers = #tpu.dot_dimension_numbers<[1], [0], [0], [1], [0, 0, 1, 1], [], []>} : vector<32x32xf32>, vector<32x64xf32>, vector<32x64xf32> -> vector<32x64xf32>
    %c0_111 = arith.constant 0 : index
    %c0_112 = arith.constant 0 : index
    %332 = vector.load %arg8[%c0_111, %c0_112] : memref<1x64xf32, #tpu.memory_space<vmem>>, vector<1x64xf32>
    %333 = vector.broadcast %332 : vector<1x64xf32> to vector<32x64xf32>
    %334 = arith.addf %331, %333 : vector<32x64xf32>
    %c0_113 = arith.constant 0 : index
    %c0_114 = arith.constant 0 : index
    %335 = vector.load %arg9[%c0_113, %c0_114] : memref<32x64xf32, #tpu.memory_space<vmem>>, vector<32x64xf32>
    tpu.vector_store %arg9[%c0_113, %c0_114], %334 {strides = array<i32>} : memref<32x64xf32, #tpu.memory_space<vmem>>, vector<32x64xf32>,
    return
  }
  func.func @transform_0(%arg0: i32) -> (i32, i32) {
    %c0_i32 = arith.constant 0 : i32
    %c0_i32_0 = arith.constant 0 : i32
    %c0_i32_1 = arith.constant 0 : i32
    return %c0_i32, %c0_i32_0 : i32, i32
  }
  func.func @transform_1(%arg0: i32) -> (i32, i32, i32) {
    %c0_i32 = arith.constant 0 : i32
    %c0_i32_0 = arith.constant 0 : i32
    %c0_i32_1 = arith.constant 0 : i32
    %c0_i32_2 = arith.constant 0 : i32
    return %c0_i32, %c0_i32_0, %c0_i32_1 : i32, i32, i32
  }
  func.func @transform_2(%arg0: i32) -> (i32, i32, i32) {
    %c0_i32 = arith.constant 0 : i32
    %c0_i32_0 = arith.constant 0 : i32
    %c0_i32_1 = arith.constant 0 : i32
    %c0_i32_2 = arith.constant 0 : i32
    return %c0_i32, %c0_i32_0, %c0_i32_1 : i32, i32, i32
  }
  func.func @transform_3(%arg0: i32) -> (i32, i32, i32) {
    %c0_i32 = arith.constant 0 : i32
    %c0_i32_0 = arith.constant 0 : i32
    %c0_i32_1 = arith.constant 0 : i32
    %c0_i32_2 = arith.constant 0 : i32
    return %c0_i32, %c0_i32_0, %c0_i32_1 : i32, i32, i32
  }
  func.func @transform_4(%arg0: i32) -> (i32, i32, i32) {
    %c0_i32 = arith.constant 0 : i32
    %c0_i32_0 = arith.constant 0 : i32
    %c0_i32_1 = arith.constant 0 : i32
    %c0_i32_2 = arith.constant 0 : i32
    return %c0_i32, %c0_i32_0, %c0_i32_1 : i32, i32, i32
  }
  func.func @transform_5(%arg0: i32) -> (i32, i32, i32) {
    %c0_i32 = arith.constant 0 : i32
    %c0_i32_0 = arith.constant 0 : i32
    %c0_i32_1 = arith.constant 0 : i32
    %c0_i32_2 = arith.constant 0 : i32
    return %c0_i32, %c0_i32_0, %c0_i32_1 : i32, i32, i32
  }
  func.func @transform_6(%arg0: i32) -> (i32, i32) {
    %c0_i32 = arith.constant 0 : i32
    %c0_i32_0 = arith.constant 0 : i32
    %c0_i32_1 = arith.constant 0 : i32
    return %c0_i32, %c0_i32_0 : i32, i32
  }
  func.func @transform_7(%arg0: i32) -> (i32, i32) {
    %c0_i32 = arith.constant 0 : i32
    %c0_i32_0 = arith.constant 0 : i32
    %c0_i32_1 = arith.constant 0 : i32
    return %c0_i32, %c0_i32_0 : i32, i32
  }
  func.func @transform_8(%arg0: i32) -> (i32, i32) {
    %c0_i32 = arith.constant 0 : i32
    %c0_i32_0 = arith.constant 0 : i32
    %c0_i32_1 = arith.constant 0 : i32
    return %c0_i32, %c0_i32_0 : i32, i32
  }
}

</mosaic_0001>

<llo_original>
// kernel: tpu_custom_call.1
$region0: #{tpu_custom_call.1}
  #allocation0 [shape = 'u32[]', space=smem, size = 0x4, offset = 0x4, fixed_abs, tag = 'smem constant byte address 0x4 - core index']
  #allocation1 [shape = 'u32[144,128]{1,0:T(1,128)}', space=vmem, size = 0x12000, scoped, tag = 'internal scratch']
  %s0 = inlined_call_operand.hbm [shape: f32[32,32], index: 0, kind: input, shape index: {}]
  %s1 = inlined_call_operand.vmem [shape: f32[2,32,96], index: 1, kind: input, shape index: {}]
  %s2 = inlined_call_operand.vmem [shape: f32[2,32,32], index: 2, kind: input, shape index: {}]
  %s3 = inlined_call_operand.vmem [shape: f32[2,32,64], index: 3, kind: input, shape index: {}]
  %s4 = inlined_call_operand.vmem [shape: f32[2,64,32], index: 4, kind: input, shape index: {}]
  %s5 = inlined_call_operand.vmem [shape: f32[2,8,128], index: 5, kind: input, shape index: {}]
  %s6 = inlined_call_operand.hbm [shape: f32[32,64], index: 6, kind: input, shape index: {}]
  %s7 = inlined_call_operand.vmem [shape: f32[1,64], index: 7, kind: input, shape index: {}]
  %s8 = inlined_call_operand.hbm [shape: f32[32,64], index: 8, kind: output, shape index: {}]
  %s9 = sld [smem:[#allocation0]]
  $region50: #{tpu_custom_call.1} parent=0
    _
  %s11 = ssub.s32 1, %s9
  %s12 = scalar_select 0, %s11, %s9
  $region1: #{tpu_custom_call.1} parent=0
    #allocation2 [shape = 'u8[16384]{0}', space=vmem, size = 0x4000, scoped, tag = 'input window, operand 0, single buffered']
    #allocation3 [shape = 's32[1]{0}', space=sflag, size = 0x4, scoped, tag = 'scoped memory for tpu_custom_call.1']
    #allocation4 [shape = 's32[1]{0}', space=sflag, size = 0x4, scoped, tag = 'scoped memory for tpu_custom_call.1']
    #allocation5 [shape = 'u8[16384]{0}', space=vmem, size = 0x4000, scoped, tag = 'input window, operand 6, single buffered']
    #allocation6 [shape = 's32[1]{0}', space=sflag, size = 0x4, scoped, tag = 'scoped memory for tpu_custom_call.1']
    #allocation7 [shape = 'u8[16384]{0}', space=vmem, size = 0x4000, scoped, tag = 'output window, operand 0, single buffered']
    %13 = vsyncpa [#allocation3], 0
    %14 = vsyncpa [#allocation6], 0
    %15 = vsyncpa [#allocation4], 0
    // Predicated region
    $region2: #{tpu_custom_call.1} parent=1 // pred_check
      _
    $region3: #{tpu_custom_call.1} parent=1 // pred_check_branch
      %17 = sbr.rel (0) target = $region5
    $region4: #{tpu_custom_call.1} parent=1 // pred_region
      %s19 = ssub.s32 512, 512
      %20 = vsyncadd [#allocation3], %s19
      %s21 = sshll.u32 [#allocation2], 4
      %s22 = int_to_ptr.vmem [resolvable:$true] %s21
      %27 = dma.hbm_to_vmem [thread:$0]  %s0, 512, %s22, [#allocation3], 128, 128, 8
    $region5: #{tpu_custom_call.1} parent=1 // pred_fallthru
      _
    // Predicated region
    $region6: #{tpu_custom_call.1} parent=1 // pred_check
      _
    $region7: #{tpu_custom_call.1} parent=1 // pred_check_branch
      %29 = sbr.rel (0) target = $region9
    $region8: #{tpu_custom_call.1} parent=1 // pred_region
      _
    $region9: #{tpu_custom_call.1} parent=1 // pred_fallthru
      _
    // Predicated region
    $region10: #{tpu_custom_call.1} parent=1 // pred_check
      _
    $region11: #{tpu_custom_call.1} parent=1 // pred_check_branch
      %31 = sbr.rel (0) target = $region13
    $region12: #{tpu_custom_call.1} parent=1 // pred_region
      _
    $region13: #{tpu_custom_call.1} parent=1 // pred_fallthru
      _
    // Predicated region
    $region14: #{tpu_custom_call.1} parent=1 // pred_check
      _
    $region15: #{tpu_custom_call.1} parent=1 // pred_check_branch
      %33 = sbr.rel (0) target = $region17
    $region16: #{tpu_custom_call.1} parent=1 // pred_region
      _
    $region17: #{tpu_custom_call.1} parent=1 // pred_fallthru
      _
    // Predicated region
    $region18: #{tpu_custom_call.1} parent=1 // pred_check
      _
    $region19: #{tpu_custom_call.1} parent=1 // pred_check_branch
      %35 = sbr.rel (0) target = $region21
    $region20: #{tpu_custom_call.1} parent=1 // pred_region
      _
    $region21: #{tpu_custom_call.1} parent=1 // pred_fallthru
      _
    // Predicated region
    $region22: #{tpu_custom_call.1} parent=1 // pred_check
      _
    $region23: #{tpu_custom_call.1} parent=1 // pred_check_branch
      %37 = sbr.rel (0) target = $region25
    $region24: #{tpu_custom_call.1} parent=1 // pred_region
      _
    $region25: #{tpu_custom_call.1} parent=1 // pred_fallthru
      _
    // Predicated region
    $region26: #{tpu_custom_call.1} parent=1 // pred_check
      _
    $region27: #{tpu_custom_call.1} parent=1 // pred_check_branch
      %39 = sbr.rel (0) target = $region29
    $region28: #{tpu_custom_call.1} parent=1 // pred_region
      %s41 = ssub.s32 512, 512
      %42 = vsyncadd [#allocation6], %s41
      %s43 = sshll.u32 [#allocation5], 4
      %s44 = int_to_ptr.vmem [resolvable:$true] %s43
      %49 = dma.hbm_to_vmem [thread:$0]  %s6, 512, %s44, [#allocation6], 128, 128, 8
    $region29: #{tpu_custom_call.1} parent=1 // pred_fallthru
      _
    // Predicated region
    $region30: #{tpu_custom_call.1} parent=1 // pred_check
      _
    $region31: #{tpu_custom_call.1} parent=1 // pred_check_branch
      %51 = sbr.rel (0) target = $region33
    $region32: #{tpu_custom_call.1} parent=1 // pred_region
      _
    $region33: #{tpu_custom_call.1} parent=1 // pred_fallthru
      _
    // Predicated region
    $region34: #{tpu_custom_call.1} parent=1 // pred_check
      _
    $region35: #{tpu_custom_call.1} parent=1 // pred_check_branch
      %53 = sbr.rel (0) target = $region37
    $region36: #{tpu_custom_call.1} parent=1 // pred_region
      %54 = dma.done [#allocation3], 512
    $region37: #{tpu_custom_call.1} parent=1 // pred_fallthru
      _
    // Predicated region
    $region38: #{tpu_custom_call.1} parent=1 // pred_check
      _
    $region39: #{tpu_custom_call.1} parent=1 // pred_check_branch
      %56 = sbr.rel (0) target = $region41
    $region40: #{tpu_custom_call.1} parent=1 // pred_region
      %57 = dma.done [#allocation6], 512
    $region41: #{tpu_custom_call.1} parent=1 // pred_fallthru
      _
    %v58 = vld [vmem:[#allocation2] sm:$0xff]
    %v59 = vld [vmem:[#allocation2 + $0x8] sm:$0xff]
    %v60 = vld [vmem:[#allocation2 + $0x10] sm:$0xff]
    %v61 = vld [vmem:[#allocation2 + $0x18] sm:$0xff]
    %v62 = vlaneseq
    %v63 = vshrl.u32 %v62, 7
    %v64 = vadd.s32 %v63, 8
    %v65 = vadd.s32 %v63, 16
    %v66 = vadd.s32 %v63, 24
    %vm67 = vcmp.lt.s32.totalorder %v63, 0
    %v68 = vsub.s32 0, %v63
    %v69 = vsel %vm67, %v68, %v63
    %v70 = vshrl.u32 %v69, 3
    %v71 = vand.u32 %v69, 7
    %v72 = vsub.s32 0, %v71
    %v73 = vsel %vm67, %v72, %v71
    %vm74 = vcmp.lt.s32.totalorder %v64, 0
    %v75 = vsub.s32 0, %v64
    %v76 = vsel %vm74, %v75, %v64
    %v77 = vshrl.u32 %v76, 3
    %v78 = vand.u32 %v76, 7
    %v79 = vsub.s32 0, %v78
    %v80 = vsel %vm74, %v79, %v78
    %vm81 = vcmp.lt.s32.totalorder %v65, 0
    %v82 = vsub.s32 0, %v65
    %v83 = vsel %vm81, %v82, %v65
    %v84 = vshrl.u32 %v83, 3
    %v85 = vand.u32 %v83, 7
    %v86 = vsub.s32 0, %v85
    %v87 = vsel %vm81, %v86, %v85
    %vm88 = vcmp.lt.s32.totalorder %v66, 0
    %v89 = vsub.s32 0, %v66
    %v90 = vsel %vm88, %v89, %v66
    %v91 = vshrl.u32 %v90, 3
    %v92 = vand.u32 %v90, 7
    %v93 = vsub.s32 0, %v92
    %v94 = vsel %vm88, %v93, %v92
    %vm95 = vcmp.ne.s32.totalorder %v73, 0
    %vm96 = vcmp.ne.s32.totalorder %v80, 0
    %vm97 = vcmp.ne.s32.totalorder %v87, 0
    %vm98 = vcmp.ne.s32.totalorder %v94, 0
    %vm99 = vcmp.lt.s32.totalorder %v73, 0
    %vm100 = vcmp.lt.s32.totalorder %v80, 0
    %vm101 = vcmp.lt.s32.totalorder %v87, 0
    %vm102 = vcmp.lt.s32.totalorder %v94, 0
    %vm103 = vmand %vm99, %vm95
    %vm104 = vmand %vm100, %vm96
    %vm105 = vmand %vm101, %vm97
    %vm106 = vmand %vm102, %vm98
    %v107 = vadd.s32 %v73, 8
    %v108 = vadd.s32 %v80, 8
    %v109 = vadd.s32 %v87, 8
    %v110 = vadd.s32 %v94, 8
    %v111 = vsel %vm103, %v107, %v73
    %v112 = vsel %vm104, %v108, %v80
    %v113 = vsel %vm105, %v109, %v87
    %v114 = vsel %vm106, %v110, %v94
    %v115 = vlaneseq
    %v116 = vand.u32 %v115, 127
    %vm117 = vcmp.lt.s32.totalorder %v116, 0
    %v118 = vsub.s32 0, %v116
    %v119 = vsel %vm117, %v118, %v116
    %v120 = vshrl.u32 %v119, 3
    %v121 = vand.u32 %v119, 7
    %v122 = vsub.s32 0, %v121
    %v123 = vsel %vm117, %v122, %v121
    %vm124 = vcmp.ne.s32.totalorder %v123, 0
    %vm125 = vcmp.lt.s32.totalorder %v123, 0
    %vm126 = vmand %vm125, %vm124
    %v127 = vadd.s32 %v123, 8
    %v128 = vsel %vm126, %v127, %v123
    %vm129 = vcmp.eq.s32.totalorder %v111, %v128
    %vm130 = vcmp.eq.s32.totalorder %v112, %v128
    %vm131 = vcmp.eq.s32.totalorder %v113, %v128
    %vm132 = vcmp.eq.s32.totalorder %v114, %v128
    %v133 = vld [vmem:[%s1] sm:$0xff]
    %v134 = vld [vmem:[%s1 + $0x8] sm:$0xff]
    %v135 = vld [vmem:[%s1 + $0x10] sm:$0xff]
    %v136 = vld [vmem:[%s1 + $0x18] sm:$0xff]
    %v137 = vld [vmem:[%s2] sm:$0xff]
    %v138 = vld [vmem:[%s2 + $0x8] sm:$0xff]
    %v139 = vld [vmem:[%s2 + $0x10] sm:$0xff]
    %v140 = vld [vmem:[%s2 + $0x18] sm:$0xff]
    %v141 = vld [vmem:[%s3] sm:$0xff]
    %v142 = vld [vmem:[%s3 + $0x8] sm:$0xff]
    %v143 = vld [vmem:[%s3 + $0x10] sm:$0xff]
    %v144 = vld [vmem:[%s3 + $0x18] sm:$0xff]
    %v145 = vld [vmem:[%s4] sm:$0xff]
    %v146 = vld [vmem:[%s4 + $0x8] sm:$0xff]
    %v147 = vld [vmem:[%s4 + $0x10] sm:$0xff]
    %v148 = vld [vmem:[%s4 + $0x18] sm:$0xff]
    %v149 = vld [vmem:[%s4 + $0x20] sm:$0xff]
    %v150 = vld [vmem:[%s4 + $0x28] sm:$0xff]
    %v151 = vld [vmem:[%s4 + $0x30] sm:$0xff]
    %v152 = vld [vmem:[%s4 + $0x38] sm:$0xff]
    %v153 = vld [vmem:[%s5] sm:$0xff]
    %v154 = vlaneseq
    %v155 = vshrl.u32 %v154, 7
    %v156 = vsub.s32 0, %v155
    %v157 = vrot.slane %v153, %v156
    %vm158 = vcmask 261120
    %v160 = vsel %vm158, %v58, 0
    %v163 = vsel %vm158, %v59, 0
    %v166 = vsel %vm158, %v60, 0
    %v169 = vsel %vm158, %v61, 0
    %171 = vmatprep.subr.mxu0 0.0
    %172 = vmatpush1.msra.mxu0 %v133
    %173 = vmatprep.subr.mxu0 0.0
    %174 = vmatpush1.msra.mxu0 %v134
    %175 = vmatprep.subr.mxu0 0.0
    %176 = vmatpush1.msra.mxu0 %v135
    %177 = vmatprep.subr.mxu0 0.0
    %178 = vmatpush1.msra.mxu0 %v136
    %179 = vmatprep.subr.mxu0 0.0
    %180 = vmatpush1.msra.mxu0 0.0
    %181 = vmatprep.subr.mxu0 0.0
    %182 = vmatpush1.msra.mxu0 0.0
    %183 = vmatprep.subr.mxu0 0.0
    %184 = vmatpush1.msra.mxu0 0.0
    %185 = vmatprep.subr.mxu0 0.0
    %186 = vmatpush1.msra.mxu0 0.0
    %187 = vmatprep.subr.mxu0 0.0
    %188 = vmatpush1.msra.mxu0 0.0
    %189 = vmatprep.subr.mxu0 0.0
    %190 = vmatpush1.msra.mxu0 0.0
    %191 = vmatprep.subr.mxu0 0.0
    %192 = vmatpush1.msra.mxu0 0.0
    %193 = vmatprep.subr.mxu0 0.0
    %194 = vmatpush1.msra.mxu0 0.0
    %195 = vmatprep.subr.mxu0 0.0
    %196 = vmatpush1.msra.mxu0 0.0
    %197 = vmatprep.subr.mxu0 0.0
    %198 = vmatpush1.msra.mxu0 0.0
    %199 = vmatprep.subr.mxu0 0.0
    %200 = vmatpush1.msra.mxu0 0.0
    %201 = vmatprep.subr.mxu0 0.0
    %202 = vmatpush1.msra.mxu0 0.0
    %203 = vmatprep.subr.mxu0 0.0
    %204 = vmatpush1.msra.mxu0 0.0
    %205 = vmatprep.subr.mxu0 0.0
    %206 = vmatpush1.msra.mxu0 0.0
    %207 = vmatprep.subr.mxu0 0.0
    %208 = vmatpush1.msra.mxu0 0.0
    %209 = vmatprep.subr.mxu0 0.0
    %210 = vmatpush1.msra.mxu0 0.0
    %211 = vmatprep.subr.mxu0 0.0
    %212 = vmatpush1.msra.mxu0 0.0
    %213 = vmatprep.subr.mxu0 0.0
    %214 = vmatpush1.msra.mxu0 0.0
    %215 = vmatprep.subr.mxu0 0.0
    %216 = vmatpush1.msra.mxu0 0.0
    %217 = vmatprep.subr.mxu0 0.0
    %218 = vmatpush1.msra.mxu0 0.0
    %219 = vmatprep.subr.mxu0 0.0
    %220 = vmatpush1.msra.mxu0 0.0
    %221 = vmatprep.subr.mxu0 0.0
    %222 = vmatpush1.msra.mxu0 0.0
    %223 = vmatprep.subr.mxu0 0.0
    %224 = vmatpush1.msra.mxu0 0.0
    %225 = vmatprep.subr.mxu0 0.0
    %226 = vmatpush1.msra.mxu0 0.0
    %227 = vmatprep.subr.mxu0 0.0
    %228 = vmatpush1.msra.mxu0 0.0
    %229 = vmatprep.subr.mxu0 0.0
    %230 = vmatpush1.msra.mxu0 0.0
    %231 = vmatprep.subr.mxu0 0.0
    %232 = vmatpush1.msra.mxu0 0.0
    %233 = vmatprep.subr.mxu0 0.0
    %234 = vmatpush1.msra.mxu0 0.0
    %235 = vmatprep.mubr.f32.mxu0 0.0
    %236 = vmatmul.mubr.f32.gmra.mrb[0].mxu0 %v160
    %v237 = vpop.f32.mrb[0].mxu0
    %v238 = vadd.f32 %v157, %v237
    %v239 = vpop.f32.mrb[0].mxu0
    %240 = vmatprep.mubr.f32.mxu0 0.0
    %241 = vmatmul.mubr.f32.gmra.mrb[0].mxu0 %v163
    %v242 = vpop.f32.mrb[0].mxu0
    %v243 = vadd.f32 %v157, %v242
    %v244 = vpop.f32.mrb[0].mxu0
    %245 = vmatprep.mubr.f32.mxu0 0.0
    %246 = vmatmul.mubr.f32.gmra.mrb[0].mxu0 %v166
    %v247 = vpop.f32.mrb[0].mxu0
    %v248 = vadd.f32 %v157, %v247
    %v249 = vpop.f32.mrb[0].mxu0
    %250 = vmatprep.mubr.f32.mxu0 0.0
    %251 = vmatmul.mubr.f32.gmra.mrb[0].mxu0 %v169
    %v252 = vpop.f32.mrb[0].mxu0
    %v253 = vadd.f32 %v157, %v252
    %v254 = vpop.f32.mrb[0].mxu0
    %255 = vdwg.mxu0
    %260 = vrot.lane.b32.xlu0 %v238, 96
    %v261 = vpop.permute.xlu0 %260
    %262 = vrot.lane.b32.xlu0 %v243, 96
    %v263 = vpop.permute.xlu0 %262
    %264 = vrot.lane.b32.xlu0 %v248, 96
    %v265 = vpop.permute.xlu0 %264
    %266 = vrot.lane.b32.xlu0 %v253, 96
    %v267 = vpop.permute.xlu0 %266
    %vm268 = vcmask 64512
    %v269 = vsel %vm268, %v238, 0
    %v271 = vsel %vm268, %v243, 0
    %v273 = vsel %vm268, %v248, 0
    %v275 = vsel %vm268, %v253, 0
    %v277 = vsel %vm268, %v261, 0
    %v279 = vsel %vm268, %v263, 0
    %v281 = vsel %vm268, %v265, 0
    %v283 = vsel %vm268, %v267, 0
    %285 = vmatprep.subr.mxu0 0.0
    %286 = vmatpush1.xpose.msra.mxu0 %v277
    %287 = vmatprep.subr.mxu0 0.0
    %288 = vmatpush1.xpose.msra.mxu0 %v279
    %289 = vmatprep.subr.mxu0 0.0
    %290 = vmatpush1.xpose.msra.mxu0 %v281
    %291 = vmatprep.subr.mxu0 0.0
    %292 = vmatpush1.xpose.msra.mxu0 %v283
    %293 = vmatprep.subr.mxu0 0.0
    %294 = vmatpush1.xpose.msra.mxu0 0.0
    %295 = vmatprep.subr.mxu0 0.0
    %296 = vmatpush1.xpose.msra.mxu0 0.0
    %297 = vmatprep.subr.mxu0 0.0
    %298 = vmatpush1.xpose.msra.mxu0 0.0
    %299 = vmatprep.subr.mxu0 0.0
    %300 = vmatpush1.xpose.msra.mxu0 0.0
    %301 = vmatprep.subr.mxu0 0.0
    %302 = vmatpush1.xpose.msra.mxu0 0.0
    %303 = vmatprep.subr.mxu0 0.0
    %304 = vmatpush1.xpose.msra.mxu0 0.0
    %305 = vmatprep.subr.mxu0 0.0
    %306 = vmatpush1.xpose.msra.mxu0 0.0
    %307 = vmatprep.subr.mxu0 0.0
    %308 = vmatpush1.xpose.msra.mxu0 0.0
    %309 = vmatprep.subr.mxu0 0.0
    %310 = vmatpush1.xpose.msra.mxu0 0.0
    %311 = vmatprep.subr.mxu0 0.0
    %312 = vmatpush1.xpose.msra.mxu0 0.0
    %313 = vmatprep.subr.mxu0 0.0
    %314 = vmatpush1.xpose.msra.mxu0 0.0
    %315 = vmatprep.subr.mxu0 0.0
    %316 = vmatpush1.xpose.msra.mxu0 0.0
    %317 = vmatprep.subr.mxu0 0.0
    %318 = vmatpush1.xpose.msra.mxu0 0.0
    %319 = vmatprep.subr.mxu0 0.0
    %320 = vmatpush1.xpose.msra.mxu0 0.0
    %321 = vmatprep.subr.mxu0 0.0
    %322 = vmatpush1.xpose.msra.mxu0 0.0
    %323 = vmatprep.subr.mxu0 0.0
    %324 = vmatpush1.xpose.msra.mxu0 0.0
    %325 = vmatprep.subr.mxu0 0.0
    %326 = vmatpush1.xpose.msra.mxu0 0.0
    %327 = vmatprep.subr.mxu0 0.0
    %328 = vmatpush1.xpose.msra.mxu0 0.0
    %329 = vmatprep.subr.mxu0 0.0
    %330 = vmatpush1.xpose.msra.mxu0 0.0
    %331 = vmatprep.subr.mxu0 0.0
    %332 = vmatpush1.xpose.msra.mxu0 0.0
    %333 = vmatprep.subr.mxu0 0.0
    %334 = vmatpush1.xpose.msra.mxu0 0.0
    %335 = vmatprep.subr.mxu0 0.0
    %336 = vmatpush1.xpose.msra.mxu0 0.0
    %337 = vmatprep.subr.mxu0 0.0
    %338 = vmatpush1.xpose.msra.mxu0 0.0
    %339 = vmatprep.subr.mxu0 0.0
    %340 = vmatpush1.xpose.msra.mxu0 0.0
    %341 = vmatprep.subr.mxu0 0.0
    %342 = vmatpush1.xpose.msra.mxu0 0.0
    %343 = vmatprep.subr.mxu0 0.0
    %344 = vmatpush1.xpose.msra.mxu0 0.0
    %345 = vmatprep.subr.mxu0 0.0
    %346 = vmatpush1.xpose.msra.mxu0 0.0
    %347 = vmatprep.subr.mxu0 0.0
    %348 = vmatpush1.xpose.msra.mxu0 0.0
    %349 = vmatprep.mubr.f32.mxu0 0.0
    %350 = vmatmul.mubr.f32.gmra.mrb[0].mxu0 %v269
    %v351 = vpop.f32.mrb[0].mxu0
    %v352 = vadd.f32 0.0, %v351
    %v353 = vpop.f32.mrb[0].mxu0
    %354 = vmatprep.mubr.f32.mxu0 0.0
    %355 = vmatmul.mubr.f32.gmra.mrb[0].mxu0 %v271
    %v356 = vpop.f32.mrb[0].mxu0
    %v357 = vadd.f32 0.0, %v356
    %v358 = vpop.f32.mrb[0].mxu0
    %359 = vmatprep.mubr.f32.mxu0 0.0
    %360 = vmatmul.mubr.f32.gmra.mrb[0].mxu0 %v273
    %v361 = vpop.f32.mrb[0].mxu0
    %v362 = vadd.f32 0.0, %v361
    %v363 = vpop.f32.mrb[0].mxu0
    %364 = vmatprep.mubr.f32.mxu0 0.0
    %365 = vmatmul.mubr.f32.gmra.mrb[0].mxu0 %v275
    %v366 = vpop.f32.mrb[0].mxu0
    %v367 = vadd.f32 0.0, %v366
    %v368 = vpop.f32.mrb[0].mxu0
    %369 = vdwg.mxu0
    %v370 = vsel %vm129, %v352, -1e+30
    %v371 = vsel %vm130, %v357, -1e+30
    %v372 = vsel %vm131, %v362, -1e+30
    %v373 = vsel %vm132, %v367, -1e+30
    %v374 = vsel %vm158, %v370, -inf
    %375 = vmax.xlane.f32.xlu0 %v374
    %v376 = vpop.xlane.xlu0 %375
    %v377 = vsel %vm158, %v371, -inf
    %378 = vmax.xlane.f32.xlu0 %v377
    %v379 = vpop.xlane.xlu0 %378
    %v380 = vsel %vm158, %v372, -inf
    %381 = vmax.xlane.f32.xlu0 %v380
    %v382 = vpop.xlane.xlu0 %381
    %v383 = vsel %vm158, %v373, -inf
    %384 = vmax.xlane.f32.xlu0 %v383
    %v385 = vpop.xlane.xlu0 %384
    %v386 = vsub.f32 %v370, %v376
    %v387 = vsub.f32 %v371, %v379
    %v388 = vsub.f32 %v372, %v382
    %v389 = vsub.f32 %v373, %v385
    %v390 = vmul.f32 %v386, 1.442695
    %v391 = vpow.pop %v390
    %v392 = vmul.f32 %v387, 1.442695
    %v393 = vpow.pop %v392
    %v394 = vmul.f32 %v388, 1.442695
    %v395 = vpow.pop %v394
    %v396 = vmul.f32 %v389, 1.442695
    %v397 = vpow.pop %v396
    %v398 = vsel %vm158, %v391, 0.0
    %399 = vadd.xlane.f32.xlu0 %v398
    %v400 = vpop.xlane.xlu0 %399
    %v401 = vsel %vm158, %v393, 0.0
    %402 = vadd.xlane.f32.xlu0 %v401
    %v403 = vpop.xlane.xlu0 %402
    %v404 = vsel %vm158, %v395, 0.0
    %405 = vadd.xlane.f32.xlu0 %v404
    %v406 = vpop.xlane.xlu0 %405
    %v407 = vsel %vm158, %v397, 0.0
    %408 = vadd.xlane.f32.xlu0 %v407
    %v409 = vpop.xlane.xlu0 %408
    %v410 = vrcp.pop %v400
    %v411 = vrcp.pop %v403
    %v412 = vrcp.pop %v406
    %v413 = vrcp.pop %v409
    %v414 = vmul.f32 %v391, %v410
    %v415 = vmul.f32 %v393, %v411
    %v416 = vmul.f32 %v395, %v412
    %v417 = vmul.f32 %v397, %v413
    %418 = vrot.lane.b32.xlu0 %v238, 64
    %v419 = vpop.permute.xlu0 %418
    %420 = vrot.lane.b32.xlu0 %v243, 64
    %v421 = vpop.permute.xlu0 %420
    %422 = vrot.lane.b32.xlu0 %v248, 64
    %v423 = vpop.permute.xlu0 %422
    %424 = vrot.lane.b32.xlu0 %v253, 64
    %v425 = vpop.permute.xlu0 %424
    %v431 = vsel %vm158, %v414, 0
    %v434 = vsel %vm158, %v415, 0
    %v437 = vsel %vm158, %v416, 0
    %v440 = vsel %vm158, %v417, 0
    %442 = vmatprep.subr.mxu0 0.0
    %443 = vmatpush1.msra.mxu0 %v419
    %444 = vmatprep.subr.mxu0 0.0
    %445 = vmatpush1.msra.mxu0 %v421
    %446 = vmatprep.subr.mxu0 0.0
    %447 = vmatpush1.msra.mxu0 %v423
    %448 = vmatprep.subr.mxu0 0.0
    %449 = vmatpush1.msra.mxu0 %v425
    %450 = vmatprep.subr.mxu0 0.0
    %451 = vmatpush1.msra.mxu0 0.0
    %452 = vmatprep.subr.mxu0 0.0
    %453 = vmatpush1.msra.mxu0 0.0
    %454 = vmatprep.subr.mxu0 0.0
    %455 = vmatpush1.msra.mxu0 0.0
    %456 = vmatprep.subr.mxu0 0.0
    %457 = vmatpush1.msra.mxu0 0.0
    %458 = vmatprep.subr.mxu0 0.0
    %459 = vmatpush1.msra.mxu0 0.0
    %460 = vmatprep.subr.mxu0 0.0
    %461 = vmatpush1.msra.mxu0 0.0
    %462 = vmatprep.subr.mxu0 0.0
    %463 = vmatpush1.msra.mxu0 0.0
    %464 = vmatprep.subr.mxu0 0.0
    %465 = vmatpush1.msra.mxu0 0.0
    %466 = vmatprep.subr.mxu0 0.0
    %467 = vmatpush1.msra.mxu0 0.0
    %468 = vmatprep.subr.mxu0 0.0
    %469 = vmatpush1.msra.mxu0 0.0
    %470 = vmatprep.subr.mxu0 0.0
    %471 = vmatpush1.msra.mxu0 0.0
    %472 = vmatprep.subr.mxu0 0.0
    %473 = vmatpush1.msra.mxu0 0.0
    %474 = vmatprep.subr.mxu0 0.0
    %475 = vmatpush1.msra.mxu0 0.0
    %476 = vmatprep.subr.mxu0 0.0
    %477 = vmatpush1.msra.mxu0 0.0
    %478 = vmatprep.subr.mxu0 0.0
    %479 = vmatpush1.msra.mxu0 0.0
    %480 = vmatprep.subr.mxu0 0.0
    %481 = vmatpush1.msra.mxu0 0.0
    %482 = vmatprep.subr.mxu0 0.0
    %483 = vmatpush1.msra.mxu0 0.0
    %484 = vmatprep.subr.mxu0 0.0
    %485 = vmatpush1.msra.mxu0 0.0
    %486 = vmatprep.subr.mxu0 0.0
    %487 = vmatpush1.msra.mxu0 0.0
    %488 = vmatprep.subr.mxu0 0.0
    %489 = vmatpush1.msra.mxu0 0.0
    %490 = vmatprep.subr.mxu0 0.0
    %491 = vmatpush1.msra.mxu0 0.0
    %492 = vmatprep.subr.mxu0 0.0
    %493 = vmatpush1.msra.mxu0 0.0
    %494 = vmatprep.subr.mxu0 0.0
    %495 = vmatpush1.msra.mxu0 0.0
    %496 = vmatprep.subr.mxu0 0.0
    %497 = vmatpush1.msra.mxu0 0.0
    %498 = vmatprep.subr.mxu0 0.0
    %499 = vmatpush1.msra.mxu0 0.0
    %500 = vmatprep.subr.mxu0 0.0
    %501 = vmatpush1.msra.mxu0 0.0
    %502 = vmatprep.subr.mxu0 0.0
    %503 = vmatpush1.msra.mxu0 0.0
    %504 = vmatprep.subr.mxu0 0.0
    %505 = vmatpush1.msra.mxu0 0.0
    %506 = vmatprep.mubr.f32.mxu0 0.0
    %507 = vmatmul.mubr.f32.gmra.mrb[0].mxu0 %v431
    %v508 = vpop.f32.mrb[0].mxu0
    %v509 = vadd.f32 0.0, %v508
    %v510 = vpop.f32.mrb[0].mxu0
    %511 = vmatprep.mubr.f32.mxu0 0.0
    %512 = vmatmul.mubr.f32.gmra.mrb[0].mxu0 %v434
    %v513 = vpop.f32.mrb[0].mxu0
    %v514 = vadd.f32 0.0, %v513
    %v515 = vpop.f32.mrb[0].mxu0
    %516 = vmatprep.mubr.f32.mxu0 0.0
    %517 = vmatmul.mubr.f32.gmra.mrb[0].mxu0 %v437
    %v518 = vpop.f32.mrb[0].mxu0
    %v519 = vadd.f32 0.0, %v518
    %v520 = vpop.f32.mrb[0].mxu0
    %521 = vmatprep.mubr.f32.mxu0 0.0
    %522 = vmatmul.mubr.f32.gmra.mrb[0].mxu0 %v440
    %v523 = vpop.f32.mrb[0].mxu0
    %v524 = vadd.f32 0.0, %v523
    %v525 = vpop.f32.mrb[0].mxu0
    %526 = vdwg.mxu0
    %527 = vrot.lane.b32.xlu0 %v238, 120
    %v528 = vpop.permute.xlu0 %527
    %529 = vrot.lane.b32.xlu0 %v243, 120
    %v530 = vpop.permute.xlu0 %529
    %531 = vrot.lane.b32.xlu0 %v248, 120
    %v532 = vpop.permute.xlu0 %531
    %533 = vrot.lane.b32.xlu0 %v253, 120
    %v534 = vpop.permute.xlu0 %533
    %535 = vrot.lane.b32.xlu0 %v238, 88
    %v536 = vpop.permute.xlu0 %535
    %537 = vrot.lane.b32.xlu0 %v243, 88
    %v538 = vpop.permute.xlu0 %537
    %539 = vrot.lane.b32.xlu0 %v248, 88
    %v540 = vpop.permute.xlu0 %539
    %541 = vrot.lane.b32.xlu0 %v253, 88
    %v542 = vpop.permute.xlu0 %541
    %v543 = vsel %vm268, %v528, 0
    %v545 = vsel %vm268, %v530, 0
    %v547 = vsel %vm268, %v532, 0
    %v549 = vsel %vm268, %v534, 0
    %v551 = vsel %vm268, %v536, 0
    %v553 = vsel %vm268, %v538, 0
    %v555 = vsel %vm268, %v540, 0
    %v557 = vsel %vm268, %v542, 0
    %559 = vmatprep.subr.mxu0 0.0
    %560 = vmatpush1.xpose.msra.mxu0 %v551
    %561 = vmatprep.subr.mxu0 0.0
    %562 = vmatpush1.xpose.msra.mxu0 %v553
    %563 = vmatprep.subr.mxu0 0.0
    %564 = vmatpush1.xpose.msra.mxu0 %v555
    %565 = vmatprep.subr.mxu0 0.0
    %566 = vmatpush1.xpose.msra.mxu0 %v557
    %567 = vmatprep.subr.mxu0 0.0
    %568 = vmatpush1.xpose.msra.mxu0 0.0
    %569 = vmatprep.subr.mxu0 0.0
    %570 = vmatpush1.xpose.msra.mxu0 0.0
    %571 = vmatprep.subr.mxu0 0.0
    %572 = vmatpush1.xpose.msra.mxu0 0.0
    %573 = vmatprep.subr.mxu0 0.0
    %574 = vmatpush1.xpose.msra.mxu0 0.0
    %575 = vmatprep.subr.mxu0 0.0
    %576 = vmatpush1.xpose.msra.mxu0 0.0
    %577 = vmatprep.subr.mxu0 0.0
    %578 = vmatpush1.xpose.msra.mxu0 0.0
    %579 = vmatprep.subr.mxu0 0.0
    %580 = vmatpush1.xpose.msra.mxu0 0.0
    %581 = vmatprep.subr.mxu0 0.0
    %582 = vmatpush1.xpose.msra.mxu0 0.0
    %583 = vmatprep.subr.mxu0 0.0
    %584 = vmatpush1.xpose.msra.mxu0 0.0
    %585 = vmatprep.subr.mxu0 0.0
    %586 = vmatpush1.xpose.msra.mxu0 0.0
    %587 = vmatprep.subr.mxu0 0.0
    %588 = vmatpush1.xpose.msra.mxu0 0.0
    %589 = vmatprep.subr.mxu0 0.0
    %590 = vmatpush1.xpose.msra.mxu0 0.0
    %591 = vmatprep.subr.mxu0 0.0
    %592 = vmatpush1.xpose.msra.mxu0 0.0
    %593 = vmatprep.subr.mxu0 0.0
    %594 = vmatpush1.xpose.msra.mxu0 0.0
    %595 = vmatprep.subr.mxu0 0.0
    %596 = vmatpush1.xpose.msra.mxu0 0.0
    %597 = vmatprep.subr.mxu0 0.0
    %598 = vmatpush1.xpose.msra.mxu0 0.0
    %599 = vmatprep.subr.mxu0 0.0
    %600 = vmatpush1.xpose.msra.mxu0 0.0
    %601 = vmatprep.subr.mxu0 0.0
    %602 = vmatpush1.xpose.msra.mxu0 0.0
    %603 = vmatprep.subr.mxu0 0.0
    %604 = vmatpush1.xpose.msra.mxu0 0.0
    %605 = vmatprep.subr.mxu0 0.0
    %606 = vmatpush1.xpose.msra.mxu0 0.0
    %607 = vmatprep.subr.mxu0 0.0
    %608 = vmatpush1.xpose.msra.mxu0 0.0
    %609 = vmatprep.subr.mxu0 0.0
    %610 = vmatpush1.xpose.msra.mxu0 0.0
    %611 = vmatprep.subr.mxu0 0.0
    %612 = vmatpush1.xpose.msra.mxu0 0.0
    %613 = vmatprep.subr.mxu0 0.0
    %614 = vmatpush1.xpose.msra.mxu0 0.0
    %615 = vmatprep.subr.mxu0 0.0
    %616 = vmatpush1.xpose.msra.mxu0 0.0
    %617 = vmatprep.subr.mxu0 0.0
    %618 = vmatpush1.xpose.msra.mxu0 0.0
    %619 = vmatprep.subr.mxu0 0.0
    %620 = vmatpush1.xpose.msra.mxu0 0.0
    %621 = vmatprep.subr.mxu0 0.0
    %622 = vmatpush1.xpose.msra.mxu0 0.0
    %623 = vmatprep.mubr.f32.mxu0 0.0
    %624 = vmatmul.mubr.f32.gmra.mrb[0].mxu0 %v543
    %v625 = vpop.f32.mrb[0].mxu0
    %v626 = vadd.f32 0.0, %v625
    %v627 = vpop.f32.mrb[0].mxu0
    %628 = vmatprep.mubr.f32.mxu0 0.0
    %629 = vmatmul.mubr.f32.gmra.mrb[0].mxu0 %v545
    %v630 = vpop.f32.mrb[0].mxu0
    %v631 = vadd.f32 0.0, %v630
    %v632 = vpop.f32.mrb[0].mxu0
    %633 = vmatprep.mubr.f32.mxu0 0.0
    %634 = vmatmul.mubr.f32.gmra.mrb[0].mxu0 %v547
    %v635 = vpop.f32.mrb[0].mxu0
    %v636 = vadd.f32 0.0, %v635
    %v637 = vpop.f32.mrb[0].mxu0
    %638 = vmatprep.mubr.f32.mxu0 0.0
    %639 = vmatmul.mubr.f32.gmra.mrb[0].mxu0 %v549
    %v640 = vpop.f32.mrb[0].mxu0
    %v641 = vadd.f32 0.0, %v640
    %v642 = vpop.f32.mrb[0].mxu0
    %643 = vdwg.mxu0
    %v644 = vsel %vm129, %v626, -1e+30
    %v645 = vsel %vm130, %v631, -1e+30
    %v646 = vsel %vm131, %v636, -1e+30
    %v647 = vsel %vm132, %v641, -1e+30
    %v648 = vsel %vm158, %v644, -inf
    %649 = vmax.xlane.f32.xlu0 %v648
    %v650 = vpop.xlane.xlu0 %649
    %v651 = vsel %vm158, %v645, -inf
    %652 = vmax.xlane.f32.xlu0 %v651
    %v653 = vpop.xlane.xlu0 %652
    %v654 = vsel %vm158, %v646, -inf
    %655 = vmax.xlane.f32.xlu0 %v654
    %v656 = vpop.xlane.xlu0 %655
    %v657 = vsel %vm158, %v647, -inf
    %658 = vmax.xlane.f32.xlu0 %v657
    %v659 = vpop.xlane.xlu0 %658
    %v660 = vsub.f32 %v644, %v650
    %v661 = vsub.f32 %v645, %v653
    %v662 = vsub.f32 %v646, %v656
    %v663 = vsub.f32 %v647, %v659
    %v664 = vmul.f32 %v660, 1.442695
    %v665 = vpow.pop %v664
    %v666 = vmul.f32 %v661, 1.442695
    %v667 = vpow.pop %v666
    %v668 = vmul.f32 %v662, 1.442695
    %v669 = vpow.pop %v668
    %v670 = vmul.f32 %v663, 1.442695
    %v671 = vpow.pop %v670
    %v672 = vsel %vm158, %v665, 0.0
    %673 = vadd.xlane.f32.xlu0 %v672
    %v674 = vpop.xlane.xlu0 %673
    %v675 = vsel %vm158, %v667, 0.0
    %676 = vadd.xlane.f32.xlu0 %v675
    %v677 = vpop.xlane.xlu0 %676
    %v678 = vsel %vm158, %v669, 0.0
    %679 = vadd.xlane.f32.xlu0 %v678
    %v680 = vpop.xlane.xlu0 %679
    %v681 = vsel %vm158, %v671, 0.0
    %682 = vadd.xlane.f32.xlu0 %v681
    %v683 = vpop.xlane.xlu0 %682
    %v684 = vrcp.pop %v674
    %v685 = vrcp.pop %v677
    %v686 = vrcp.pop %v680
    %v687 = vrcp.pop %v683
    %v688 = vmul.f32 %v665, %v684
    %v689 = vmul.f32 %v667, %v685
    %v690 = vmul.f32 %v669, %v686
    %v691 = vmul.f32 %v671, %v687
    %692 = vrot.lane.b32.xlu0 %v238, 56
    %v693 = vpop.permute.xlu0 %692
    %694 = vrot.lane.b32.xlu0 %v243, 56
    %v695 = vpop.permute.xlu0 %694
    %696 = vrot.lane.b32.xlu0 %v248, 56
    %v697 = vpop.permute.xlu0 %696
    %698 = vrot.lane.b32.xlu0 %v253, 56
    %v699 = vpop.permute.xlu0 %698
    %v705 = vsel %vm158, %v688, 0
    %v708 = vsel %vm158, %v689, 0
    %v711 = vsel %vm158, %v690, 0
    %v714 = vsel %vm158, %v691, 0
    %716 = vmatprep.subr.mxu0 0.0
    %717 = vmatpush1.msra.mxu0 %v693
    %718 = vmatprep.subr.mxu0 0.0
    %719 = vmatpush1.msra.mxu0 %v695
    %720 = vmatprep.subr.mxu0 0.0
    %721 = vmatpush1.msra.mxu0 %v697
    %722 = vmatprep.subr.mxu0 0.0
    %723 = vmatpush1.msra.mxu0 %v699
    %724 = vmatprep.subr.mxu0 0.0
    %725 = vmatpush1.msra.mxu0 0.0
    %726 = vmatprep.subr.mxu0 0.0
    %727 = vmatpush1.msra.mxu0 0.0
    %728 = vmatprep.subr.mxu0 0.0
    %729 = vmatpush1.msra.mxu0 0.0
    %730 = vmatprep.subr.mxu0 0.0
    %731 = vmatpush1.msra.mxu0 0.0
    %732 = vmatprep.subr.mxu0 0.0
    %733 = vmatpush1.msra.mxu0 0.0
    %734 = vmatprep.subr.mxu0 0.0
    %735 = vmatpush1.msra.mxu0 0.0
    %736 = vmatprep.subr.mxu0 0.0
    %737 = vmatpush1.msra.mxu0 0.0
    %738 = vmatprep.subr.mxu0 0.0
    %739 = vmatpush1.msra.mxu0 0.0
    %740 = vmatprep.subr.mxu0 0.0
    %741 = vmatpush1.msra.mxu0 0.0
    %742 = vmatprep.subr.mxu0 0.0
    %743 = vmatpush1.msra.mxu0 0.0
    %744 = vmatprep.subr.mxu0 0.0
    %745 = vmatpush1.msra.mxu0 0.0
    %746 = vmatprep.subr.mxu0 0.0
    %747 = vmatpush1.msra.mxu0 0.0
    %748 = vmatprep.subr.mxu0 0.0
    %749 = vmatpush1.msra.mxu0 0.0
    %750 = vmatprep.subr.mxu0 0.0
    %751 = vmatpush1.msra.mxu0 0.0
    %752 = vmatprep.subr.mxu0 0.0
    %753 = vmatpush1.msra.mxu0 0.0
    %754 = vmatprep.subr.mxu0 0.0
    %755 = vmatpush1.msra.mxu0 0.0
    %756 = vmatprep.subr.mxu0 0.0
    %757 = vmatpush1.msra.mxu0 0.0
    %758 = vmatprep.subr.mxu0 0.0
    %759 = vmatpush1.msra.mxu0 0.0
    %760 = vmatprep.subr.mxu0 0.0
    %761 = vmatpush1.msra.mxu0 0.0
    %762 = vmatprep.subr.mxu0 0.0
    %763 = vmatpush1.msra.mxu0 0.0
    %764 = vmatprep.subr.mxu0 0.0
    %765 = vmatpush1.msra.mxu0 0.0
    %766 = vmatprep.subr.mxu0 0.0
    %767 = vmatpush1.msra.mxu0 0.0
    %768 = vmatprep.subr.mxu0 0.0
    %769 = vmatpush1.msra.mxu0 0.0
    %770 = vmatprep.subr.mxu0 0.0
    %771 = vmatpush1.msra.mxu0 0.0
    %772 = vmatprep.subr.mxu0 0.0
    %773 = vmatpush1.msra.mxu0 0.0
    %774 = vmatprep.subr.mxu0 0.0
    %775 = vmatpush1.msra.mxu0 0.0
    %776 = vmatprep.subr.mxu0 0.0
    %777 = vmatpush1.msra.mxu0 0.0
    %778 = vmatprep.subr.mxu0 0.0
    %779 = vmatpush1.msra.mxu0 0.0
    %780 = vmatprep.mubr.f32.mxu0 0.0
    %781 = vmatmul.mubr.f32.gmra.mrb[0].mxu0 %v705
    %v782 = vpop.f32.mrb[0].mxu0
    %v783 = vadd.f32 0.0, %v782
    %v784 = vpop.f32.mrb[0].mxu0
    %785 = vmatprep.mubr.f32.mxu0 0.0
    %786 = vmatmul.mubr.f32.gmra.mrb[0].mxu0 %v708
    %v787 = vpop.f32.mrb[0].mxu0
    %v788 = vadd.f32 0.0, %v787
    %v789 = vpop.f32.mrb[0].mxu0
    %790 = vmatprep.mubr.f32.mxu0 0.0
    %791 = vmatmul.mubr.f32.gmra.mrb[0].mxu0 %v711
    %v792 = vpop.f32.mrb[0].mxu0
    %v793 = vadd.f32 0.0, %v792
    %v794 = vpop.f32.mrb[0].mxu0
    %795 = vmatprep.mubr.f32.mxu0 0.0
    %796 = vmatmul.mubr.f32.gmra.mrb[0].mxu0 %v714
    %v797 = vpop.f32.mrb[0].mxu0
    %v798 = vadd.f32 0.0, %v797
    %v799 = vpop.f32.mrb[0].mxu0
    %800 = vdwg.mxu0
    %801 = vrot.lane.b32.xlu0 %v238, 112
    %v802 = vpop.permute.xlu0 %801
    %803 = vrot.lane.b32.xlu0 %v243, 112
    %v804 = vpop.permute.xlu0 %803
    %805 = vrot.lane.b32.xlu0 %v248, 112
    %v806 = vpop.permute.xlu0 %805
    %807 = vrot.lane.b32.xlu0 %v253, 112
    %v808 = vpop.permute.xlu0 %807
    %809 = vrot.lane.b32.xlu0 %v238, 80
    %v810 = vpop.permute.xlu0 %809
    %811 = vrot.lane.b32.xlu0 %v243, 80
    %v812 = vpop.permute.xlu0 %811
    %813 = vrot.lane.b32.xlu0 %v248, 80
    %v814 = vpop.permute.xlu0 %813
    %815 = vrot.lane.b32.xlu0 %v253, 80
    %v816 = vpop.permute.xlu0 %815
    %v817 = vsel %vm268, %v802, 0
    %v819 = vsel %vm268, %v804, 0
    %v821 = vsel %vm268, %v806, 0
    %v823 = vsel %vm268, %v808, 0
    %v825 = vsel %vm268, %v810, 0
    %v827 = vsel %vm268, %v812, 0
    %v829 = vsel %vm268, %v814, 0
    %v831 = vsel %vm268, %v816, 0
    %833 = vmatprep.subr.mxu0 0.0
    %834 = vmatpush1.xpose.msra.mxu0 %v825
    %835 = vmatprep.subr.mxu0 0.0
    %836 = vmatpush1.xpose.msra.mxu0 %v827
    %837 = vmatprep.subr.mxu0 0.0
    %838 = vmatpush1.xpose.msra.mxu0 %v829
    %839 = vmatprep.subr.mxu0 0.0
    %840 = vmatpush1.xpose.msra.mxu0 %v831
    %841 = vmatprep.subr.mxu0 0.0
    %842 = vmatpush1.xpose.msra.mxu0 0.0
    %843 = vmatprep.subr.mxu0 0.0
    %844 = vmatpush1.xpose.msra.mxu0 0.0
    %845 = vmatprep.subr.mxu0 0.0
    %846 = vmatpush1.xpose.msra.mxu0 0.0
    %847 = vmatprep.subr.mxu0 0.0
    %848 = vmatpush1.xpose.msra.mxu0 0.0
    %849 = vmatprep.subr.mxu0 0.0
    %850 = vmatpush1.xpose.msra.mxu0 0.0
    %851 = vmatprep.subr.mxu0 0.0
    %852 = vmatpush1.xpose.msra.mxu0 0.0
    %853 = vmatprep.subr.mxu0 0.0
    %854 = vmatpush1.xpose.msra.mxu0 0.0
    %855 = vmatprep.subr.mxu0 0.0
    %856 = vmatpush1.xpose.msra.mxu0 0.0
    %857 = vmatprep.subr.mxu0 0.0
    %858 = vmatpush1.xpose.msra.mxu0 0.0
    %859 = vmatprep.subr.mxu0 0.0
    %860 = vmatpush1.xpose.msra.mxu0 0.0
    %861 = vmatprep.subr.mxu0 0.0
    %862 = vmatpush1.xpose.msra.mxu0 0.0
    %863 = vmatprep.subr.mxu0 0.0
    %864 = vmatpush1.xpose.msra.mxu0 0.0
    %865 = vmatprep.subr.mxu0 0.0
    %866 = vmatpush1.xpose.msra.mxu0 0.0
    %867 = vmatprep.subr.mxu0 0.0
    %868 = vmatpush1.xpose.msra.mxu0 0.0
    %869 = vmatprep.subr.mxu0 0.0
    %870 = vmatpush1.xpose.msra.mxu0 0.0
    %871 = vmatprep.subr.mxu0 0.0
    %872 = vmatpush1.xpose.msra.mxu0 0.0
    %873 = vmatprep.subr.mxu0 0.0
    %874 = vmatpush1.xpose.msra.mxu0 0.0
    %875 = vmatprep.subr.mxu0 0.0
    %876 = vmatpush1.xpose.msra.mxu0 0.0
    %877 = vmatprep.subr.mxu0 0.0
    %878 = vmatpush1.xpose.msra.mxu0 0.0
    %879 = vmatprep.subr.mxu0 0.0
    %880 = vmatpush1.xpose.msra.mxu0 0.0
    %881 = vmatprep.subr.mxu0 0.0
    %882 = vmatpush1.xpose.msra.mxu0 0.0
    %883 = vmatprep.subr.mxu0 0.0
    %884 = vmatpush1.xpose.msra.mxu0 0.0
    %885 = vmatprep.subr.mxu0 0.0
    %886 = vmatpush1.xpose.msra.mxu0 0.0
    %887 = vmatprep.subr.mxu0 0.0
    %888 = vmatpush1.xpose.msra.mxu0 0.0
    %889 = vmatprep.subr.mxu0 0.0
    %890 = vmatpush1.xpose.msra.mxu0 0.0
    %891 = vmatprep.subr.mxu0 0.0
    %892 = vmatpush1.xpose.msra.mxu0 0.0
    %893 = vmatprep.subr.mxu0 0.0
    %894 = vmatpush1.xpose.msra.mxu0 0.0
    %895 = vmatprep.subr.mxu0 0.0
    %896 = vmatpush1.xpose.msra.mxu0 0.0
    %897 = vmatprep.mubr.f32.mxu0 0.0
    %898 = vmatmul.mubr.f32.gmra.mrb[0].mxu0 %v817
    %v899 = vpop.f32.mrb[0].mxu0
    %v900 = vadd.f32 0.0, %v899
    %v901 = vpop.f32.mrb[0].mxu0
    %902 = vmatprep.mubr.f32.mxu0 0.0
    %903 = vmatmul.mubr.f32.gmra.mrb[0].mxu0 %v819
    %v904 = vpop.f32.mrb[0].mxu0
    %v905 = vadd.f32 0.0, %v904
    %v906 = vpop.f32.mrb[0].mxu0
    %907 = vmatprep.mubr.f32.mxu0 0.0
    %908 = vmatmul.mubr.f32.gmra.mrb[0].mxu0 %v821
    %v909 = vpop.f32.mrb[0].mxu0
    %v910 = vadd.f32 0.0, %v909
    %v911 = vpop.f32.mrb[0].mxu0
    %912 = vmatprep.mubr.f32.mxu0 0.0
    %913 = vmatmul.mubr.f32.gmra.mrb[0].mxu0 %v823
    %v914 = vpop.f32.mrb[0].mxu0
    %v915 = vadd.f32 0.0, %v914
    %v916 = vpop.f32.mrb[0].mxu0
    %917 = vdwg.mxu0
    %v918 = vsel %vm129, %v900, -1e+30
    %v919 = vsel %vm130, %v905, -1e+30
    %v920 = vsel %vm131, %v910, -1e+30
    %v921 = vsel %vm132, %v915, -1e+30
    %v922 = vsel %vm158, %v918, -inf
    %923 = vmax.xlane.f32.xlu0 %v922
    %v924 = vpop.xlane.xlu0 %923
    %v925 = vsel %vm158, %v919, -inf
    %926 = vmax.xlane.f32.xlu0 %v925
    %v927 = vpop.xlane.xlu0 %926
    %v928 = vsel %vm158, %v920, -inf
    %929 = vmax.xlane.f32.xlu0 %v928
    %v930 = vpop.xlane.xlu0 %929
    %v931 = vsel %vm158, %v921, -inf
    %932 = vmax.xlane.f32.xlu0 %v931
    %v933 = vpop.xlane.xlu0 %932
    %v934 = vsub.f32 %v918, %v924
    %v935 = vsub.f32 %v919, %v927
    %v936 = vsub.f32 %v920, %v930
    %v937 = vsub.f32 %v921, %v933
    %v938 = vmul.f32 %v934, 1.442695
    %v939 = vpow.pop %v938
    %v940 = vmul.f32 %v935, 1.442695
    %v941 = vpow.pop %v940
    %v942 = vmul.f32 %v936, 1.442695
    %v943 = vpow.pop %v942
    %v944 = vmul.f32 %v937, 1.442695
    %v945 = vpow.pop %v944
    %v946 = vsel %vm158, %v939, 0.0
    %947 = vadd.xlane.f32.xlu0 %v946
    %v948 = vpop.xlane.xlu0 %947
    %v949 = vsel %vm158, %v941, 0.0
    %950 = vadd.xlane.f32.xlu0 %v949
    %v951 = vpop.xlane.xlu0 %950
    %v952 = vsel %vm158, %v943, 0.0
    %953 = vadd.xlane.f32.xlu0 %v952
    %v954 = vpop.xlane.xlu0 %953
    %v955 = vsel %vm158, %v945, 0.0
    %956 = vadd.xlane.f32.xlu0 %v955
    %v957 = vpop.xlane.xlu0 %956
    %v958 = vrcp.pop %v948
    %v959 = vrcp.pop %v951
    %v960 = vrcp.pop %v954
    %v961 = vrcp.pop %v957
    %v962 = vmul.f32 %v939, %v958
    %v963 = vmul.f32 %v941, %v959
    %v964 = vmul.f32 %v943, %v960
    %v965 = vmul.f32 %v945, %v961
    %966 = vrot.lane.b32.xlu0 %v238, 48
    %v967 = vpop.permute.xlu0 %966
    %968 = vrot.lane.b32.xlu0 %v243, 48
    %v969 = vpop.permute.xlu0 %968
    %970 = vrot.lane.b32.xlu0 %v248, 48
    %v971 = vpop.permute.xlu0 %970
    %972 = vrot.lane.b32.xlu0 %v253, 48
    %v973 = vpop.permute.xlu0 %972
    %v979 = vsel %vm158, %v962, 0
    %v982 = vsel %vm158, %v963, 0
    %v985 = vsel %vm158, %v964, 0
    %v988 = vsel %vm158, %v965, 0
    %990 = vmatprep.subr.mxu0 0.0
    %991 = vmatpush1.msra.mxu0 %v967
    %992 = vmatprep.subr.mxu0 0.0
    %993 = vmatpush1.msra.mxu0 %v969
    %994 = vmatprep.subr.mxu0 0.0
    %995 = vmatpush1.msra.mxu0 %v971
    %996 = vmatprep.subr.mxu0 0.0
    %997 = vmatpush1.msra.mxu0 %v973
    %998 = vmatprep.subr.mxu0 0.0
    %999 = vmatpush1.msra.mxu0 0.0
    %1000 = vmatprep.subr.mxu0 0.0
    %1001 = vmatpush1.msra.mxu0 0.0
    %1002 = vmatprep.subr.mxu0 0.0
    %1003 = vmatpush1.msra.mxu0 0.0
    %1004 = vmatprep.subr.mxu0 0.0
    %1005 = vmatpush1.msra.mxu0 0.0
    %1006 = vmatprep.subr.mxu0 0.0
    %1007 = vmatpush1.msra.mxu0 0.0
    %1008 = vmatprep.subr.mxu0 0.0
    %1009 = vmatpush1.msra.mxu0 0.0
    %1010 = vmatprep.subr.mxu0 0.0
    %1011 = vmatpush1.msra.mxu0 0.0
    %1012 = vmatprep.subr.mxu0 0.0
    %1013 = vmatpush1.msra.mxu0 0.0
    %1014 = vmatprep.subr.mxu0 0.0
    %1015 = vmatpush1.msra.mxu0 0.0
    %1016 = vmatprep.subr.mxu0 0.0
    %1017 = vmatpush1.msra.mxu0 0.0
    %1018 = vmatprep.subr.mxu0 0.0
    %1019 = vmatpush1.msra.mxu0 0.0
    %1020 = vmatprep.subr.mxu0 0.0
    %1021 = vmatpush1.msra.mxu0 0.0
    %1022 = vmatprep.subr.mxu0 0.0
    %1023 = vmatpush1.msra.mxu0 0.0
    %1024 = vmatprep.subr.mxu0 0.0
    %1025 = vmatpush1.msra.mxu0 0.0
    %1026 = vmatprep.subr.mxu0 0.0
    %1027 = vmatpush1.msra.mxu0 0.0
    %1028 = vmatprep.subr.mxu0 0.0
    %1029 = vmatpush1.msra.mxu0 0.0
    %1030 = vmatprep.subr.mxu0 0.0
    %1031 = vmatpush1.msra.mxu0 0.0
    %1032 = vmatprep.subr.mxu0 0.0
    %1033 = vmatpush1.msra.mxu0 0.0
    %1034 = vmatprep.subr.mxu0 0.0
    %1035 = vmatpush1.msra.mxu0 0.0
    %1036 = vmatprep.subr.mxu0 0.0
    %1037 = vmatpush1.msra.mxu0 0.0
    %1038 = vmatprep.subr.mxu0 0.0
    %1039 = vmatpush1.msra.mxu0 0.0
    %1040 = vmatprep.subr.mxu0 0.0
    %1041 = vmatpush1.msra.mxu0 0.0
    %1042 = vmatprep.subr.mxu0 0.0
    %1043 = vmatpush1.msra.mxu0 0.0
    %1044 = vmatprep.subr.mxu0 0.0
    %1045 = vmatpush1.msra.mxu0 0.0
    %1046 = vmatprep.subr.mxu0 0.0
    %1047 = vmatpush1.msra.mxu0 0.0
    %1048 = vmatprep.subr.mxu0 0.0
    %1049 = vmatpush1.msra.mxu0 0.0
    %1050 = vmatprep.subr.mxu0 0.0
    %1051 = vmatpush1.msra.mxu0 0.0
    %1052 = vmatprep.subr.mxu0 0.0
    %1053 = vmatpush1.msra.mxu0 0.0
    %1054 = vmatprep.mubr.f32.mxu0 0.0
    %1055 = vmatmul.mubr.f32.gmra.mrb[0].mxu0 %v979
    %v1056 = vpop.f32.mrb[0].mxu0
    %v1057 = vadd.f32 0.0, %v1056
    %v1058 = vpop.f32.mrb[0].mxu0
    %1059 = vmatprep.mubr.f32.mxu0 0.0
    %1060 = vmatmul.mubr.f32.gmra.mrb[0].mxu0 %v982
    %v1061 = vpop.f32.mrb[0].mxu0
    %v1062 = vadd.f32 0.0, %v1061
    %v1063 = vpop.f32.mrb[0].mxu0
    %1064 = vmatprep.mubr.f32.mxu0 0.0
    %1065 = vmatmul.mubr.f32.gmra.mrb[0].mxu0 %v985
    %v1066 = vpop.f32.mrb[0].mxu0
    %v1067 = vadd.f32 0.0, %v1066
    %v1068 = vpop.f32.mrb[0].mxu0
    %1069 = vmatprep.mubr.f32.mxu0 0.0
    %1070 = vmatmul.mubr.f32.gmra.mrb[0].mxu0 %v988
    %v1071 = vpop.f32.mrb[0].mxu0
    %v1072 = vadd.f32 0.0, %v1071
    %v1073 = vpop.f32.mrb[0].mxu0
    %1074 = vdwg.mxu0
    %1075 = vrot.lane.b32.xlu0 %v238, 104
    %v1076 = vpop.permute.xlu0 %1075
    %1077 = vrot.lane.b32.xlu0 %v243, 104
    %v1078 = vpop.permute.xlu0 %1077
    %1079 = vrot.lane.b32.xlu0 %v248, 104
    %v1080 = vpop.permute.xlu0 %1079
    %1081 = vrot.lane.b32.xlu0 %v253, 104
    %v1082 = vpop.permute.xlu0 %1081
    %1083 = vrot.lane.b32.xlu0 %v238, 72
    %v1084 = vpop.permute.xlu0 %1083
    %1085 = vrot.lane.b32.xlu0 %v243, 72
    %v1086 = vpop.permute.xlu0 %1085
    %1087 = vrot.lane.b32.xlu0 %v248, 72
    %v1088 = vpop.permute.xlu0 %1087
    %1089 = vrot.lane.b32.xlu0 %v253, 72
    %v1090 = vpop.permute.xlu0 %1089
    %v1091 = vsel %vm268, %v1076, 0
    %v1093 = vsel %vm268, %v1078, 0
    %v1095 = vsel %vm268, %v1080, 0
    %v1097 = vsel %vm268, %v1082, 0
    %v1099 = vsel %vm268, %v1084, 0
    %v1101 = vsel %vm268, %v1086, 0
    %v1103 = vsel %vm268, %v1088, 0
    %v1105 = vsel %vm268, %v1090, 0
    %1107 = vmatprep.subr.mxu0 0.0
    %1108 = vmatpush1.xpose.msra.mxu0 %v1099
    %1109 = vmatprep.subr.mxu0 0.0
    %1110 = vmatpush1.xpose.msra.mxu0 %v1101
    %1111 = vmatprep.subr.mxu0 0.0
    %1112 = vmatpush1.xpose.msra.mxu0 %v1103
    %1113 = vmatprep.subr.mxu0 0.0
    %1114 = vmatpush1.xpose.msra.mxu0 %v1105
    %1115 = vmatprep.subr.mxu0 0.0
    %1116 = vmatpush1.xpose.msra.mxu0 0.0
    %1117 = vmatprep.subr.mxu0 0.0
    %1118 = vmatpush1.xpose.msra.mxu0 0.0
    %1119 = vmatprep.subr.mxu0 0.0
    %1120 = vmatpush1.xpose.msra.mxu0 0.0
    %1121 = vmatprep.subr.mxu0 0.0
    %1122 = vmatpush1.xpose.msra.mxu0 0.0
    %1123 = vmatprep.subr.mxu0 0.0
    %1124 = vmatpush1.xpose.msra.mxu0 0.0
    %1125 = vmatprep.subr.mxu0 0.0
    %1126 = vmatpush1.xpose.msra.mxu0 0.0
    %1127 = vmatprep.subr.mxu0 0.0
    %1128 = vmatpush1.xpose.msra.mxu0 0.0
    %1129 = vmatprep.subr.mxu0 0.0
    %1130 = vmatpush1.xpose.msra.mxu0 0.0
    %1131 = vmatprep.subr.mxu0 0.0
    %1132 = vmatpush1.xpose.msra.mxu0 0.0
    %1133 = vmatprep.subr.mxu0 0.0
    %1134 = vmatpush1.xpose.msra.mxu0 0.0
    %1135 = vmatprep.subr.mxu0 0.0
    %1136 = vmatpush1.xpose.msra.mxu0 0.0
    %1137 = vmatprep.subr.mxu0 0.0
    %1138 = vmatpush1.xpose.msra.mxu0 0.0
    %1139 = vmatprep.subr.mxu0 0.0
    %1140 = vmatpush1.xpose.msra.mxu0 0.0
    %1141 = vmatprep.subr.mxu0 0.0
    %1142 = vmatpush1.xpose.msra.mxu0 0.0
    %1143 = vmatprep.subr.mxu0 0.0
    %1144 = vmatpush1.xpose.msra.mxu0 0.0
    %1145 = vmatprep.subr.mxu0 0.0
    %1146 = vmatpush1.xpose.msra.mxu0 0.0
    %1147 = vmatprep.subr.mxu0 0.0
    %1148 = vmatpush1.xpose.msra.mxu0 0.0
    %1149 = vmatprep.subr.mxu0 0.0
    %1150 = vmatpush1.xpose.msra.mxu0 0.0
    %1151 = vmatprep.subr.mxu0 0.0
    %1152 = vmatpush1.xpose.msra.mxu0 0.0
    %1153 = vmatprep.subr.mxu0 0.0
    %1154 = vmatpush1.xpose.msra.mxu0 0.0
    %1155 = vmatprep.subr.mxu0 0.0
    %1156 = vmatpush1.xpose.msra.mxu0 0.0
    %1157 = vmatprep.subr.mxu0 0.0
    %1158 = vmatpush1.xpose.msra.mxu0 0.0
    %1159 = vmatprep.subr.mxu0 0.0
    %1160 = vmatpush1.xpose.msra.mxu0 0.0
    %1161 = vmatprep.subr.mxu0 0.0
    %1162 = vmatpush1.xpose.msra.mxu0 0.0
    %1163 = vmatprep.subr.mxu0 0.0
    %1164 = vmatpush1.xpose.msra.mxu0 0.0
    %1165 = vmatprep.subr.mxu0 0.0
    %1166 = vmatpush1.xpose.msra.mxu0 0.0
    %1167 = vmatprep.subr.mxu0 0.0
    %1168 = vmatpush1.xpose.msra.mxu0 0.0
    %1169 = vmatprep.subr.mxu0 0.0
    %1170 = vmatpush1.xpose.msra.mxu0 0.0
    %1171 = vmatprep.mubr.f32.mxu0 0.0
    %1172 = vmatmul.mubr.f32.gmra.mrb[0].mxu0 %v1091
    %v1173 = vpop.f32.mrb[0].mxu0
    %v1174 = vadd.f32 0.0, %v1173
    %v1175 = vpop.f32.mrb[0].mxu0
    %1176 = vmatprep.mubr.f32.mxu0 0.0
    %1177 = vmatmul.mubr.f32.gmra.mrb[0].mxu0 %v1093
    %v1178 = vpop.f32.mrb[0].mxu0
    %v1179 = vadd.f32 0.0, %v1178
    %v1180 = vpop.f32.mrb[0].mxu0
    %1181 = vmatprep.mubr.f32.mxu0 0.0
    %1182 = vmatmul.mubr.f32.gmra.mrb[0].mxu0 %v1095
    %v1183 = vpop.f32.mrb[0].mxu0
    %v1184 = vadd.f32 0.0, %v1183
    %v1185 = vpop.f32.mrb[0].mxu0
    %1186 = vmatprep.mubr.f32.mxu0 0.0
    %1187 = vmatmul.mubr.f32.gmra.mrb[0].mxu0 %v1097
    %v1188 = vpop.f32.mrb[0].mxu0
    %v1189 = vadd.f32 0.0, %v1188
    %v1190 = vpop.f32.mrb[0].mxu0
    %1191 = vdwg.mxu0
    %v1192 = vsel %vm129, %v1174, -1e+30
    %v1193 = vsel %vm130, %v1179, -1e+30
    %v1194 = vsel %vm131, %v1184, -1e+30
    %v1195 = vsel %vm132, %v1189, -1e+30
    %v1196 = vsel %vm158, %v1192, -inf
    %1197 = vmax.xlane.f32.xlu0 %v1196
    %v1198 = vpop.xlane.xlu0 %1197
    %v1199 = vsel %vm158, %v1193, -inf
    %1200 = vmax.xlane.f32.xlu0 %v1199
    %v1201 = vpop.xlane.xlu0 %1200
    %v1202 = vsel %vm158, %v1194, -inf
    %1203 = vmax.xlane.f32.xlu0 %v1202
    %v1204 = vpop.xlane.xlu0 %1203
    %v1205 = vsel %vm158, %v1195, -inf
    %1206 = vmax.xlane.f32.xlu0 %v1205
    %v1207 = vpop.xlane.xlu0 %1206
    %v1208 = vsub.f32 %v1192, %v1198
    %v1209 = vsub.f32 %v1193, %v1201
    %v1210 = vsub.f32 %v1194, %v1204
    %v1211 = vsub.f32 %v1195, %v1207
    %v1212 = vmul.f32 %v1208, 1.442695
    %v1213 = vpow.pop %v1212
    %v1214 = vmul.f32 %v1209, 1.442695
    %v1215 = vpow.pop %v1214
    %v1216 = vmul.f32 %v1210, 1.442695
    %v1217 = vpow.pop %v1216
    %v1218 = vmul.f32 %v1211, 1.442695
    %v1219 = vpow.pop %v1218
    %v1220 = vsel %vm158, %v1213, 0.0
    %1221 = vadd.xlane.f32.xlu0 %v1220
    %v1222 = vpop.xlane.xlu0 %1221
    %v1223 = vsel %vm158, %v1215, 0.0
    %1224 = vadd.xlane.f32.xlu0 %v1223
    %v1225 = vpop.xlane.xlu0 %1224
    %v1226 = vsel %vm158, %v1217, 0.0
    %1227 = vadd.xlane.f32.xlu0 %v1226
    %v1228 = vpop.xlane.xlu0 %1227
    %v1229 = vsel %vm158, %v1219, 0.0
    %1230 = vadd.xlane.f32.xlu0 %v1229
    %v1231 = vpop.xlane.xlu0 %1230
    %v1232 = vrcp.pop %v1222
    %v1233 = vrcp.pop %v1225
    %v1234 = vrcp.pop %v1228
    %v1235 = vrcp.pop %v1231
    %v1236 = vmul.f32 %v1213, %v1232
    %v1237 = vmul.f32 %v1215, %v1233
    %v1238 = vmul.f32 %v1217, %v1234
    %v1239 = vmul.f32 %v1219, %v1235
    %1240 = vrot.lane.b32.xlu0 %v238, 40
    %v1241 = vpop.permute.xlu0 %1240
    %1242 = vrot.lane.b32.xlu0 %v243, 40
    %v1243 = vpop.permute.xlu0 %1242
    %1244 = vrot.lane.b32.xlu0 %v248, 40
    %v1245 = vpop.permute.xlu0 %1244
    %1246 = vrot.lane.b32.xlu0 %v253, 40
    %v1247 = vpop.permute.xlu0 %1246
    %v1253 = vsel %vm158, %v1236, 0
    %v1256 = vsel %vm158, %v1237, 0
    %v1259 = vsel %vm158, %v1238, 0
    %v1262 = vsel %vm158, %v1239, 0
    %1264 = vmatprep.subr.mxu0 0.0
    %1265 = vmatpush1.msra.mxu0 %v1241
    %1266 = vmatprep.subr.mxu0 0.0
    %1267 = vmatpush1.msra.mxu0 %v1243
    %1268 = vmatprep.subr.mxu0 0.0
    %1269 = vmatpush1.msra.mxu0 %v1245
    %1270 = vmatprep.subr.mxu0 0.0
    %1271 = vmatpush1.msra.mxu0 %v1247
    %1272 = vmatprep.subr.mxu0 0.0
    %1273 = vmatpush1.msra.mxu0 0.0
    %1274 = vmatprep.subr.mxu0 0.0
    %1275 = vmatpush1.msra.mxu0 0.0
    %1276 = vmatprep.subr.mxu0 0.0
    %1277 = vmatpush1.msra.mxu0 0.0
    %1278 = vmatprep.subr.mxu0 0.0
    %1279 = vmatpush1.msra.mxu0 0.0
    %1280 = vmatprep.subr.mxu0 0.0
    %1281 = vmatpush1.msra.mxu0 0.0
    %1282 = vmatprep.subr.mxu0 0.0
    %1283 = vmatpush1.msra.mxu0 0.0
    %1284 = vmatprep.subr.mxu0 0.0
    %1285 = vmatpush1.msra.mxu0 0.0
    %1286 = vmatprep.subr.mxu0 0.0
    %1287 = vmatpush1.msra.mxu0 0.0
    %1288 = vmatprep.subr.mxu0 0.0
    %1289 = vmatpush1.msra.mxu0 0.0
    %1290 = vmatprep.subr.mxu0 0.0
    %1291 = vmatpush1.msra.mxu0 0.0
    %1292 = vmatprep.subr.mxu0 0.0
    %1293 = vmatpush1.msra.mxu0 0.0
    %1294 = vmatprep.subr.mxu0 0.0
    %1295 = vmatpush1.msra.mxu0 0.0
    %1296 = vmatprep.subr.mxu0 0.0
    %1297 = vmatpush1.msra.mxu0 0.0
    %1298 = vmatprep.subr.mxu0 0.0
    %1299 = vmatpush1.msra.mxu0 0.0
    %1300 = vmatprep.subr.mxu0 0.0
    %1301 = vmatpush1.msra.mxu0 0.0
    %1302 = vmatprep.subr.mxu0 0.0
    %1303 = vmatpush1.msra.mxu0 0.0
    %1304 = vmatprep.subr.mxu0 0.0
    %1305 = vmatpush1.msra.mxu0 0.0
    %1306 = vmatprep.subr.mxu0 0.0
    %1307 = vmatpush1.msra.mxu0 0.0
    %1308 = vmatprep.subr.mxu0 0.0
    %1309 = vmatpush1.msra.mxu0 0.0
    %1310 = vmatprep.subr.mxu0 0.0
    %1311 = vmatpush1.msra.mxu0 0.0
    %1312 = vmatprep.subr.mxu0 0.0
    %1313 = vmatpush1.msra.mxu0 0.0
    %1314 = vmatprep.subr.mxu0 0.0
    %1315 = vmatpush1.msra.mxu0 0.0
    %1316 = vmatprep.subr.mxu0 0.0
    %1317 = vmatpush1.msra.mxu0 0.0
    %1318 = vmatprep.subr.mxu0 0.0
    %1319 = vmatpush1.msra.mxu0 0.0
    %1320 = vmatprep.subr.mxu0 0.0
    %1321 = vmatpush1.msra.mxu0 0.0
    %1322 = vmatprep.subr.mxu0 0.0
    %1323 = vmatpush1.msra.mxu0 0.0
    %1324 = vmatprep.subr.mxu0 0.0
    %1325 = vmatpush1.msra.mxu0 0.0
    %1326 = vmatprep.subr.mxu0 0.0
    %1327 = vmatpush1.msra.mxu0 0.0
    %1328 = vmatprep.mubr.f32.mxu0 0.0
    %1329 = vmatmul.mubr.f32.gmra.mrb[0].mxu0 %v1253
    %v1330 = vpop.f32.mrb[0].mxu0
    %v1331 = vadd.f32 0.0, %v1330
    %v1332 = vpop.f32.mrb[0].mxu0
    %1333 = vmatprep.mubr.f32.mxu0 0.0
    %1334 = vmatmul.mubr.f32.gmra.mrb[0].mxu0 %v1256
    %v1335 = vpop.f32.mrb[0].mxu0
    %v1336 = vadd.f32 0.0, %v1335
    %v1337 = vpop.f32.mrb[0].mxu0
    %1338 = vmatprep.mubr.f32.mxu0 0.0
    %1339 = vmatmul.mubr.f32.gmra.mrb[0].mxu0 %v1259
    %v1340 = vpop.f32.mrb[0].mxu0
    %v1341 = vadd.f32 0.0, %v1340
    %v1342 = vpop.f32.mrb[0].mxu0
    %1343 = vmatprep.mubr.f32.mxu0 0.0
    %1344 = vmatmul.mubr.f32.gmra.mrb[0].mxu0 %v1262
    %v1345 = vpop.f32.mrb[0].mxu0
    %v1346 = vadd.f32 0.0, %v1345
    %v1347 = vpop.f32.mrb[0].mxu0
    %1348 = vdwg.mxu0
    %1353 = vrot.lane.b32.xlu0 %v783, 8
    %v1354 = vpop.permute.xlu0 %1353
    %1355 = vrot.lane.b32.xlu0 %v788, 8
    %v1356 = vpop.permute.xlu0 %1355
    %1357 = vrot.lane.b32.xlu0 %v793, 8
    %v1358 = vpop.permute.xlu0 %1357
    %1359 = vrot.lane.b32.xlu0 %v798, 8
    %v1360 = vpop.permute.xlu0 %1359
    %1369 = vrot.lane.b32.xlu0 %v1057, 16
    %v1370 = vpop.permute.xlu0 %1369
    %1371 = vrot.lane.b32.xlu0 %v1062, 16
    %v1372 = vpop.permute.xlu0 %1371
    %1373 = vrot.lane.b32.xlu0 %v1067, 16
    %v1374 = vpop.permute.xlu0 %1373
    %1375 = vrot.lane.b32.xlu0 %v1072, 16
    %v1376 = vpop.permute.xlu0 %1375
    %1385 = vrot.lane.b32.xlu0 %v1331, 24
    %v1386 = vpop.permute.xlu0 %1385
    %1387 = vrot.lane.b32.xlu0 %v1336, 24
    %v1388 = vpop.permute.xlu0 %1387
    %1389 = vrot.lane.b32.xlu0 %v1341, 24
    %v1390 = vpop.permute.xlu0 %1389
    %1391 = vrot.lane.b32.xlu0 %v1346, 24
    %v1392 = vpop.permute.xlu0 %1391
    %v1397 = vsel %vm268, %v509, %v1354
    %v1398 = vsel %vm268, %v514, %v1356
    %v1399 = vsel %vm268, %v519, %v1358
    %v1400 = vsel %vm268, %v524, %v1360
    %vm1401 = vcmask 130048
    %v1402 = vsel %vm1401, %v1397, %v1370
    %v1403 = vsel %vm1401, %v1398, %v1372
    %v1404 = vsel %vm1401, %v1399, %v1374
    %v1405 = vsel %vm1401, %v1400, %v1376
    %vm1406 = vcmask 195584
    %v1407 = vsel %vm1406, %v1402, %v1386
    %v1408 = vsel %vm1406, %v1403, %v1388
    %v1409 = vsel %vm1406, %v1404, %v1390
    %v1410 = vsel %vm1406, %v1405, %v1392
    %v1411 = vlaneseq
    %v1412 = vshrl.u32 %v1411, 7
    %v1413 = vsub.s32 1, %v1412
    %v1414 = vrot.slane %v153, %v1413
    %v1416 = vsel %vm158, %v1407, 0
    %v1419 = vsel %vm158, %v1408, 0
    %v1422 = vsel %vm158, %v1409, 0
    %v1425 = vsel %vm158, %v1410, 0
    %1427 = vmatprep.subr.mxu0 0.0
    %1428 = vmatpush1.msra.mxu0 %v137
    %1429 = vmatprep.subr.mxu0 0.0
    %1430 = vmatpush1.msra.mxu0 %v138
    %1431 = vmatprep.subr.mxu0 0.0
    %1432 = vmatpush1.msra.mxu0 %v139
    %1433 = vmatprep.subr.mxu0 0.0
    %1434 = vmatpush1.msra.mxu0 %v140
    %1435 = vmatprep.subr.mxu0 0.0
    %1436 = vmatpush1.msra.mxu0 0.0
    %1437 = vmatprep.subr.mxu0 0.0
    %1438 = vmatpush1.msra.mxu0 0.0
    %1439 = vmatprep.subr.mxu0 0.0
    %1440 = vmatpush1.msra.mxu0 0.0
    %1441 = vmatprep.subr.mxu0 0.0
    %1442 = vmatpush1.msra.mxu0 0.0
    %1443 = vmatprep.subr.mxu0 0.0
    %1444 = vmatpush1.msra.mxu0 0.0
    %1445 = vmatprep.subr.mxu0 0.0
    %1446 = vmatpush1.msra.mxu0 0.0
    %1447 = vmatprep.subr.mxu0 0.0
    %1448 = vmatpush1.msra.mxu0 0.0
    %1449 = vmatprep.subr.mxu0 0.0
    %1450 = vmatpush1.msra.mxu0 0.0
    %1451 = vmatprep.subr.mxu0 0.0
    %1452 = vmatpush1.msra.mxu0 0.0
    %1453 = vmatprep.subr.mxu0 0.0
    %1454 = vmatpush1.msra.mxu0 0.0
    %1455 = vmatprep.subr.mxu0 0.0
    %1456 = vmatpush1.msra.mxu0 0.0
    %1457 = vmatprep.subr.mxu0 0.0
    %1458 = vmatpush1.msra.mxu0 0.0
    %1459 = vmatprep.subr.mxu0 0.0
    %1460 = vmatpush1.msra.mxu0 0.0
    %1461 = vmatprep.subr.mxu0 0.0
    %1462 = vmatpush1.msra.mxu0 0.0
    %1463 = vmatprep.subr.mxu0 0.0
    %1464 = vmatpush1.msra.mxu0 0.0
    %1465 = vmatprep.subr.mxu0 0.0
    %1466 = vmatpush1.msra.mxu0 0.0
    %1467 = vmatprep.subr.mxu0 0.0
    %1468 = vmatpush1.msra.mxu0 0.0
    %1469 = vmatprep.subr.mxu0 0.0
    %1470 = vmatpush1.msra.mxu0 0.0
    %1471 = vmatprep.subr.mxu0 0.0
    %1472 = vmatpush1.msra.mxu0 0.0
    %1473 = vmatprep.subr.mxu0 0.0
    %1474 = vmatpush1.msra.mxu0 0.0
    %1475 = vmatprep.subr.mxu0 0.0
    %1476 = vmatpush1.msra.mxu0 0.0
    %1477 = vmatprep.subr.mxu0 0.0
    %1478 = vmatpush1.msra.mxu0 0.0
    %1479 = vmatprep.subr.mxu0 0.0
    %1480 = vmatpush1.msra.mxu0 0.0
    %1481 = vmatprep.subr.mxu0 0.0
    %1482 = vmatpush1.msra.mxu0 0.0
    %1483 = vmatprep.subr.mxu0 0.0
    %1484 = vmatpush1.msra.mxu0 0.0
    %1485 = vmatprep.subr.mxu0 0.0
    %1486 = vmatpush1.msra.mxu0 0.0
    %1487 = vmatprep.subr.mxu0 0.0
    %1488 = vmatpush1.msra.mxu0 0.0
    %1489 = vmatprep.subr.mxu0 0.0
    %1490 = vmatpush1.msra.mxu0 0.0
    %1491 = vmatprep.mubr.f32.mxu0 0.0
    %1492 = vmatmul.mubr.f32.gmra.mrb[0].mxu0 %v1416
    %v1493 = vpop.f32.mrb[0].mxu0
    %v1494 = vadd.f32 %v1414, %v1493
    %v1495 = vpop.f32.mrb[0].mxu0
    %1496 = vmatprep.mubr.f32.mxu0 0.0
    %1497 = vmatmul.mubr.f32.gmra.mrb[0].mxu0 %v1419
    %v1498 = vpop.f32.mrb[0].mxu0
    %v1499 = vadd.f32 %v1414, %v1498
    %v1500 = vpop.f32.mrb[0].mxu0
    %1501 = vmatprep.mubr.f32.mxu0 0.0
    %1502 = vmatmul.mubr.f32.gmra.mrb[0].mxu0 %v1422
    %v1503 = vpop.f32.mrb[0].mxu0
    %v1504 = vadd.f32 %v1414, %v1503
    %v1505 = vpop.f32.mrb[0].mxu0
    %1506 = vmatprep.mubr.f32.mxu0 0.0
    %1507 = vmatmul.mubr.f32.gmra.mrb[0].mxu0 %v1425
    %v1508 = vpop.f32.mrb[0].mxu0
    %v1509 = vadd.f32 %v1414, %v1508
    %v1510 = vpop.f32.mrb[0].mxu0
    %1511 = vdwg.mxu0
    %v1512 = vadd.f32 %v58, %v1494
    %v1513 = vadd.f32 %v59, %v1499
    %v1514 = vadd.f32 %v60, %v1504
    %v1515 = vadd.f32 %v61, %v1509
    %v1516 = vsel %vm158, %v1512, 0.0
    %1517 = vadd.xlane.f32.xlu0 %v1516
    %v1518 = vpop.xlane.xlu0 %1517
    %v1519 = vsel %vm158, %v1513, 0.0
    %1520 = vadd.xlane.f32.xlu0 %v1519
    %v1521 = vpop.xlane.xlu0 %1520
    %v1522 = vsel %vm158, %v1514, 0.0
    %1523 = vadd.xlane.f32.xlu0 %v1522
    %v1524 = vpop.xlane.xlu0 %1523
    %v1525 = vsel %vm158, %v1515, 0.0
    %1526 = vadd.xlane.f32.xlu0 %v1525
    %v1527 = vpop.xlane.xlu0 %1526
    %v1528 = vrcp.pop 32.0
    %v1529 = vmul.f32 %v1518, %v1528
    %v1530 = vmul.f32 %v1521, %v1528
    %v1531 = vmul.f32 %v1524, %v1528
    %v1532 = vmul.f32 %v1527, %v1528
    %v1533 = vsub.f32 %v1512, %v1529
    %v1534 = vsub.f32 %v1513, %v1530
    %v1535 = vsub.f32 %v1514, %v1531
    %v1536 = vsub.f32 %v1515, %v1532
    %v1537 = vmul.f32 %v1533, %v1533
    %v1538 = vmul.f32 %v1534, %v1534
    %v1539 = vmul.f32 %v1535, %v1535
    %v1540 = vmul.f32 %v1536, %v1536
    %v1541 = vsel %vm158, %v1537, 0.0
    %1542 = vadd.xlane.f32.xlu0 %v1541
    %v1543 = vpop.xlane.xlu0 %1542
    %v1544 = vsel %vm158, %v1538, 0.0
    %1545 = vadd.xlane.f32.xlu0 %v1544
    %v1546 = vpop.xlane.xlu0 %1545
    %v1547 = vsel %vm158, %v1539, 0.0
    %1548 = vadd.xlane.f32.xlu0 %v1547
    %v1549 = vpop.xlane.xlu0 %1548
    %v1550 = vsel %vm158, %v1540, 0.0
    %1551 = vadd.xlane.f32.xlu0 %v1550
    %v1552 = vpop.xlane.xlu0 %1551
    %v1553 = vmul.f32 %v1543, %v1528
    %v1554 = vmul.f32 %v1546, %v1528
    %v1555 = vmul.f32 %v1549, %v1528
    %v1556 = vmul.f32 %v1552, %v1528
    %v1557 = vadd.f32 %v1553, 1e-05
    %v1558 = vadd.f32 %v1554, 1e-05
    %v1559 = vadd.f32 %v1555, 1e-05
    %v1560 = vadd.f32 %v1556, 1e-05
    %v1561 = vrsqrt.pop %v1557
    %v1562 = vrsqrt.pop %v1558
    %v1563 = vrsqrt.pop %v1559
    %v1564 = vrsqrt.pop %v1560
    %v1565 = vmul.f32 %v1533, %v1561
    %v1566 = vmul.f32 %v1534, %v1562
    %v1567 = vmul.f32 %v1535, %v1563
    %v1568 = vmul.f32 %v1536, %v1564
    %v1569 = vlaneseq
    %v1570 = vshrl.u32 %v1569, 7
    %v1571 = vsub.s32 4, %v1570
    %v1572 = vrot.slane %v153, %v1571
    %v1573 = vmul.f32 %v1565, %v1572
    %v1574 = vmul.f32 %v1566, %v1572
    %v1575 = vmul.f32 %v1567, %v1572
    %v1576 = vmul.f32 %v1568, %v1572
    %v1577 = vlaneseq
    %v1578 = vshrl.u32 %v1577, 7
    %v1579 = vsub.s32 5, %v1578
    %v1580 = vrot.slane %v153, %v1579
    %v1581 = vadd.f32 %v1573, %v1580
    %v1582 = vadd.f32 %v1574, %v1580
    %v1583 = vadd.f32 %v1575, %v1580
    %v1584 = vadd.f32 %v1576, %v1580
    %v1585 = vlaneseq
    %v1586 = vshrl.u32 %v1585, 7
    %v1587 = vsub.s32 2, %v1586
    %v1588 = vrot.slane %v153, %v1587
    %v1590 = vsel %vm158, %v1581, 0
    %v1593 = vsel %vm158, %v1582, 0
    %v1596 = vsel %vm158, %v1583, 0
    %v1599 = vsel %vm158, %v1584, 0
    %1601 = vmatprep.subr.mxu0 0.0
    %1602 = vmatpush1.msra.mxu0 %v141
    %1603 = vmatprep.subr.mxu0 0.0
    %1604 = vmatpush1.msra.mxu0 %v142
    %1605 = vmatprep.subr.mxu0 0.0
    %1606 = vmatpush1.msra.mxu0 %v143
    %1607 = vmatprep.subr.mxu0 0.0
    %1608 = vmatpush1.msra.mxu0 %v144
    %1609 = vmatprep.subr.mxu0 0.0
    %1610 = vmatpush1.msra.mxu0 0.0
    %1611 = vmatprep.subr.mxu0 0.0
    %1612 = vmatpush1.msra.mxu0 0.0
    %1613 = vmatprep.subr.mxu0 0.0
    %1614 = vmatpush1.msra.mxu0 0.0
    %1615 = vmatprep.subr.mxu0 0.0
    %1616 = vmatpush1.msra.mxu0 0.0
    %1617 = vmatprep.subr.mxu0 0.0
    %1618 = vmatpush1.msra.mxu0 0.0
    %1619 = vmatprep.subr.mxu0 0.0
    %1620 = vmatpush1.msra.mxu0 0.0
    %1621 = vmatprep.subr.mxu0 0.0
    %1622 = vmatpush1.msra.mxu0 0.0
    %1623 = vmatprep.subr.mxu0 0.0
    %1624 = vmatpush1.msra.mxu0 0.0
    %1625 = vmatprep.subr.mxu0 0.0
    %1626 = vmatpush1.msra.mxu0 0.0
    %1627 = vmatprep.subr.mxu0 0.0
    %1628 = vmatpush1.msra.mxu0 0.0
    %1629 = vmatprep.subr.mxu0 0.0
    %1630 = vmatpush1.msra.mxu0 0.0
    %1631 = vmatprep.subr.mxu0 0.0
    %1632 = vmatpush1.msra.mxu0 0.0
    %1633 = vmatprep.subr.mxu0 0.0
    %1634 = vmatpush1.msra.mxu0 0.0
    %1635 = vmatprep.subr.mxu0 0.0
    %1636 = vmatpush1.msra.mxu0 0.0
    %1637 = vmatprep.subr.mxu0 0.0
    %1638 = vmatpush1.msra.mxu0 0.0
    %1639 = vmatprep.subr.mxu0 0.0
    %1640 = vmatpush1.msra.mxu0 0.0
    %1641 = vmatprep.subr.mxu0 0.0
    %1642 = vmatpush1.msra.mxu0 0.0
    %1643 = vmatprep.subr.mxu0 0.0
    %1644 = vmatpush1.msra.mxu0 0.0
    %1645 = vmatprep.subr.mxu0 0.0
    %1646 = vmatpush1.msra.mxu0 0.0
    %1647 = vmatprep.subr.mxu0 0.0
    %1648 = vmatpush1.msra.mxu0 0.0
    %1649 = vmatprep.subr.mxu0 0.0
    %1650 = vmatpush1.msra.mxu0 0.0
    %1651 = vmatprep.subr.mxu0 0.0
    %1652 = vmatpush1.msra.mxu0 0.0
    %1653 = vmatprep.subr.mxu0 0.0
    %1654 = vmatpush1.msra.mxu0 0.0
    %1655 = vmatprep.subr.mxu0 0.0
    %1656 = vmatpush1.msra.mxu0 0.0
    %1657 = vmatprep.subr.mxu0 0.0
    %1658 = vmatpush1.msra.mxu0 0.0
    %1659 = vmatprep.subr.mxu0 0.0
    %1660 = vmatpush1.msra.mxu0 0.0
    %1661 = vmatprep.subr.mxu0 0.0
    %1662 = vmatpush1.msra.mxu0 0.0
    %1663 = vmatprep.subr.mxu0 0.0
    %1664 = vmatpush1.msra.mxu0 0.0
    %1665 = vmatprep.mubr.f32.mxu0 0.0
    %1666 = vmatmul.mubr.f32.gmra.mrb[0].mxu0 %v1590
    %v1667 = vpop.f32.mrb[0].mxu0
    %v1668 = vadd.f32 %v1588, %v1667
    %v1669 = vpop.f32.mrb[0].mxu0
    %1670 = vmatprep.mubr.f32.mxu0 0.0
    %1671 = vmatmul.mubr.f32.gmra.mrb[0].mxu0 %v1593
    %v1672 = vpop.f32.mrb[0].mxu0
    %v1673 = vadd.f32 %v1588, %v1672
    %v1674 = vpop.f32.mrb[0].mxu0
    %1675 = vmatprep.mubr.f32.mxu0 0.0
    %1676 = vmatmul.mubr.f32.gmra.mrb[0].mxu0 %v1596
    %v1677 = vpop.f32.mrb[0].mxu0
    %v1678 = vadd.f32 %v1588, %v1677
    %v1679 = vpop.f32.mrb[0].mxu0
    %1680 = vmatprep.mubr.f32.mxu0 0.0
    %1681 = vmatmul.mubr.f32.gmra.mrb[0].mxu0 %v1599
    %v1682 = vpop.f32.mrb[0].mxu0
    %v1683 = vadd.f32 %v1588, %v1682
    %v1684 = vpop.f32.mrb[0].mxu0
    %1685 = vdwg.mxu0
    %v1686 = vmax.f32 %v1668, 0.0
    %v1687 = vmax.f32 %v1673, 0.0
    %v1688 = vmax.f32 %v1678, 0.0
    %v1689 = vmax.f32 %v1683, 0.0
    %v1690 = vlaneseq
    %v1691 = vshrl.u32 %v1690, 7
    %v1692 = vsub.s32 3, %v1691
    %v1693 = vrot.slane %v153, %v1692
    %vm1694 = vcmask 523264
    %v1696 = vsel %vm1694, %v1686, 0
    %v1699 = vsel %vm1694, %v1687, 0
    %v1702 = vsel %vm1694, %v1688, 0
    %v1705 = vsel %vm1694, %v1689, 0
    %1707 = vmatprep.subr.mxu0 0.0
    %1708 = vmatpush1.msra.mxu0 %v145
    %1709 = vmatprep.subr.mxu0 0.0
    %1710 = vmatpush1.msra.mxu0 %v146
    %1711 = vmatprep.subr.mxu0 0.0
    %1712 = vmatpush1.msra.mxu0 %v147
    %1713 = vmatprep.subr.mxu0 0.0
    %1714 = vmatpush1.msra.mxu0 %v148
    %1715 = vmatprep.subr.mxu0 0.0
    %1716 = vmatpush1.msra.mxu0 %v149
    %1717 = vmatprep.subr.mxu0 0.0
    %1718 = vmatpush1.msra.mxu0 %v150
    %1719 = vmatprep.subr.mxu0 0.0
    %1720 = vmatpush1.msra.mxu0 %v151
    %1721 = vmatprep.subr.mxu0 0.0
    %1722 = vmatpush1.msra.mxu0 %v152
    %1723 = vmatprep.subr.mxu0 0.0
    %1724 = vmatpush1.msra.mxu0 0.0
    %1725 = vmatprep.subr.mxu0 0.0
    %1726 = vmatpush1.msra.mxu0 0.0
    %1727 = vmatprep.subr.mxu0 0.0
    %1728 = vmatpush1.msra.mxu0 0.0
    %1729 = vmatprep.subr.mxu0 0.0
    %1730 = vmatpush1.msra.mxu0 0.0
    %1731 = vmatprep.subr.mxu0 0.0
    %1732 = vmatpush1.msra.mxu0 0.0
    %1733 = vmatprep.subr.mxu0 0.0
    %1734 = vmatpush1.msra.mxu0 0.0
    %1735 = vmatprep.subr.mxu0 0.0
    %1736 = vmatpush1.msra.mxu0 0.0
    %1737 = vmatprep.subr.mxu0 0.0
    %1738 = vmatpush1.msra.mxu0 0.0
    %1739 = vmatprep.subr.mxu0 0.0
    %1740 = vmatpush1.msra.mxu0 0.0
    %1741 = vmatprep.subr.mxu0 0.0
    %1742 = vmatpush1.msra.mxu0 0.0
    %1743 = vmatprep.subr.mxu0 0.0
    %1744 = vmatpush1.msra.mxu0 0.0
    %1745 = vmatprep.subr.mxu0 0.0
    %1746 = vmatpush1.msra.mxu0 0.0
    %1747 = vmatprep.subr.mxu0 0.0
    %1748 = vmatpush1.msra.mxu0 0.0
    %1749 = vmatprep.subr.mxu0 0.0
    %1750 = vmatpush1.msra.mxu0 0.0
    %1751 = vmatprep.subr.mxu0 0.0
    %1752 = vmatpush1.msra.mxu0 0.0
    %1753 = vmatprep.subr.mxu0 0.0
    %1754 = vmatpush1.msra.mxu0 0.0
    %1755 = vmatprep.subr.mxu0 0.0
    %1756 = vmatpush1.msra.mxu0 0.0
    %1757 = vmatprep.subr.mxu0 0.0
    %1758 = vmatpush1.msra.mxu0 0.0
    %1759 = vmatprep.subr.mxu0 0.0
    %1760 = vmatpush1.msra.mxu0 0.0
    %1761 = vmatprep.subr.mxu0 0.0
    %1762 = vmatpush1.msra.mxu0 0.0
    %1763 = vmatprep.subr.mxu0 0.0
    %1764 = vmatpush1.msra.mxu0 0.0
    %1765 = vmatprep.subr.mxu0 0.0
    %1766 = vmatpush1.msra.mxu0 0.0
    %1767 = vmatprep.subr.mxu0 0.0
    %1768 = vmatpush1.msra.mxu0 0.0
    %1769 = vmatprep.subr.mxu0 0.0
    %1770 = vmatpush1.msra.mxu0 0.0
    %1771 = vmatprep.mubr.f32.mxu0 0.0
    %1772 = vmatmul.mubr.f32.gmra.mrb[0].mxu0 %v1696
    %v1773 = vpop.f32.mrb[0].mxu0
    %v1774 = vadd.f32 %v1693, %v1773
    %v1775 = vpop.f32.mrb[0].mxu0
    %1776 = vmatprep.mubr.f32.mxu0 0.0
    %1777 = vmatmul.mubr.f32.gmra.mrb[0].mxu0 %v1699
    %v1778 = vpop.f32.mrb[0].mxu0
    %v1779 = vadd.f32 %v1693, %v1778
    %v1780 = vpop.f32.mrb[0].mxu0
    %1781 = vmatprep.mubr.f32.mxu0 0.0
    %1782 = vmatmul.mubr.f32.gmra.mrb[0].mxu0 %v1702
    %v1783 = vpop.f32.mrb[0].mxu0
    %v1784 = vadd.f32 %v1693, %v1783
    %v1785 = vpop.f32.mrb[0].mxu0
    %1786 = vmatprep.mubr.f32.mxu0 0.0
    %1787 = vmatmul.mubr.f32.gmra.mrb[0].mxu0 %v1705
    %v1788 = vpop.f32.mrb[0].mxu0
    %v1789 = vadd.f32 %v1693, %v1788
    %v1790 = vpop.f32.mrb[0].mxu0
    %1791 = vdwg.mxu0
    %v1792 = vadd.f32 %v1581, %v1774
    %v1793 = vadd.f32 %v1582, %v1779
    %v1794 = vadd.f32 %v1583, %v1784
    %v1795 = vadd.f32 %v1584, %v1789
    %v1796 = vsel %vm158, %v1792, 0.0
    %1797 = vadd.xlane.f32.xlu0 %v1796
    %v1798 = vpop.xlane.xlu0 %1797
    %v1799 = vsel %vm158, %v1793, 0.0
    %1800 = vadd.xlane.f32.xlu0 %v1799
    %v1801 = vpop.xlane.xlu0 %1800
    %v1802 = vsel %vm158, %v1794, 0.0
    %1803 = vadd.xlane.f32.xlu0 %v1802
    %v1804 = vpop.xlane.xlu0 %1803
    %v1805 = vsel %vm158, %v1795, 0.0
    %1806 = vadd.xlane.f32.xlu0 %v1805
    %v1807 = vpop.xlane.xlu0 %1806
    %v1808 = vmul.f32 %v1798, %v1528
    %v1809 = vmul.f32 %v1801, %v1528
    %v1810 = vmul.f32 %v1804, %v1528
    %v1811 = vmul.f32 %v1807, %v1528
    %v1812 = vsub.f32 %v1792, %v1808
    %v1813 = vsub.f32 %v1793, %v1809
    %v1814 = vsub.f32 %v1794, %v1810
    %v1815 = vsub.f32 %v1795, %v1811
    %v1816 = vmul.f32 %v1812, %v1812
    %v1817 = vmul.f32 %v1813, %v1813
    %v1818 = vmul.f32 %v1814, %v1814
    %v1819 = vmul.f32 %v1815, %v1815
    %v1820 = vsel %vm158, %v1816, 0.0
    %1821 = vadd.xlane.f32.xlu0 %v1820
    %v1822 = vpop.xlane.xlu0 %1821
    %v1823 = vsel %vm158, %v1817, 0.0
    %1824 = vadd.xlane.f32.xlu0 %v1823
    %v1825 = vpop.xlane.xlu0 %1824
    %v1826 = vsel %vm158, %v1818, 0.0
    %1827 = vadd.xlane.f32.xlu0 %v1826
    %v1828 = vpop.xlane.xlu0 %1827
    %v1829 = vsel %vm158, %v1819, 0.0
    %1830 = vadd.xlane.f32.xlu0 %v1829
    %v1831 = vpop.xlane.xlu0 %1830
    %v1832 = vmul.f32 %v1822, %v1528
    %v1833 = vmul.f32 %v1825, %v1528
    %v1834 = vmul.f32 %v1828, %v1528
    %v1835 = vmul.f32 %v1831, %v1528
    %v1836 = vadd.f32 %v1832, 1e-05
    %v1837 = vadd.f32 %v1833, 1e-05
    %v1838 = vadd.f32 %v1834, 1e-05
    %v1839 = vadd.f32 %v1835, 1e-05
    %v1840 = vrsqrt.pop %v1836
    %v1841 = vrsqrt.pop %v1837
    %v1842 = vrsqrt.pop %v1838
    %v1843 = vrsqrt.pop %v1839
    %v1844 = vmul.f32 %v1812, %v1840
    %v1845 = vmul.f32 %v1813, %v1841
    %v1846 = vmul.f32 %v1814, %v1842
    %v1847 = vmul.f32 %v1815, %v1843
    %v1848 = vlaneseq
    %v1849 = vshrl.u32 %v1848, 7
    %v1850 = vsub.s32 6, %v1849
    %v1851 = vrot.slane %v153, %v1850
    %v1852 = vmul.f32 %v1844, %v1851
    %v1853 = vmul.f32 %v1845, %v1851
    %v1854 = vmul.f32 %v1846, %v1851
    %v1855 = vmul.f32 %v1847, %v1851
    %v1856 = vlaneseq
    %v1857 = vshrl.u32 %v1856, 7
    %v1858 = vsub.s32 7, %v1857
    %v1859 = vrot.slane %v153, %v1858
    %v1860 = vadd.f32 %v1852, %v1859
    %v1861 = vadd.f32 %v1853, %v1859
    %v1862 = vadd.f32 %v1854, %v1859
    %v1863 = vadd.f32 %v1855, %v1859
    %s1864 = scalar_lea.vmem %s1, 32
    %v1865 = vld [vmem:[%s1864] sm:$0xff]
    %v1866 = vld [vmem:[%s1864 + $0x8] sm:$0xff]
    %v1867 = vld [vmem:[%s1864 + $0x10] sm:$0xff]
    %v1868 = vld [vmem:[%s1864 + $0x18] sm:$0xff]
    %s1869 = scalar_lea.vmem %s2, 32
    %v1870 = vld [vmem:[%s1869] sm:$0xff]
    %v1871 = vld [vmem:[%s1869 + $0x8] sm:$0xff]
    %v1872 = vld [vmem:[%s1869 + $0x10] sm:$0xff]
    %v1873 = vld [vmem:[%s1869 + $0x18] sm:$0xff]
    %s1874 = scalar_lea.vmem %s3, 32
    %v1875 = vld [vmem:[%s1874] sm:$0xff]
    %v1876 = vld [vmem:[%s1874 + $0x8] sm:$0xff]
    %v1877 = vld [vmem:[%s1874 + $0x10] sm:$0xff]
    %v1878 = vld [vmem:[%s1874 + $0x18] sm:$0xff]
    %s1879 = scalar_lea.vmem %s4, 64
    %v1880 = vld [vmem:[%s1879] sm:$0xff]
    %v1881 = vld [vmem:[%s1879 + $0x8] sm:$0xff]
    %v1882 = vld [vmem:[%s1879 + $0x10] sm:$0xff]
    %v1883 = vld [vmem:[%s1879 + $0x18] sm:$0xff]
    %v1884 = vld [vmem:[%s1879 + $0x20] sm:$0xff]
    %v1885 = vld [vmem:[%s1879 + $0x28] sm:$0xff]
    %v1886 = vld [vmem:[%s1879 + $0x30] sm:$0xff]
    %v1887 = vld [vmem:[%s1879 + $0x38] sm:$0xff]
    %s1888 = scalar_lea.vmem %s5, 8
    %v1889 = vld [vmem:[%s1888] sm:$0xff]
    %v1890 = vlaneseq
    %v1891 = vshrl.u32 %v1890, 7
    %v1892 = vsub.s32 0, %v1891
    %v1893 = vrot.slane %v1889, %v1892
    %v1895 = vsel %vm158, %v1860, 0
    %v1898 = vsel %vm158, %v1861, 0
    %v1901 = vsel %vm158, %v1862, 0
    %v1904 = vsel %vm158, %v1863, 0
    %1906 = vmatprep.subr.mxu0 0.0
    %1907 = vmatpush1.msra.mxu0 %v1865
    %1908 = vmatprep.subr.mxu0 0.0
    %1909 = vmatpush1.msra.mxu0 %v1866
    %1910 = vmatprep.subr.mxu0 0.0
    %1911 = vmatpush1.msra.mxu0 %v1867
    %1912 = vmatprep.subr.mxu0 0.0
    %1913 = vmatpush1.msra.mxu0 %v1868
    %1914 = vmatprep.subr.mxu0 0.0
    %1915 = vmatpush1.msra.mxu0 0.0
    %1916 = vmatprep.subr.mxu0 0.0
    %1917 = vmatpush1.msra.mxu0 0.0
    %1918 = vmatprep.subr.mxu0 0.0
    %1919 = vmatpush1.msra.mxu0 0.0
    %1920 = vmatprep.subr.mxu0 0.0
    %1921 = vmatpush1.msra.mxu0 0.0
    %1922 = vmatprep.subr.mxu0 0.0
    %1923 = vmatpush1.msra.mxu0 0.0
    %1924 = vmatprep.subr.mxu0 0.0
    %1925 = vmatpush1.msra.mxu0 0.0
    %1926 = vmatprep.subr.mxu0 0.0
    %1927 = vmatpush1.msra.mxu0 0.0
    %1928 = vmatprep.subr.mxu0 0.0
    %1929 = vmatpush1.msra.mxu0 0.0
    %1930 = vmatprep.subr.mxu0 0.0
    %1931 = vmatpush1.msra.mxu0 0.0
    %1932 = vmatprep.subr.mxu0 0.0
    %1933 = vmatpush1.msra.mxu0 0.0
    %1934 = vmatprep.subr.mxu0 0.0
    %1935 = vmatpush1.msra.mxu0 0.0
    %1936 = vmatprep.subr.mxu0 0.0
    %1937 = vmatpush1.msra.mxu0 0.0
    %1938 = vmatprep.subr.mxu0 0.0
    %1939 = vmatpush1.msra.mxu0 0.0
    %1940 = vmatprep.subr.mxu0 0.0
    %1941 = vmatpush1.msra.mxu0 0.0
    %1942 = vmatprep.subr.mxu0 0.0
    %1943 = vmatpush1.msra.mxu0 0.0
    %1944 = vmatprep.subr.mxu0 0.0
    %1945 = vmatpush1.msra.mxu0 0.0
    %1946 = vmatprep.subr.mxu0 0.0
    %1947 = vmatpush1.msra.mxu0 0.0
    %1948 = vmatprep.subr.mxu0 0.0
    %1949 = vmatpush1.msra.mxu0 0.0
    %1950 = vmatprep.subr.mxu0 0.0
    %1951 = vmatpush1.msra.mxu0 0.0
    %1952 = vmatprep.subr.mxu0 0.0
    %1953 = vmatpush1.msra.mxu0 0.0
    %1954 = vmatprep.subr.mxu0 0.0
    %1955 = vmatpush1.msra.mxu0 0.0
    %1956 = vmatprep.subr.mxu0 0.0
    %1957 = vmatpush1.msra.mxu0 0.0
    %1958 = vmatprep.subr.mxu0 0.0
    %1959 = vmatpush1.msra.mxu0 0.0
    %1960 = vmatprep.subr.mxu0 0.0
    %1961 = vmatpush1.msra.mxu0 0.0
    %1962 = vmatprep.subr.mxu0 0.0
    %1963 = vmatpush1.msra.mxu0 0.0
    %1964 = vmatprep.subr.mxu0 0.0
    %1965 = vmatpush1.msra.mxu0 0.0
    %1966 = vmatprep.subr.mxu0 0.0
    %1967 = vmatpush1.msra.mxu0 0.0
    %1968 = vmatprep.subr.mxu0 0.0
    %1969 = vmatpush1.msra.mxu0 0.0
    %1970 = vmatprep.mubr.f32.mxu0 0.0
    %1971 = vmatmul.mubr.f32.gmra.mrb[0].mxu0 %v1895
    %v1972 = vpop.f32.mrb[0].mxu0
    %v1973 = vadd.f32 %v1893, %v1972
    %v1974 = vpop.f32.mrb[0].mxu0
    %1975 = vmatprep.mubr.f32.mxu0 0.0
    %1976 = vmatmul.mubr.f32.gmra.mrb[0].mxu0 %v1898
    %v1977 = vpop.f32.mrb[0].mxu0
    %v1978 = vadd.f32 %v1893, %v1977
    %v1979 = vpop.f32.mrb[0].mxu0
    %1980 = vmatprep.mubr.f32.mxu0 0.0
    %1981 = vmatmul.mubr.f32.gmra.mrb[0].mxu0 %v1901
    %v1982 = vpop.f32.mrb[0].mxu0
    %v1983 = vadd.f32 %v1893, %v1982
    %v1984 = vpop.f32.mrb[0].mxu0
    %1985 = vmatprep.mubr.f32.mxu0 0.0
    %1986 = vmatmul.mubr.f32.gmra.mrb[0].mxu0 %v1904
    %v1987 = vpop.f32.mrb[0].mxu0
    %v1988 = vadd.f32 %v1893, %v1987
    %v1989 = vpop.f32.mrb[0].mxu0
    %1990 = vdwg.mxu0
    %1995 = vrot.lane.b32.xlu0 %v1973, 96
    %v1996 = vpop.permute.xlu0 %1995
    %1997 = vrot.lane.b32.xlu0 %v1978, 96
    %v1998 = vpop.permute.xlu0 %1997
    %1999 = vrot.lane.b32.xlu0 %v1983, 96
    %v2000 = vpop.permute.xlu0 %1999
    %2001 = vrot.lane.b32.xlu0 %v1988, 96
    %v2002 = vpop.permute.xlu0 %2001
    %v2003 = vsel %vm268, %v1973, 0
    %v2005 = vsel %vm268, %v1978, 0
    %v2007 = vsel %vm268, %v1983, 0
    %v2009 = vsel %vm268, %v1988, 0
    %v2011 = vsel %vm268, %v1996, 0
    %v2013 = vsel %vm268, %v1998, 0
    %v2015 = vsel %vm268, %v2000, 0
    %v2017 = vsel %vm268, %v2002, 0
    %2019 = vmatprep.subr.mxu0 0.0
    %2020 = vmatpush1.xpose.msra.mxu0 %v2011
    %2021 = vmatprep.subr.mxu0 0.0
    %2022 = vmatpush1.xpose.msra.mxu0 %v2013
    %2023 = vmatprep.subr.mxu0 0.0
    %2024 = vmatpush1.xpose.msra.mxu0 %v2015
    %2025 = vmatprep.subr.mxu0 0.0
    %2026 = vmatpush1.xpose.msra.mxu0 %v2017
    %2027 = vmatprep.subr.mxu0 0.0
    %2028 = vmatpush1.xpose.msra.mxu0 0.0
    %2029 = vmatprep.subr.mxu0 0.0
    %2030 = vmatpush1.xpose.msra.mxu0 0.0
    %2031 = vmatprep.subr.mxu0 0.0
    %2032 = vmatpush1.xpose.msra.mxu0 0.0
    %2033 = vmatprep.subr.mxu0 0.0
    %2034 = vmatpush1.xpose.msra.mxu0 0.0
    %2035 = vmatprep.subr.mxu0 0.0
    %2036 = vmatpush1.xpose.msra.mxu0 0.0
    %2037 = vmatprep.subr.mxu0 0.0
    %2038 = vmatpush1.xpose.msra.mxu0 0.0
    %2039 = vmatprep.subr.mxu0 0.0
    %2040 = vmatpush1.xpose.msra.mxu0 0.0
    %2041 = vmatprep.subr.mxu0 0.0
    %2042 = vmatpush1.xpose.msra.mxu0 0.0
    %2043 = vmatprep.subr.mxu0 0.0
    %2044 = vmatpush1.xpose.msra.mxu0 0.0
    %2045 = vmatprep.subr.mxu0 0.0
    %2046 = vmatpush1.xpose.msra.mxu0 0.0
    %2047 = vmatprep.subr.mxu0 0.0
    %2048 = vmatpush1.xpose.msra.mxu0 0.0
    %2049 = vmatprep.subr.mxu0 0.0
    %2050 = vmatpush1.xpose.msra.mxu0 0.0
    %2051 = vmatprep.subr.mxu0 0.0
    %2052 = vmatpush1.xpose.msra.mxu0 0.0
    %2053 = vmatprep.subr.mxu0 0.0
    %2054 = vmatpush1.xpose.msra.mxu0 0.0
    %2055 = vmatprep.subr.mxu0 0.0
    %2056 = vmatpush1.xpose.msra.mxu0 0.0
    %2057 = vmatprep.subr.mxu0 0.0
    %2058 = vmatpush1.xpose.msra.mxu0 0.0
    %2059 = vmatprep.subr.mxu0 0.0
    %2060 = vmatpush1.xpose.msra.mxu0 0.0
    %2061 = vmatprep.subr.mxu0 0.0
    %2062 = vmatpush1.xpose.msra.mxu0 0.0
    %2063 = vmatprep.subr.mxu0 0.0
    %2064 = vmatpush1.xpose.msra.mxu0 0.0
    %2065 = vmatprep.subr.mxu0 0.0
    %2066 = vmatpush1.xpose.msra.mxu0 0.0
    %2067 = vmatprep.subr.mxu0 0.0
    %2068 = vmatpush1.xpose.msra.mxu0 0.0
    %2069 = vmatprep.subr.mxu0 0.0
    %2070 = vmatpush1.xpose.msra.mxu0 0.0
    %2071 = vmatprep.subr.mxu0 0.0
    %2072 = vmatpush1.xpose.msra.mxu0 0.0
    %2073 = vmatprep.subr.mxu0 0.0
    %2074 = vmatpush1.xpose.msra.mxu0 0.0
    %2075 = vmatprep.subr.mxu0 0.0
    %2076 = vmatpush1.xpose.msra.mxu0 0.0
    %2077 = vmatprep.subr.mxu0 0.0
    %2078 = vmatpush1.xpose.msra.mxu0 0.0
    %2079 = vmatprep.subr.mxu0 0.0
    %2080 = vmatpush1.xpose.msra.mxu0 0.0
    %2081 = vmatprep.subr.mxu0 0.0
    %2082 = vmatpush1.xpose.msra.mxu0 0.0
    %2083 = vmatprep.mubr.f32.mxu0 0.0
    %2084 = vmatmul.mubr.f32.gmra.mrb[0].mxu0 %v2003
    %v2085 = vpop.f32.mrb[0].mxu0
    %v2086 = vadd.f32 0.0, %v2085
    %v2087 = vpop.f32.mrb[0].mxu0
    %2088 = vmatprep.mubr.f32.mxu0 0.0
    %2089 = vmatmul.mubr.f32.gmra.mrb[0].mxu0 %v2005
    %v2090 = vpop.f32.mrb[0].mxu0
    %v2091 = vadd.f32 0.0, %v2090
    %v2092 = vpop.f32.mrb[0].mxu0
    %2093 = vmatprep.mubr.f32.mxu0 0.0
    %2094 = vmatmul.mubr.f32.gmra.mrb[0].mxu0 %v2007
    %v2095 = vpop.f32.mrb[0].mxu0
    %v2096 = vadd.f32 0.0, %v2095
    %v2097 = vpop.f32.mrb[0].mxu0
    %2098 = vmatprep.mubr.f32.mxu0 0.0
    %2099 = vmatmul.mubr.f32.gmra.mrb[0].mxu0 %v2009
    %v2100 = vpop.f32.mrb[0].mxu0
    %v2101 = vadd.f32 0.0, %v2100
    %v2102 = vpop.f32.mrb[0].mxu0
    %2103 = vdwg.mxu0
    %v2104 = vsel %vm129, %v2086, -1e+30
    %v2105 = vsel %vm130, %v2091, -1e+30
    %v2106 = vsel %vm131, %v2096, -1e+30
    %v2107 = vsel %vm132, %v2101, -1e+30
    %v2108 = vsel %vm158, %v2104, -inf
    %2109 = vmax.xlane.f32.xlu0 %v2108
    %v2110 = vpop.xlane.xlu0 %2109
    %v2111 = vsel %vm158, %v2105, -inf
    %2112 = vmax.xlane.f32.xlu0 %v2111
    %v2113 = vpop.xlane.xlu0 %2112
    %v2114 = vsel %vm158, %v2106, -inf
    %2115 = vmax.xlane.f32.xlu0 %v2114
    %v2116 = vpop.xlane.xlu0 %2115
    %v2117 = vsel %vm158, %v2107, -inf
    %2118 = vmax.xlane.f32.xlu0 %v2117
    %v2119 = vpop.xlane.xlu0 %2118
    %v2120 = vsub.f32 %v2104, %v2110
    %v2121 = vsub.f32 %v2105, %v2113
    %v2122 = vsub.f32 %v2106, %v2116
    %v2123 = vsub.f32 %v2107, %v2119
    %v2124 = vmul.f32 %v2120, 1.442695
    %v2125 = vpow.pop %v2124
    %v2126 = vmul.f32 %v2121, 1.442695
    %v2127 = vpow.pop %v2126
    %v2128 = vmul.f32 %v2122, 1.442695
    %v2129 = vpow.pop %v2128
    %v2130 = vmul.f32 %v2123, 1.442695
    %v2131 = vpow.pop %v2130
    %v2132 = vsel %vm158, %v2125, 0.0
    %2133 = vadd.xlane.f32.xlu0 %v2132
    %v2134 = vpop.xlane.xlu0 %2133
    %v2135 = vsel %vm158, %v2127, 0.0
    %2136 = vadd.xlane.f32.xlu0 %v2135
    %v2137 = vpop.xlane.xlu0 %2136
    %v2138 = vsel %vm158, %v2129, 0.0
    %2139 = vadd.xlane.f32.xlu0 %v2138
    %v2140 = vpop.xlane.xlu0 %2139
    %v2141 = vsel %vm158, %v2131, 0.0
    %2142 = vadd.xlane.f32.xlu0 %v2141
    %v2143 = vpop.xlane.xlu0 %2142
    %v2144 = vrcp.pop %v2134
    %v2145 = vrcp.pop %v2137
    %v2146 = vrcp.pop %v2140
    %v2147 = vrcp.pop %v2143
    %v2148 = vmul.f32 %v2125, %v2144
    %v2149 = vmul.f32 %v2127, %v2145
    %v2150 = vmul.f32 %v2129, %v2146
    %v2151 = vmul.f32 %v2131, %v2147
    %2152 = vrot.lane.b32.xlu0 %v1973, 64
    %v2153 = vpop.permute.xlu0 %2152
    %2154 = vrot.lane.b32.xlu0 %v1978, 64
    %v2155 = vpop.permute.xlu0 %2154
    %2156 = vrot.lane.b32.xlu0 %v1983, 64
    %v2157 = vpop.permute.xlu0 %2156
    %2158 = vrot.lane.b32.xlu0 %v1988, 64
    %v2159 = vpop.permute.xlu0 %2158
    %v2165 = vsel %vm158, %v2148, 0
    %v2168 = vsel %vm158, %v2149, 0
    %v2171 = vsel %vm158, %v2150, 0
    %v2174 = vsel %vm158, %v2151, 0
    %2176 = vmatprep.subr.mxu0 0.0
    %2177 = vmatpush1.msra.mxu0 %v2153
    %2178 = vmatprep.subr.mxu0 0.0
    %2179 = vmatpush1.msra.mxu0 %v2155
    %2180 = vmatprep.subr.mxu0 0.0
    %2181 = vmatpush1.msra.mxu0 %v2157
    %2182 = vmatprep.subr.mxu0 0.0
    %2183 = vmatpush1.msra.mxu0 %v2159
    %2184 = vmatprep.subr.mxu0 0.0
    %2185 = vmatpush1.msra.mxu0 0.0
    %2186 = vmatprep.subr.mxu0 0.0
    %2187 = vmatpush1.msra.mxu0 0.0
    %2188 = vmatprep.subr.mxu0 0.0
    %2189 = vmatpush1.msra.mxu0 0.0
    %2190 = vmatprep.subr.mxu0 0.0
    %2191 = vmatpush1.msra.mxu0 0.0
    %2192 = vmatprep.subr.mxu0 0.0
    %2193 = vmatpush1.msra.mxu0 0.0
    %2194 = vmatprep.subr.mxu0 0.0
    %2195 = vmatpush1.msra.mxu0 0.0
    %2196 = vmatprep.subr.mxu0 0.0
    %2197 = vmatpush1.msra.mxu0 0.0
    %2198 = vmatprep.subr.mxu0 0.0
    %2199 = vmatpush1.msra.mxu0 0.0
    %2200 = vmatprep.subr.mxu0 0.0
    %2201 = vmatpush1.msra.mxu0 0.0
    %2202 = vmatprep.subr.mxu0 0.0
    %2203 = vmatpush1.msra.mxu0 0.0
    %2204 = vmatprep.subr.mxu0 0.0
    %2205 = vmatpush1.msra.mxu0 0.0
    %2206 = vmatprep.subr.mxu0 0.0
    %2207 = vmatpush1.msra.mxu0 0.0
    %2208 = vmatprep.subr.mxu0 0.0
    %2209 = vmatpush1.msra.mxu0 0.0
    %2210 = vmatprep.subr.mxu0 0.0
    %2211 = vmatpush1.msra.mxu0 0.0
    %2212 = vmatprep.subr.mxu0 0.0
    %2213 = vmatpush1.msra.mxu0 0.0
    %2214 = vmatprep.subr.mxu0 0.0
    %2215 = vmatpush1.msra.mxu0 0.0
    %2216 = vmatprep.subr.mxu0 0.0
    %2217 = vmatpush1.msra.mxu0 0.0
    %2218 = vmatprep.subr.mxu0 0.0
    %2219 = vmatpush1.msra.mxu0 0.0
    %2220 = vmatprep.subr.mxu0 0.0
    %2221 = vmatpush1.msra.mxu0 0.0
    %2222 = vmatprep.subr.mxu0 0.0
    %2223 = vmatpush1.msra.mxu0 0.0
    %2224 = vmatprep.subr.mxu0 0.0
    %2225 = vmatpush1.msra.mxu0 0.0
    %2226 = vmatprep.subr.mxu0 0.0
    %2227 = vmatpush1.msra.mxu0 0.0
    %2228 = vmatprep.subr.mxu0 0.0
    %2229 = vmatpush1.msra.mxu0 0.0
    %2230 = vmatprep.subr.mxu0 0.0
    %2231 = vmatpush1.msra.mxu0 0.0
    %2232 = vmatprep.subr.mxu0 0.0
    %2233 = vmatpush1.msra.mxu0 0.0
    %2234 = vmatprep.subr.mxu0 0.0
    %2235 = vmatpush1.msra.mxu0 0.0
    %2236 = vmatprep.subr.mxu0 0.0
    %2237 = vmatpush1.msra.mxu0 0.0
    %2238 = vmatprep.subr.mxu0 0.0
    %2239 = vmatpush1.msra.mxu0 0.0
    %2240 = vmatprep.mubr.f32.mxu0 0.0
    %2241 = vmatmul.mubr.f32.gmra.mrb[0].mxu0 %v2165
    %v2242 = vpop.f32.mrb[0].mxu0
    %v2243 = vadd.f32 0.0, %v2242
    %v2244 = vpop.f32.mrb[0].mxu0
    %2245 = vmatprep.mubr.f32.mxu0 0.0
    %2246 = vmatmul.mubr.f32.gmra.mrb[0].mxu0 %v2168
    %v2247 = vpop.f32.mrb[0].mxu0
    %v2248 = vadd.f32 0.0, %v2247
    %v2249 = vpop.f32.mrb[0].mxu0
    %2250 = vmatprep.mubr.f32.mxu0 0.0
    %2251 = vmatmul.mubr.f32.gmra.mrb[0].mxu0 %v2171
    %v2252 = vpop.f32.mrb[0].mxu0
    %v2253 = vadd.f32 0.0, %v2252
    %v2254 = vpop.f32.mrb[0].mxu0
    %2255 = vmatprep.mubr.f32.mxu0 0.0
    %2256 = vmatmul.mubr.f32.gmra.mrb[0].mxu0 %v2174
    %v2257 = vpop.f32.mrb[0].mxu0
    %v2258 = vadd.f32 0.0, %v2257
    %v2259 = vpop.f32.mrb[0].mxu0
    %2260 = vdwg.mxu0
    %2261 = vrot.lane.b32.xlu0 %v1973, 120
    %v2262 = vpop.permute.xlu0 %2261
    %2263 = vrot.lane.b32.xlu0 %v1978, 120
    %v2264 = vpop.permute.xlu0 %2263
    %2265 = vrot.lane.b32.xlu0 %v1983, 120
    %v2266 = vpop.permute.xlu0 %2265
    %2267 = vrot.lane.b32.xlu0 %v1988, 120
    %v2268 = vpop.permute.xlu0 %2267
    %2269 = vrot.lane.b32.xlu0 %v1973, 88
    %v2270 = vpop.permute.xlu0 %2269
    %2271 = vrot.lane.b32.xlu0 %v1978, 88
    %v2272 = vpop.permute.xlu0 %2271
    %2273 = vrot.lane.b32.xlu0 %v1983, 88
    %v2274 = vpop.permute.xlu0 %2273
    %2275 = vrot.lane.b32.xlu0 %v1988, 88
    %v2276 = vpop.permute.xlu0 %2275
    %v2277 = vsel %vm268, %v2262, 0
    %v2279 = vsel %vm268, %v2264, 0
    %v2281 = vsel %vm268, %v2266, 0
    %v2283 = vsel %vm268, %v2268, 0
    %v2285 = vsel %vm268, %v2270, 0
    %v2287 = vsel %vm268, %v2272, 0
    %v2289 = vsel %vm268, %v2274, 0
    %v2291 = vsel %vm268, %v2276, 0
    %2293 = vmatprep.subr.mxu0 0.0
    %2294 = vmatpush1.xpose.msra.mxu0 %v2285
    %2295 = vmatprep.subr.mxu0 0.0
    %2296 = vmatpush1.xpose.msra.mxu0 %v2287
    %2297 = vmatprep.subr.mxu0 0.0
    %2298 = vmatpush1.xpose.msra.mxu0 %v2289
    %2299 = vmatprep.subr.mxu0 0.0
    %2300 = vmatpush1.xpose.msra.mxu0 %v2291
    %2301 = vmatprep.subr.mxu0 0.0
    %2302 = vmatpush1.xpose.msra.mxu0 0.0
    %2303 = vmatprep.subr.mxu0 0.0
    %2304 = vmatpush1.xpose.msra.mxu0 0.0
    %2305 = vmatprep.subr.mxu0 0.0
    %2306 = vmatpush1.xpose.msra.mxu0 0.0
    %2307 = vmatprep.subr.mxu0 0.0
    %2308 = vmatpush1.xpose.msra.mxu0 0.0
    %2309 = vmatprep.subr.mxu0 0.0
    %2310 = vmatpush1.xpose.msra.mxu0 0.0
    %2311 = vmatprep.subr.mxu0 0.0
    %2312 = vmatpush1.xpose.msra.mxu0 0.0
    %2313 = vmatprep.subr.mxu0 0.0
    %2314 = vmatpush1.xpose.msra.mxu0 0.0
    %2315 = vmatprep.subr.mxu0 0.0
    %2316 = vmatpush1.xpose.msra.mxu0 0.0
    %2317 = vmatprep.subr.mxu0 0.0
    %2318 = vmatpush1.xpose.msra.mxu0 0.0
    %2319 = vmatprep.subr.mxu0 0.0
    %2320 = vmatpush1.xpose.msra.mxu0 0.0
    %2321 = vmatprep.subr.mxu0 0.0
    %2322 = vmatpush1.xpose.msra.mxu0 0.0
    %2323 = vmatprep.subr.mxu0 0.0
    %2324 = vmatpush1.xpose.msra.mxu0 0.0
    %2325 = vmatprep.subr.mxu0 0.0
    %2326 = vmatpush1.xpose.msra.mxu0 0.0
    %2327 = vmatprep.subr.mxu0 0.0
    %2328 = vmatpush1.xpose.msra.mxu0 0.0
    %2329 = vmatprep.subr.mxu0 0.0
    %2330 = vmatpush1.xpose.msra.mxu0 0.0
    %2331 = vmatprep.subr.mxu0 0.0
    %2332 = vmatpush1.xpose.msra.mxu0 0.0
    %2333 = vmatprep.subr.mxu0 0.0
    %2334 = vmatpush1.xpose.msra.mxu0 0.0
    %2335 = vmatprep.subr.mxu0 0.0
    %2336 = vmatpush1.xpose.msra.mxu0 0.0
    %2337 = vmatprep.subr.mxu0 0.0
    %2338 = vmatpush1.xpose.msra.mxu0 0.0
    %2339 = vmatprep.subr.mxu0 0.0
    %2340 = vmatpush1.xpose.msra.mxu0 0.0
    %2341 = vmatprep.subr.mxu0 0.0
    %2342 = vmatpush1.xpose.msra.mxu0 0.0
    %2343 = vmatprep.subr.mxu0 0.0
    %2344 = vmatpush1.xpose.msra.mxu0 0.0
    %2345 = vmatprep.subr.mxu0 0.0
    %2346 = vmatpush1.xpose.msra.mxu0 0.0
    %2347 = vmatprep.subr.mxu0 0.0
    %2348 = vmatpush1.xpose.msra.mxu0 0.0
    %2349 = vmatprep.subr.mxu0 0.0
    %2350 = vmatpush1.xpose.msra.mxu0 0.0
    %2351 = vmatprep.subr.mxu0 0.0
    %2352 = vmatpush1.xpose.msra.mxu0 0.0
    %2353 = vmatprep.subr.mxu0 0.0
    %2354 = vmatpush1.xpose.msra.mxu0 0.0
    %2355 = vmatprep.subr.mxu0 0.0
    %2356 = vmatpush1.xpose.msra.mxu0 0.0
    %2357 = vmatprep.mubr.f32.mxu0 0.0
    %2358 = vmatmul.mubr.f32.gmra.mrb[0].mxu0 %v2277
    %v2359 = vpop.f32.mrb[0].mxu0
    %v2360 = vadd.f32 0.0, %v2359
    %v2361 = vpop.f32.mrb[0].mxu0
    %2362 = vmatprep.mubr.f32.mxu0 0.0
    %2363 = vmatmul.mubr.f32.gmra.mrb[0].mxu0 %v2279
    %v2364 = vpop.f32.mrb[0].mxu0
    %v2365 = vadd.f32 0.0, %v2364
    %v2366 = vpop.f32.mrb[0].mxu0
    %2367 = vmatprep.mubr.f32.mxu0 0.0
    %2368 = vmatmul.mubr.f32.gmra.mrb[0].mxu0 %v2281
    %v2369 = vpop.f32.mrb[0].mxu0
    %v2370 = vadd.f32 0.0, %v2369
    %v2371 = vpop.f32.mrb[0].mxu0
    %2372 = vmatprep.mubr.f32.mxu0 0.0
    %2373 = vmatmul.mubr.f32.gmra.mrb[0].mxu0 %v2283
    %v2374 = vpop.f32.mrb[0].mxu0
    %v2375 = vadd.f32 0.0, %v2374
    %v2376 = vpop.f32.mrb[0].mxu0
    %2377 = vdwg.mxu0
    %v2378 = vsel %vm129, %v2360, -1e+30
    %v2379 = vsel %vm130, %v2365, -1e+30
    %v2380 = vsel %vm131, %v2370, -1e+30
    %v2381 = vsel %vm132, %v2375, -1e+30
    %v2382 = vsel %vm158, %v2378, -inf
    %2383 = vmax.xlane.f32.xlu0 %v2382
    %v2384 = vpop.xlane.xlu0 %2383
    %v2385 = vsel %vm158, %v2379, -inf
    %2386 = vmax.xlane.f32.xlu0 %v2385
    %v2387 = vpop.xlane.xlu0 %2386
    %v2388 = vsel %vm158, %v2380, -inf
    %2389 = vmax.xlane.f32.xlu0 %v2388
    %v2390 = vpop.xlane.xlu0 %2389
    %v2391 = vsel %vm158, %v2381, -inf
    %2392 = vmax.xlane.f32.xlu0 %v2391
    %v2393 = vpop.xlane.xlu0 %2392
    %v2394 = vsub.f32 %v2378, %v2384
    %v2395 = vsub.f32 %v2379, %v2387
    %v2396 = vsub.f32 %v2380, %v2390
    %v2397 = vsub.f32 %v2381, %v2393
    %v2398 = vmul.f32 %v2394, 1.442695
    %v2399 = vpow.pop %v2398
    %v2400 = vmul.f32 %v2395, 1.442695
    %v2401 = vpow.pop %v2400
    %v2402 = vmul.f32 %v2396, 1.442695
    %v2403 = vpow.pop %v2402
    %v2404 = vmul.f32 %v2397, 1.442695
    %v2405 = vpow.pop %v2404
    %v2406 = vsel %vm158, %v2399, 0.0
    %2407 = vadd.xlane.f32.xlu0 %v2406
    %v2408 = vpop.xlane.xlu0 %2407
    %v2409 = vsel %vm158, %v2401, 0.0
    %2410 = vadd.xlane.f32.xlu0 %v2409
    %v2411 = vpop.xlane.xlu0 %2410
    %v2412 = vsel %vm158, %v2403, 0.0
    %2413 = vadd.xlane.f32.xlu0 %v2412
    %v2414 = vpop.xlane.xlu0 %2413
    %v2415 = vsel %vm158, %v2405, 0.0
    %2416 = vadd.xlane.f32.xlu0 %v2415
    %v2417 = vpop.xlane.xlu0 %2416
    %v2418 = vrcp.pop %v2408
    %v2419 = vrcp.pop %v2411
    %v2420 = vrcp.pop %v2414
    %v2421 = vrcp.pop %v2417
    %v2422 = vmul.f32 %v2399, %v2418
    %v2423 = vmul.f32 %v2401, %v2419
    %v2424 = vmul.f32 %v2403, %v2420
    %v2425 = vmul.f32 %v2405, %v2421
    %2426 = vrot.lane.b32.xlu0 %v1973, 56
    %v2427 = vpop.permute.xlu0 %2426
    %2428 = vrot.lane.b32.xlu0 %v1978, 56
    %v2429 = vpop.permute.xlu0 %2428
    %2430 = vrot.lane.b32.xlu0 %v1983, 56
    %v2431 = vpop.permute.xlu0 %2430
    %2432 = vrot.lane.b32.xlu0 %v1988, 56
    %v2433 = vpop.permute.xlu0 %2432
    %v2439 = vsel %vm158, %v2422, 0
    %v2442 = vsel %vm158, %v2423, 0
    %v2445 = vsel %vm158, %v2424, 0
    %v2448 = vsel %vm158, %v2425, 0
    %2450 = vmatprep.subr.mxu0 0.0
    %2451 = vmatpush1.msra.mxu0 %v2427
    %2452 = vmatprep.subr.mxu0 0.0
    %2453 = vmatpush1.msra.mxu0 %v2429
    %2454 = vmatprep.subr.mxu0 0.0
    %2455 = vmatpush1.msra.mxu0 %v2431
    %2456 = vmatprep.subr.mxu0 0.0
    %2457 = vmatpush1.msra.mxu0 %v2433
    %2458 = vmatprep.subr.mxu0 0.0
    %2459 = vmatpush1.msra.mxu0 0.0
    %2460 = vmatprep.subr.mxu0 0.0
    %2461 = vmatpush1.msra.mxu0 0.0
    %2462 = vmatprep.subr.mxu0 0.0
    %2463 = vmatpush1.msra.mxu0 0.0
    %2464 = vmatprep.subr.mxu0 0.0
    %2465 = vmatpush1.msra.mxu0 0.0
    %2466 = vmatprep.subr.mxu0 0.0
    %2467 = vmatpush1.msra.mxu0 0.0
    %2468 = vmatprep.subr.mxu0 0.0
    %2469 = vmatpush1.msra.mxu0 0.0
    %2470 = vmatprep.subr.mxu0 0.0
    %2471 = vmatpush1.msra.mxu0 0.0
    %2472 = vmatprep.subr.mxu0 0.0
    %2473 = vmatpush1.msra.mxu0 0.0
    %2474 = vmatprep.subr.mxu0 0.0
    %2475 = vmatpush1.msra.mxu0 0.0
    %2476 = vmatprep.subr.mxu0 0.0
    %2477 = vmatpush1.msra.mxu0 0.0
    %2478 = vmatprep.subr.mxu0 0.0
    %2479 = vmatpush1.msra.mxu0 0.0
    %2480 = vmatprep.subr.mxu0 0.0
    %2481 = vmatpush1.msra.mxu0 0.0
    %2482 = vmatprep.subr.mxu0 0.0
    %2483 = vmatpush1.msra.mxu0 0.0
    %2484 = vmatprep.subr.mxu0 0.0
    %2485 = vmatpush1.msra.mxu0 0.0
    %2486 = vmatprep.subr.mxu0 0.0
    %2487 = vmatpush1.msra.mxu0 0.0
    %2488 = vmatprep.subr.mxu0 0.0
    %2489 = vmatpush1.msra.mxu0 0.0
    %2490 = vmatprep.subr.mxu0 0.0
    %2491 = vmatpush1.msra.mxu0 0.0
    %2492 = vmatprep.subr.mxu0 0.0
    %2493 = vmatpush1.msra.mxu0 0.0
    %2494 = vmatprep.subr.mxu0 0.0
    %2495 = vmatpush1.msra.mxu0 0.0
    %2496 = vmatprep.subr.mxu0 0.0
    %2497 = vmatpush1.msra.mxu0 0.0
    %2498 = vmatprep.subr.mxu0 0.0
    %2499 = vmatpush1.msra.mxu0 0.0
    %2500 = vmatprep.subr.mxu0 0.0
    %2501 = vmatpush1.msra.mxu0 0.0
    %2502 = vmatprep.subr.mxu0 0.0
    %2503 = vmatpush1.msra.mxu0 0.0
    %2504 = vmatprep.subr.mxu0 0.0
    %2505 = vmatpush1.msra.mxu0 0.0
    %2506 = vmatprep.subr.mxu0 0.0
    %2507 = vmatpush1.msra.mxu0 0.0
    %2508 = vmatprep.subr.mxu0 0.0
    %2509 = vmatpush1.msra.mxu0 0.0
    %2510 = vmatprep.subr.mxu0 0.0
    %2511 = vmatpush1.msra.mxu0 0.0
    %2512 = vmatprep.subr.mxu0 0.0
    %2513 = vmatpush1.msra.mxu0 0.0
    %2514 = vmatprep.mubr.f32.mxu0 0.0
    %2515 = vmatmul.mubr.f32.gmra.mrb[0].mxu0 %v2439
    %v2516 = vpop.f32.mrb[0].mxu0
    %v2517 = vadd.f32 0.0, %v2516
    %v2518 = vpop.f32.mrb[0].mxu0
    %2519 = vmatprep.mubr.f32.mxu0 0.0
    %2520 = vmatmul.mubr.f32.gmra.mrb[0].mxu0 %v2442
    %v2521 = vpop.f32.mrb[0].mxu0
    %v2522 = vadd.f32 0.0, %v2521
    %v2523 = vpop.f32.mrb[0].mxu0
    %2524 = vmatprep.mubr.f32.mxu0 0.0
    %2525 = vmatmul.mubr.f32.gmra.mrb[0].mxu0 %v2445
    %v2526 = vpop.f32.mrb[0].mxu0
    %v2527 = vadd.f32 0.0, %v2526
    %v2528 = vpop.f32.mrb[0].mxu0
    %2529 = vmatprep.mubr.f32.mxu0 0.0
    %2530 = vmatmul.mubr.f32.gmra.mrb[0].mxu0 %v2448
    %v2531 = vpop.f32.mrb[0].mxu0
    %v2532 = vadd.f32 0.0, %v2531
    %v2533 = vpop.f32.mrb[0].mxu0
    %2534 = vdwg.mxu0
    %2535 = vrot.lane.b32.xlu0 %v1973, 112
    %v2536 = vpop.permute.xlu0 %2535
    %2537 = vrot.lane.b32.xlu0 %v1978, 112
    %v2538 = vpop.permute.xlu0 %2537
    %2539 = vrot.lane.b32.xlu0 %v1983, 112
    %v2540 = vpop.permute.xlu0 %2539
    %2541 = vrot.lane.b32.xlu0 %v1988, 112
    %v2542 = vpop.permute.xlu0 %2541
    %2543 = vrot.lane.b32.xlu0 %v1973, 80
    %v2544 = vpop.permute.xlu0 %2543
    %2545 = vrot.lane.b32.xlu0 %v1978, 80
    %v2546 = vpop.permute.xlu0 %2545
    %2547 = vrot.lane.b32.xlu0 %v1983, 80
    %v2548 = vpop.permute.xlu0 %2547
    %2549 = vrot.lane.b32.xlu0 %v1988, 80
    %v2550 = vpop.permute.xlu0 %2549
    %v2551 = vsel %vm268, %v2536, 0
    %v2553 = vsel %vm268, %v2538, 0
    %v2555 = vsel %vm268, %v2540, 0
    %v2557 = vsel %vm268, %v2542, 0
    %v2559 = vsel %vm268, %v2544, 0
    %v2561 = vsel %vm268, %v2546, 0
    %v2563 = vsel %vm268, %v2548, 0
    %v2565 = vsel %vm268, %v2550, 0
    %2567 = vmatprep.subr.mxu0 0.0
    %2568 = vmatpush1.xpose.msra.mxu0 %v2559
    %2569 = vmatprep.subr.mxu0 0.0
    %2570 = vmatpush1.xpose.msra.mxu0 %v2561
    %2571 = vmatprep.subr.mxu0 0.0
    %2572 = vmatpush1.xpose.msra.mxu0 %v2563
    %2573 = vmatprep.subr.mxu0 0.0
    %2574 = vmatpush1.xpose.msra.mxu0 %v2565
    %2575 = vmatprep.subr.mxu0 0.0
    %2576 = vmatpush1.xpose.msra.mxu0 0.0
    %2577 = vmatprep.subr.mxu0 0.0
    %2578 = vmatpush1.xpose.msra.mxu0 0.0
    %2579 = vmatprep.subr.mxu0 0.0
    %2580 = vmatpush1.xpose.msra.mxu0 0.0
    %2581 = vmatprep.subr.mxu0 0.0
    %2582 = vmatpush1.xpose.msra.mxu0 0.0
    %2583 = vmatprep.subr.mxu0 0.0
    %2584 = vmatpush1.xpose.msra.mxu0 0.0
    %2585 = vmatprep.subr.mxu0 0.0
    %2586 = vmatpush1.xpose.msra.mxu0 0.0
    %2587 = vmatprep.subr.mxu0 0.0
    %2588 = vmatpush1.xpose.msra.mxu0 0.0
    %2589 = vmatprep.subr.mxu0 0.0
    %2590 = vmatpush1.xpose.msra.mxu0 0.0
    %2591 = vmatprep.subr.mxu0 0.0
    %2592 = vmatpush1.xpose.msra.mxu0 0.0
    %2593 = vmatprep.subr.mxu0 0.0
    %2594 = vmatpush1.xpose.msra.mxu0 0.0
    %2595 = vmatprep.subr.mxu0 0.0
    %2596 = vmatpush1.xpose.msra.mxu0 0.0
    %2597 = vmatprep.subr.mxu0 0.0
    %2598 = vmatpush1.xpose.msra.mxu0 0.0
    %2599 = vmatprep.subr.mxu0 0.0
    %2600 = vmatpush1.xpose.msra.mxu0 0.0
    %2601 = vmatprep.subr.mxu0 0.0
    %2602 = vmatpush1.xpose.msra.mxu0 0.0
    %2603 = vmatprep.subr.mxu0 0.0
    %2604 = vmatpush1.xpose.msra.mxu0 0.0
    %2605 = vmatprep.subr.mxu0 0.0
    %2606 = vmatpush1.xpose.msra.mxu0 0.0
    %2607 = vmatprep.subr.mxu0 0.0
    %2608 = vmatpush1.xpose.msra.mxu0 0.0
    %2609 = vmatprep.subr.mxu0 0.0
    %2610 = vmatpush1.xpose.msra.mxu0 0.0
    %2611 = vmatprep.subr.mxu0 0.0
    %2612 = vmatpush1.xpose.msra.mxu0 0.0
    %2613 = vmatprep.subr.mxu0 0.0
    %2614 = vmatpush1.xpose.msra.mxu0 0.0
    %2615 = vmatprep.subr.mxu0 0.0
    %2616 = vmatpush1.xpose.msra.mxu0 0.0
    %2617 = vmatprep.subr.mxu0 0.0
    %2618 = vmatpush1.xpose.msra.mxu0 0.0
    %2619 = vmatprep.subr.mxu0 0.0
    %2620 = vmatpush1.xpose.msra.mxu0 0.0
    %2621 = vmatprep.subr.mxu0 0.0
    %2622 = vmatpush1.xpose.msra.mxu0 0.0
    %2623 = vmatprep.subr.mxu0 0.0
    %2624 = vmatpush1.xpose.msra.mxu0 0.0
    %2625 = vmatprep.subr.mxu0 0.0
    %2626 = vmatpush1.xpose.msra.mxu0 0.0
    %2627 = vmatprep.subr.mxu0 0.0
    %2628 = vmatpush1.xpose.msra.mxu0 0.0
    %2629 = vmatprep.subr.mxu0 0.0
    %2630 = vmatpush1.xpose.msra.mxu0 0.0
    %2631 = vmatprep.mubr.f32.mxu0 0.0
    %2632 = vmatmul.mubr.f32.gmra.mrb[0].mxu0 %v2551
    %v2633 = vpop.f32.mrb[0].mxu0
    %v2634 = vadd.f32 0.0, %v2633
    %v2635 = vpop.f32.mrb[0].mxu0
    %2636 = vmatprep.mubr.f32.mxu0 0.0
    %2637 = vmatmul.mubr.f32.gmra.mrb[0].mxu0 %v2553
    %v2638 = vpop.f32.mrb[0].mxu0
    %v2639 = vadd.f32 0.0, %v2638
    %v2640 = vpop.f32.mrb[0].mxu0
    %2641 = vmatprep.mubr.f32.mxu0 0.0
    %2642 = vmatmul.mubr.f32.gmra.mrb[0].mxu0 %v2555
    %v2643 = vpop.f32.mrb[0].mxu0
    %v2644 = vadd.f32 0.0, %v2643
    %v2645 = vpop.f32.mrb[0].mxu0
    %2646 = vmatprep.mubr.f32.mxu0 0.0
    %2647 = vmatmul.mubr.f32.gmra.mrb[0].mxu0 %v2557
    %v2648 = vpop.f32.mrb[0].mxu0
    %v2649 = vadd.f32 0.0, %v2648
    %v2650 = vpop.f32.mrb[0].mxu0
    %2651 = vdwg.mxu0
    %v2652 = vsel %vm129, %v2634, -1e+30
    %v2653 = vsel %vm130, %v2639, -1e+30
    %v2654 = vsel %vm131, %v2644, -1e+30
    %v2655 = vsel %vm132, %v2649, -1e+30
    %v2656 = vsel %vm158, %v2652, -inf
    %2657 = vmax.xlane.f32.xlu0 %v2656
    %v2658 = vpop.xlane.xlu0 %2657
    %v2659 = vsel %vm158, %v2653, -inf
    %2660 = vmax.xlane.f32.xlu0 %v2659
    %v2661 = vpop.xlane.xlu0 %2660
    %v2662 = vsel %vm158, %v2654, -inf
    %2663 = vmax.xlane.f32.xlu0 %v2662
    %v2664 = vpop.xlane.xlu0 %2663
    %v2665 = vsel %vm158, %v2655, -inf
    %2666 = vmax.xlane.f32.xlu0 %v2665
    %v2667 = vpop.xlane.xlu0 %2666
    %v2668 = vsub.f32 %v2652, %v2658
    %v2669 = vsub.f32 %v2653, %v2661
    %v2670 = vsub.f32 %v2654, %v2664
    %v2671 = vsub.f32 %v2655, %v2667
    %v2672 = vmul.f32 %v2668, 1.442695
    %v2673 = vpow.pop %v2672
    %v2674 = vmul.f32 %v2669, 1.442695
    %v2675 = vpow.pop %v2674
    %v2676 = vmul.f32 %v2670, 1.442695
    %v2677 = vpow.pop %v2676
    %v2678 = vmul.f32 %v2671, 1.442695
    %v2679 = vpow.pop %v2678
    %v2680 = vsel %vm158, %v2673, 0.0
    %2681 = vadd.xlane.f32.xlu0 %v2680
    %v2682 = vpop.xlane.xlu0 %2681
    %v2683 = vsel %vm158, %v2675, 0.0
    %2684 = vadd.xlane.f32.xlu0 %v2683
    %v2685 = vpop.xlane.xlu0 %2684
    %v2686 = vsel %vm158, %v2677, 0.0
    %2687 = vadd.xlane.f32.xlu0 %v2686
    %v2688 = vpop.xlane.xlu0 %2687
    %v2689 = vsel %vm158, %v2679, 0.0
    %2690 = vadd.xlane.f32.xlu0 %v2689
    %v2691 = vpop.xlane.xlu0 %2690
    %v2692 = vrcp.pop %v2682
    %v2693 = vrcp.pop %v2685
    %v2694 = vrcp.pop %v2688
    %v2695 = vrcp.pop %v2691
    %v2696 = vmul.f32 %v2673, %v2692
    %v2697 = vmul.f32 %v2675, %v2693
    %v2698 = vmul.f32 %v2677, %v2694
    %v2699 = vmul.f32 %v2679, %v2695
    %2700 = vrot.lane.b32.xlu0 %v1973, 48
    %v2701 = vpop.permute.xlu0 %2700
    %2702 = vrot.lane.b32.xlu0 %v1978, 48
    %v2703 = vpop.permute.xlu0 %2702
    %2704 = vrot.lane.b32.xlu0 %v1983, 48
    %v2705 = vpop.permute.xlu0 %2704
    %2706 = vrot.lane.b32.xlu0 %v1988, 48
    %v2707 = vpop.permute.xlu0 %2706
    %v2713 = vsel %vm158, %v2696, 0
    %v2716 = vsel %vm158, %v2697, 0
    %v2719 = vsel %vm158, %v2698, 0
    %v2722 = vsel %vm158, %v2699, 0
    %2724 = vmatprep.subr.mxu0 0.0
    %2725 = vmatpush1.msra.mxu0 %v2701
    %2726 = vmatprep.subr.mxu0 0.0
    %2727 = vmatpush1.msra.mxu0 %v2703
    %2728 = vmatprep.subr.mxu0 0.0
    %2729 = vmatpush1.msra.mxu0 %v2705
    %2730 = vmatprep.subr.mxu0 0.0
    %2731 = vmatpush1.msra.mxu0 %v2707
    %2732 = vmatprep.subr.mxu0 0.0
    %2733 = vmatpush1.msra.mxu0 0.0
    %2734 = vmatprep.subr.mxu0 0.0
    %2735 = vmatpush1.msra.mxu0 0.0
    %2736 = vmatprep.subr.mxu0 0.0
    %2737 = vmatpush1.msra.mxu0 0.0
    %2738 = vmatprep.subr.mxu0 0.0
    %2739 = vmatpush1.msra.mxu0 0.0
    %2740 = vmatprep.subr.mxu0 0.0
    %2741 = vmatpush1.msra.mxu0 0.0
    %2742 = vmatprep.subr.mxu0 0.0
    %2743 = vmatpush1.msra.mxu0 0.0
    %2744 = vmatprep.subr.mxu0 0.0
    %2745 = vmatpush1.msra.mxu0 0.0
    %2746 = vmatprep.subr.mxu0 0.0
    %2747 = vmatpush1.msra.mxu0 0.0
    %2748 = vmatprep.subr.mxu0 0.0
    %2749 = vmatpush1.msra.mxu0 0.0
    %2750 = vmatprep.subr.mxu0 0.0
    %2751 = vmatpush1.msra.mxu0 0.0
    %2752 = vmatprep.subr.mxu0 0.0
    %2753 = vmatpush1.msra.mxu0 0.0
    %2754 = vmatprep.subr.mxu0 0.0
    %2755 = vmatpush1.msra.mxu0 0.0
    %2756 = vmatprep.subr.mxu0 0.0
    %2757 = vmatpush1.msra.mxu0 0.0
    %2758 = vmatprep.subr.mxu0 0.0
    %2759 = vmatpush1.msra.mxu0 0.0
    %2760 = vmatprep.subr.mxu0 0.0
    %2761 = vmatpush1.msra.mxu0 0.0
    %2762 = vmatprep.subr.mxu0 0.0
    %2763 = vmatpush1.msra.mxu0 0.0
    %2764 = vmatprep.subr.mxu0 0.0
    %2765 = vmatpush1.msra.mxu0 0.0
    %2766 = vmatprep.subr.mxu0 0.0
    %2767 = vmatpush1.msra.mxu0 0.0
    %2768 = vmatprep.subr.mxu0 0.0
    %2769 = vmatpush1.msra.mxu0 0.0
    %2770 = vmatprep.subr.mxu0 0.0
    %2771 = vmatpush1.msra.mxu0 0.0
    %2772 = vmatprep.subr.mxu0 0.0
    %2773 = vmatpush1.msra.mxu0 0.0
    %2774 = vmatprep.subr.mxu0 0.0
    %2775 = vmatpush1.msra.mxu0 0.0
    %2776 = vmatprep.subr.mxu0 0.0
    %2777 = vmatpush1.msra.mxu0 0.0
    %2778 = vmatprep.subr.mxu0 0.0
    %2779 = vmatpush1.msra.mxu0 0.0
    %2780 = vmatprep.subr.mxu0 0.0
    %2781 = vmatpush1.msra.mxu0 0.0
    %2782 = vmatprep.subr.mxu0 0.0
    %2783 = vmatpush1.msra.mxu0 0.0
    %2784 = vmatprep.subr.mxu0 0.0
    %2785 = vmatpush1.msra.mxu0 0.0
    %2786 = vmatprep.subr.mxu0 0.0
    %2787 = vmatpush1.msra.mxu0 0.0
    %2788 = vmatprep.mubr.f32.mxu0 0.0
    %2789 = vmatmul.mubr.f32.gmra.mrb[0].mxu0 %v2713
    %v2790 = vpop.f32.mrb[0].mxu0
    %v2791 = vadd.f32 0.0, %v2790
    %v2792 = vpop.f32.mrb[0].mxu0
    %2793 = vmatprep.mubr.f32.mxu0 0.0
    %2794 = vmatmul.mubr.f32.gmra.mrb[0].mxu0 %v2716
    %v2795 = vpop.f32.mrb[0].mxu0
    %v2796 = vadd.f32 0.0, %v2795
    %v2797 = vpop.f32.mrb[0].mxu0
    %2798 = vmatprep.mubr.f32.mxu0 0.0
    %2799 = vmatmul.mubr.f32.gmra.mrb[0].mxu0 %v2719
    %v2800 = vpop.f32.mrb[0].mxu0
    %v2801 = vadd.f32 0.0, %v2800
    %v2802 = vpop.f32.mrb[0].mxu0
    %2803 = vmatprep.mubr.f32.mxu0 0.0
    %2804 = vmatmul.mubr.f32.gmra.mrb[0].mxu0 %v2722
    %v2805 = vpop.f32.mrb[0].mxu0
    %v2806 = vadd.f32 0.0, %v2805
    %v2807 = vpop.f32.mrb[0].mxu0
    %2808 = vdwg.mxu0
    %2809 = vrot.lane.b32.xlu0 %v1973, 104
    %v2810 = vpop.permute.xlu0 %2809
    %2811 = vrot.lane.b32.xlu0 %v1978, 104
    %v2812 = vpop.permute.xlu0 %2811
    %2813 = vrot.lane.b32.xlu0 %v1983, 104
    %v2814 = vpop.permute.xlu0 %2813
    %2815 = vrot.lane.b32.xlu0 %v1988, 104
    %v2816 = vpop.permute.xlu0 %2815
    %2817 = vrot.lane.b32.xlu0 %v1973, 72
    %v2818 = vpop.permute.xlu0 %2817
    %2819 = vrot.lane.b32.xlu0 %v1978, 72
    %v2820 = vpop.permute.xlu0 %2819
    %2821 = vrot.lane.b32.xlu0 %v1983, 72
    %v2822 = vpop.permute.xlu0 %2821
    %2823 = vrot.lane.b32.xlu0 %v1988, 72
    %v2824 = vpop.permute.xlu0 %2823
    %v2825 = vsel %vm268, %v2810, 0
    %v2827 = vsel %vm268, %v2812, 0
    %v2829 = vsel %vm268, %v2814, 0
    %v2831 = vsel %vm268, %v2816, 0
    %v2833 = vsel %vm268, %v2818, 0
    %v2835 = vsel %vm268, %v2820, 0
    %v2837 = vsel %vm268, %v2822, 0
    %v2839 = vsel %vm268, %v2824, 0
    %2841 = vmatprep.subr.mxu0 0.0
    %2842 = vmatpush1.xpose.msra.mxu0 %v2833
    %2843 = vmatprep.subr.mxu0 0.0
    %2844 = vmatpush1.xpose.msra.mxu0 %v2835
    %2845 = vmatprep.subr.mxu0 0.0
    %2846 = vmatpush1.xpose.msra.mxu0 %v2837
    %2847 = vmatprep.subr.mxu0 0.0
    %2848 = vmatpush1.xpose.msra.mxu0 %v2839
    %2849 = vmatprep.subr.mxu0 0.0
    %2850 = vmatpush1.xpose.msra.mxu0 0.0
    %2851 = vmatprep.subr.mxu0 0.0
    %2852 = vmatpush1.xpose.msra.mxu0 0.0
    %2853 = vmatprep.subr.mxu0 0.0
    %2854 = vmatpush1.xpose.msra.mxu0 0.0
    %2855 = vmatprep.subr.mxu0 0.0
    %2856 = vmatpush1.xpose.msra.mxu0 0.0
    %2857 = vmatprep.subr.mxu0 0.0
    %2858 = vmatpush1.xpose.msra.mxu0 0.0
    %2859 = vmatprep.subr.mxu0 0.0
    %2860 = vmatpush1.xpose.msra.mxu0 0.0
    %2861 = vmatprep.subr.mxu0 0.0
    %2862 = vmatpush1.xpose.msra.mxu0 0.0
    %2863 = vmatprep.subr.mxu0 0.0
    %2864 = vmatpush1.xpose.msra.mxu0 0.0
    %2865 = vmatprep.subr.mxu0 0.0
    %2866 = vmatpush1.xpose.msra.mxu0 0.0
    %2867 = vmatprep.subr.mxu0 0.0
    %2868 = vmatpush1.xpose.msra.mxu0 0.0
    %2869 = vmatprep.subr.mxu0 0.0
    %2870 = vmatpush1.xpose.msra.mxu0 0.0
    %2871 = vmatprep.subr.mxu0 0.0
    %2872 = vmatpush1.xpose.msra.mxu0 0.0
    %2873 = vmatprep.subr.mxu0 0.0
    %2874 = vmatpush1.xpose.msra.mxu0 0.0
    %2875 = vmatprep.subr.mxu0 0.0
    %2876 = vmatpush1.xpose.msra.mxu0 0.0
    %2877 = vmatprep.subr.mxu0 0.0
    %2878 = vmatpush1.xpose.msra.mxu0 0.0
    %2879 = vmatprep.subr.mxu0 0.0
    %2880 = vmatpush1.xpose.msra.mxu0 0.0
    %2881 = vmatprep.subr.mxu0 0.0
    %2882 = vmatpush1.xpose.msra.mxu0 0.0
    %2883 = vmatprep.subr.mxu0 0.0
    %2884 = vmatpush1.xpose.msra.mxu0 0.0
    %2885 = vmatprep.subr.mxu0 0.0
    %2886 = vmatpush1.xpose.msra.mxu0 0.0
    %2887 = vmatprep.subr.mxu0 0.0
    %2888 = vmatpush1.xpose.msra.mxu0 0.0
    %2889 = vmatprep.subr.mxu0 0.0
    %2890 = vmatpush1.xpose.msra.mxu0 0.0
    %2891 = vmatprep.subr.mxu0 0.0
    %2892 = vmatpush1.xpose.msra.mxu0 0.0
    %2893 = vmatprep.subr.mxu0 0.0
    %2894 = vmatpush1.xpose.msra.mxu0 0.0
    %2895 = vmatprep.subr.mxu0 0.0
    %2896 = vmatpush1.xpose.msra.mxu0 0.0
    %2897 = vmatprep.subr.mxu0 0.0
    %2898 = vmatpush1.xpose.msra.mxu0 0.0
    %2899 = vmatprep.subr.mxu0 0.0
    %2900 = vmatpush1.xpose.msra.mxu0 0.0
    %2901 = vmatprep.subr.mxu0 0.0
    %2902 = vmatpush1.xpose.msra.mxu0 0.0
    %2903 = vmatprep.subr.mxu0 0.0
    %2904 = vmatpush1.xpose.msra.mxu0 0.0
    %2905 = vmatprep.mubr.f32.mxu0 0.0
    %2906 = vmatmul.mubr.f32.gmra.mrb[0].mxu0 %v2825
    %v2907 = vpop.f32.mrb[0].mxu0
    %v2908 = vadd.f32 0.0, %v2907
    %v2909 = vpop.f32.mrb[0].mxu0
    %2910 = vmatprep.mubr.f32.mxu0 0.0
    %2911 = vmatmul.mubr.f32.gmra.mrb[0].mxu0 %v2827
    %v2912 = vpop.f32.mrb[0].mxu0
    %v2913 = vadd.f32 0.0, %v2912
    %v2914 = vpop.f32.mrb[0].mxu0
    %2915 = vmatprep.mubr.f32.mxu0 0.0
    %2916 = vmatmul.mubr.f32.gmra.mrb[0].mxu0 %v2829
    %v2917 = vpop.f32.mrb[0].mxu0
    %v2918 = vadd.f32 0.0, %v2917
    %v2919 = vpop.f32.mrb[0].mxu0
    %2920 = vmatprep.mubr.f32.mxu0 0.0
    %2921 = vmatmul.mubr.f32.gmra.mrb[0].mxu0 %v2831
    %v2922 = vpop.f32.mrb[0].mxu0
    %v2923 = vadd.f32 0.0, %v2922
    %v2924 = vpop.f32.mrb[0].mxu0
    %2925 = vdwg.mxu0
    %v2926 = vsel %vm129, %v2908, -1e+30
    %v2927 = vsel %vm130, %v2913, -1e+30
    %v2928 = vsel %vm131, %v2918, -1e+30
    %v2929 = vsel %vm132, %v2923, -1e+30
    %v2930 = vsel %vm158, %v2926, -inf
    %2931 = vmax.xlane.f32.xlu0 %v2930
    %v2932 = vpop.xlane.xlu0 %2931
    %v2933 = vsel %vm158, %v2927, -inf
    %2934 = vmax.xlane.f32.xlu0 %v2933
    %v2935 = vpop.xlane.xlu0 %2934
    %v2936 = vsel %vm158, %v2928, -inf
    %2937 = vmax.xlane.f32.xlu0 %v2936
    %v2938 = vpop.xlane.xlu0 %2937
    %v2939 = vsel %vm158, %v2929, -inf
    %2940 = vmax.xlane.f32.xlu0 %v2939
    %v2941 = vpop.xlane.xlu0 %2940
    %v2942 = vsub.f32 %v2926, %v2932
    %v2943 = vsub.f32 %v2927, %v2935
    %v2944 = vsub.f32 %v2928, %v2938
    %v2945 = vsub.f32 %v2929, %v2941
    %v2946 = vmul.f32 %v2942, 1.442695
    %v2947 = vpow.pop %v2946
    %v2948 = vmul.f32 %v2943, 1.442695
    %v2949 = vpow.pop %v2948
    %v2950 = vmul.f32 %v2944, 1.442695
    %v2951 = vpow.pop %v2950
    %v2952 = vmul.f32 %v2945, 1.442695
    %v2953 = vpow.pop %v2952
    %v2954 = vsel %vm158, %v2947, 0.0
    %2955 = vadd.xlane.f32.xlu0 %v2954
    %v2956 = vpop.xlane.xlu0 %2955
    %v2957 = vsel %vm158, %v2949, 0.0
    %2958 = vadd.xlane.f32.xlu0 %v2957
    %v2959 = vpop.xlane.xlu0 %2958
    %v2960 = vsel %vm158, %v2951, 0.0
    %2961 = vadd.xlane.f32.xlu0 %v2960
    %v2962 = vpop.xlane.xlu0 %2961
    %v2963 = vsel %vm158, %v2953, 0.0
    %2964 = vadd.xlane.f32.xlu0 %v2963
    %v2965 = vpop.xlane.xlu0 %2964
    %v2966 = vrcp.pop %v2956
    %v2967 = vrcp.pop %v2959
    %v2968 = vrcp.pop %v2962
    %v2969 = vrcp.pop %v2965
    %v2970 = vmul.f32 %v2947, %v2966
    %v2971 = vmul.f32 %v2949, %v2967
    %v2972 = vmul.f32 %v2951, %v2968
    %v2973 = vmul.f32 %v2953, %v2969
    %2974 = vrot.lane.b32.xlu0 %v1973, 40
    %v2975 = vpop.permute.xlu0 %2974
    %2976 = vrot.lane.b32.xlu0 %v1978, 40
    %v2977 = vpop.permute.xlu0 %2976
    %2978 = vrot.lane.b32.xlu0 %v1983, 40
    %v2979 = vpop.permute.xlu0 %2978
    %2980 = vrot.lane.b32.xlu0 %v1988, 40
    %v2981 = vpop.permute.xlu0 %2980
    %v2987 = vsel %vm158, %v2970, 0
    %v2990 = vsel %vm158, %v2971, 0
    %v2993 = vsel %vm158, %v2972, 0
    %v2996 = vsel %vm158, %v2973, 0
    %2998 = vmatprep.subr.mxu0 0.0
    %2999 = vmatpush1.msra.mxu0 %v2975
    %3000 = vmatprep.subr.mxu0 0.0
    %3001 = vmatpush1.msra.mxu0 %v2977
    %3002 = vmatprep.subr.mxu0 0.0
    %3003 = vmatpush1.msra.mxu0 %v2979
    %3004 = vmatprep.subr.mxu0 0.0
    %3005 = vmatpush1.msra.mxu0 %v2981
    %3006 = vmatprep.subr.mxu0 0.0
    %3007 = vmatpush1.msra.mxu0 0.0
    %3008 = vmatprep.subr.mxu0 0.0
    %3009 = vmatpush1.msra.mxu0 0.0
    %3010 = vmatprep.subr.mxu0 0.0
    %3011 = vmatpush1.msra.mxu0 0.0
    %3012 = vmatprep.subr.mxu0 0.0
    %3013 = vmatpush1.msra.mxu0 0.0
    %3014 = vmatprep.subr.mxu0 0.0
    %3015 = vmatpush1.msra.mxu0 0.0
    %3016 = vmatprep.subr.mxu0 0.0
    %3017 = vmatpush1.msra.mxu0 0.0
    %3018 = vmatprep.subr.mxu0 0.0
    %3019 = vmatpush1.msra.mxu0 0.0
    %3020 = vmatprep.subr.mxu0 0.0
    %3021 = vmatpush1.msra.mxu0 0.0
    %3022 = vmatprep.subr.mxu0 0.0
    %3023 = vmatpush1.msra.mxu0 0.0
    %3024 = vmatprep.subr.mxu0 0.0
    %3025 = vmatpush1.msra.mxu0 0.0
    %3026 = vmatprep.subr.mxu0 0.0
    %3027 = vmatpush1.msra.mxu0 0.0
    %3028 = vmatprep.subr.mxu0 0.0
    %3029 = vmatpush1.msra.mxu0 0.0
    %3030 = vmatprep.subr.mxu0 0.0
    %3031 = vmatpush1.msra.mxu0 0.0
    %3032 = vmatprep.subr.mxu0 0.0
    %3033 = vmatpush1.msra.mxu0 0.0
    %3034 = vmatprep.subr.mxu0 0.0
    %3035 = vmatpush1.msra.mxu0 0.0
    %3036 = vmatprep.subr.mxu0 0.0
    %3037 = vmatpush1.msra.mxu0 0.0
    %3038 = vmatprep.subr.mxu0 0.0
    %3039 = vmatpush1.msra.mxu0 0.0
    %3040 = vmatprep.subr.mxu0 0.0
    %3041 = vmatpush1.msra.mxu0 0.0
    %3042 = vmatprep.subr.mxu0 0.0
    %3043 = vmatpush1.msra.mxu0 0.0
    %3044 = vmatprep.subr.mxu0 0.0
    %3045 = vmatpush1.msra.mxu0 0.0
    %3046 = vmatprep.subr.mxu0 0.0
    %3047 = vmatpush1.msra.mxu0 0.0
    %3048 = vmatprep.subr.mxu0 0.0
    %3049 = vmatpush1.msra.mxu0 0.0
    %3050 = vmatprep.subr.mxu0 0.0
    %3051 = vmatpush1.msra.mxu0 0.0
    %3052 = vmatprep.subr.mxu0 0.0
    %3053 = vmatpush1.msra.mxu0 0.0
    %3054 = vmatprep.subr.mxu0 0.0
    %3055 = vmatpush1.msra.mxu0 0.0
    %3056 = vmatprep.subr.mxu0 0.0
    %3057 = vmatpush1.msra.mxu0 0.0
    %3058 = vmatprep.subr.mxu0 0.0
    %3059 = vmatpush1.msra.mxu0 0.0
    %3060 = vmatprep.subr.mxu0 0.0
    %3061 = vmatpush1.msra.mxu0 0.0
    %3062 = vmatprep.mubr.f32.mxu0 0.0
    %3063 = vmatmul.mubr.f32.gmra.mrb[0].mxu0 %v2987
    %v3064 = vpop.f32.mrb[0].mxu0
    %v3065 = vadd.f32 0.0, %v3064
    %v3066 = vpop.f32.mrb[0].mxu0
    %3067 = vmatprep.mubr.f32.mxu0 0.0
    %3068 = vmatmul.mubr.f32.gmra.mrb[0].mxu0 %v2990
    %v3069 = vpop.f32.mrb[0].mxu0
    %v3070 = vadd.f32 0.0, %v3069
    %v3071 = vpop.f32.mrb[0].mxu0
    %3072 = vmatprep.mubr.f32.mxu0 0.0
    %3073 = vmatmul.mubr.f32.gmra.mrb[0].mxu0 %v2993
    %v3074 = vpop.f32.mrb[0].mxu0
    %v3075 = vadd.f32 0.0, %v3074
    %v3076 = vpop.f32.mrb[0].mxu0
    %3077 = vmatprep.mubr.f32.mxu0 0.0
    %3078 = vmatmul.mubr.f32.gmra.mrb[0].mxu0 %v2996
    %v3079 = vpop.f32.mrb[0].mxu0
    %v3080 = vadd.f32 0.0, %v3079
    %v3081 = vpop.f32.mrb[0].mxu0
    %3082 = vdwg.mxu0
    %3087 = vrot.lane.b32.xlu0 %v2517, 8
    %v3088 = vpop.permute.xlu0 %3087
    %3089 = vrot.lane.b32.xlu0 %v2522, 8
    %v3090 = vpop.permute.xlu0 %3089
    %3091 = vrot.lane.b32.xlu0 %v2527, 8
    %v3092 = vpop.permute.xlu0 %3091
    %3093 = vrot.lane.b32.xlu0 %v2532, 8
    %v3094 = vpop.permute.xlu0 %3093
    %3103 = vrot.lane.b32.xlu0 %v2791, 16
    %v3104 = vpop.permute.xlu0 %3103
    %3105 = vrot.lane.b32.xlu0 %v2796, 16
    %v3106 = vpop.permute.xlu0 %3105
    %3107 = vrot.lane.b32.xlu0 %v2801, 16
    %v3108 = vpop.permute.xlu0 %3107
    %3109 = vrot.lane.b32.xlu0 %v2806, 16
    %v3110 = vpop.permute.xlu0 %3109
    %3119 = vrot.lane.b32.xlu0 %v3065, 24
    %v3120 = vpop.permute.xlu0 %3119
    %3121 = vrot.lane.b32.xlu0 %v3070, 24
    %v3122 = vpop.permute.xlu0 %3121
    %3123 = vrot.lane.b32.xlu0 %v3075, 24
    %v3124 = vpop.permute.xlu0 %3123
    %3125 = vrot.lane.b32.xlu0 %v3080, 24
    %v3126 = vpop.permute.xlu0 %3125
    %v3131 = vsel %vm268, %v2243, %v3088
    %v3132 = vsel %vm268, %v2248, %v3090
    %v3133 = vsel %vm268, %v2253, %v3092
    %v3134 = vsel %vm268, %v2258, %v3094
    %v3135 = vsel %vm1401, %v3131, %v3104
    %v3136 = vsel %vm1401, %v3132, %v3106
    %v3137 = vsel %vm1401, %v3133, %v3108
    %v3138 = vsel %vm1401, %v3134, %v3110
    %v3139 = vsel %vm1406, %v3135, %v3120
    %v3140 = vsel %vm1406, %v3136, %v3122
    %v3141 = vsel %vm1406, %v3137, %v3124
    %v3142 = vsel %vm1406, %v3138, %v3126
    %v3143 = vlaneseq
    %v3144 = vshrl.u32 %v3143, 7
    %v3145 = vsub.s32 1, %v3144
    %v3146 = vrot.slane %v1889, %v3145
    %v3148 = vsel %vm158, %v3139, 0
    %v3151 = vsel %vm158, %v3140, 0
    %v3154 = vsel %vm158, %v3141, 0
    %v3157 = vsel %vm158, %v3142, 0
    %3159 = vmatprep.subr.mxu0 0.0
    %3160 = vmatpush1.msra.mxu0 %v1870
    %3161 = vmatprep.subr.mxu0 0.0
    %3162 = vmatpush1.msra.mxu0 %v1871
    %3163 = vmatprep.subr.mxu0 0.0
    %3164 = vmatpush1.msra.mxu0 %v1872
    %3165 = vmatprep.subr.mxu0 0.0
    %3166 = vmatpush1.msra.mxu0 %v1873
    %3167 = vmatprep.subr.mxu0 0.0
    %3168 = vmatpush1.msra.mxu0 0.0
    %3169 = vmatprep.subr.mxu0 0.0
    %3170 = vmatpush1.msra.mxu0 0.0
    %3171 = vmatprep.subr.mxu0 0.0
    %3172 = vmatpush1.msra.mxu0 0.0
    %3173 = vmatprep.subr.mxu0 0.0
    %3174 = vmatpush1.msra.mxu0 0.0
    %3175 = vmatprep.subr.mxu0 0.0
    %3176 = vmatpush1.msra.mxu0 0.0
    %3177 = vmatprep.subr.mxu0 0.0
    %3178 = vmatpush1.msra.mxu0 0.0
    %3179 = vmatprep.subr.mxu0 0.0
    %3180 = vmatpush1.msra.mxu0 0.0
    %3181 = vmatprep.subr.mxu0 0.0
    %3182 = vmatpush1.msra.mxu0 0.0
    %3183 = vmatprep.subr.mxu0 0.0
    %3184 = vmatpush1.msra.mxu0 0.0
    %3185 = vmatprep.subr.mxu0 0.0
    %3186 = vmatpush1.msra.mxu0 0.0
    %3187 = vmatprep.subr.mxu0 0.0
    %3188 = vmatpush1.msra.mxu0 0.0
    %3189 = vmatprep.subr.mxu0 0.0
    %3190 = vmatpush1.msra.mxu0 0.0
    %3191 = vmatprep.subr.mxu0 0.0
    %3192 = vmatpush1.msra.mxu0 0.0
    %3193 = vmatprep.subr.mxu0 0.0
    %3194 = vmatpush1.msra.mxu0 0.0
    %3195 = vmatprep.subr.mxu0 0.0
    %3196 = vmatpush1.msra.mxu0 0.0
    %3197 = vmatprep.subr.mxu0 0.0
    %3198 = vmatpush1.msra.mxu0 0.0
    %3199 = vmatprep.subr.mxu0 0.0
    %3200 = vmatpush1.msra.mxu0 0.0
    %3201 = vmatprep.subr.mxu0 0.0
    %3202 = vmatpush1.msra.mxu0 0.0
    %3203 = vmatprep.subr.mxu0 0.0
    %3204 = vmatpush1.msra.mxu0 0.0
    %3205 = vmatprep.subr.mxu0 0.0
    %3206 = vmatpush1.msra.mxu0 0.0
    %3207 = vmatprep.subr.mxu0 0.0
    %3208 = vmatpush1.msra.mxu0 0.0
    %3209 = vmatprep.subr.mxu0 0.0
    %3210 = vmatpush1.msra.mxu0 0.0
    %3211 = vmatprep.subr.mxu0 0.0
    %3212 = vmatpush1.msra.mxu0 0.0
    %3213 = vmatprep.subr.mxu0 0.0
    %3214 = vmatpush1.msra.mxu0 0.0
    %3215 = vmatprep.subr.mxu0 0.0
    %3216 = vmatpush1.msra.mxu0 0.0
    %3217 = vmatprep.subr.mxu0 0.0
    %3218 = vmatpush1.msra.mxu0 0.0
    %3219 = vmatprep.subr.mxu0 0.0
    %3220 = vmatpush1.msra.mxu0 0.0
    %3221 = vmatprep.subr.mxu0 0.0
    %3222 = vmatpush1.msra.mxu0 0.0
    %3223 = vmatprep.mubr.f32.mxu0 0.0
    %3224 = vmatmul.mubr.f32.gmra.mrb[0].mxu0 %v3148
    %v3225 = vpop.f32.mrb[0].mxu0
    %v3226 = vadd.f32 %v3146, %v3225
    %v3227 = vpop.f32.mrb[0].mxu0
    %3228 = vmatprep.mubr.f32.mxu0 0.0
    %3229 = vmatmul.mubr.f32.gmra.mrb[0].mxu0 %v3151
    %v3230 = vpop.f32.mrb[0].mxu0
    %v3231 = vadd.f32 %v3146, %v3230
    %v3232 = vpop.f32.mrb[0].mxu0
    %3233 = vmatprep.mubr.f32.mxu0 0.0
    %3234 = vmatmul.mubr.f32.gmra.mrb[0].mxu0 %v3154
    %v3235 = vpop.f32.mrb[0].mxu0
    %v3236 = vadd.f32 %v3146, %v3235
    %v3237 = vpop.f32.mrb[0].mxu0
    %3238 = vmatprep.mubr.f32.mxu0 0.0
    %3239 = vmatmul.mubr.f32.gmra.mrb[0].mxu0 %v3157
    %v3240 = vpop.f32.mrb[0].mxu0
    %v3241 = vadd.f32 %v3146, %v3240
    %v3242 = vpop.f32.mrb[0].mxu0
    %3243 = vdwg.mxu0
    %v3244 = vadd.f32 %v1860, %v3226
    %v3245 = vadd.f32 %v1861, %v3231
    %v3246 = vadd.f32 %v1862, %v3236
    %v3247 = vadd.f32 %v1863, %v3241
    %v3248 = vsel %vm158, %v3244, 0.0
    %3249 = vadd.xlane.f32.xlu0 %v3248
    %v3250 = vpop.xlane.xlu0 %3249
    %v3251 = vsel %vm158, %v3245, 0.0
    %3252 = vadd.xlane.f32.xlu0 %v3251
    %v3253 = vpop.xlane.xlu0 %3252
    %v3254 = vsel %vm158, %v3246, 0.0
    %3255 = vadd.xlane.f32.xlu0 %v3254
    %v3256 = vpop.xlane.xlu0 %3255
    %v3257 = vsel %vm158, %v3247, 0.0
    %3258 = vadd.xlane.f32.xlu0 %v3257
    %v3259 = vpop.xlane.xlu0 %3258
    %v3260 = vmul.f32 %v3250, %v1528
    %v3261 = vmul.f32 %v3253, %v1528
    %v3262 = vmul.f32 %v3256, %v1528
    %v3263 = vmul.f32 %v3259, %v1528
    %v3264 = vsub.f32 %v3244, %v3260
    %v3265 = vsub.f32 %v3245, %v3261
    %v3266 = vsub.f32 %v3246, %v3262
    %v3267 = vsub.f32 %v3247, %v3263
    %v3268 = vmul.f32 %v3264, %v3264
    %v3269 = vmul.f32 %v3265, %v3265
    %v3270 = vmul.f32 %v3266, %v3266
    %v3271 = vmul.f32 %v3267, %v3267
    %v3272 = vsel %vm158, %v3268, 0.0
    %3273 = vadd.xlane.f32.xlu0 %v3272
    %v3274 = vpop.xlane.xlu0 %3273
    %v3275 = vsel %vm158, %v3269, 0.0
    %3276 = vadd.xlane.f32.xlu0 %v3275
    %v3277 = vpop.xlane.xlu0 %3276
    %v3278 = vsel %vm158, %v3270, 0.0
    %3279 = vadd.xlane.f32.xlu0 %v3278
    %v3280 = vpop.xlane.xlu0 %3279
    %v3281 = vsel %vm158, %v3271, 0.0
    %3282 = vadd.xlane.f32.xlu0 %v3281
    %v3283 = vpop.xlane.xlu0 %3282
    %v3284 = vmul.f32 %v3274, %v1528
    %v3285 = vmul.f32 %v3277, %v1528
    %v3286 = vmul.f32 %v3280, %v1528
    %v3287 = vmul.f32 %v3283, %v1528
    %v3288 = vadd.f32 %v3284, 1e-05
    %v3289 = vadd.f32 %v3285, 1e-05
    %v3290 = vadd.f32 %v3286, 1e-05
    %v3291 = vadd.f32 %v3287, 1e-05
    %v3292 = vrsqrt.pop %v3288
    %v3293 = vrsqrt.pop %v3289
    %v3294 = vrsqrt.pop %v3290
    %v3295 = vrsqrt.pop %v3291
    %v3296 = vmul.f32 %v3264, %v3292
    %v3297 = vmul.f32 %v3265, %v3293
    %v3298 = vmul.f32 %v3266, %v3294
    %v3299 = vmul.f32 %v3267, %v3295
    %v3300 = vlaneseq
    %v3301 = vshrl.u32 %v3300, 7
    %v3302 = vsub.s32 4, %v3301
    %v3303 = vrot.slane %v1889, %v3302
    %v3304 = vmul.f32 %v3296, %v3303
    %v3305 = vmul.f32 %v3297, %v3303
    %v3306 = vmul.f32 %v3298, %v3303
    %v3307 = vmul.f32 %v3299, %v3303
    %v3308 = vlaneseq
    %v3309 = vshrl.u32 %v3308, 7
    %v3310 = vsub.s32 5, %v3309
    %v3311 = vrot.slane %v1889, %v3310
    %v3312 = vadd.f32 %v3304, %v3311
    %v3313 = vadd.f32 %v3305, %v3311
    %v3314 = vadd.f32 %v3306, %v3311
    %v3315 = vadd.f32 %v3307, %v3311
    %v3316 = vlaneseq
    %v3317 = vshrl.u32 %v3316, 7
    %v3318 = vsub.s32 2, %v3317
    %v3319 = vrot.slane %v1889, %v3318
    %v3321 = vsel %vm158, %v3312, 0
    %v3324 = vsel %vm158, %v3313, 0
    %v3327 = vsel %vm158, %v3314, 0
    %v3330 = vsel %vm158, %v3315, 0
    %3332 = vmatprep.subr.mxu0 0.0
    %3333 = vmatpush1.msra.mxu0 %v1875
    %3334 = vmatprep.subr.mxu0 0.0
    %3335 = vmatpush1.msra.mxu0 %v1876
    %3336 = vmatprep.subr.mxu0 0.0
    %3337 = vmatpush1.msra.mxu0 %v1877
    %3338 = vmatprep.subr.mxu0 0.0
    %3339 = vmatpush1.msra.mxu0 %v1878
    %3340 = vmatprep.subr.mxu0 0.0
    %3341 = vmatpush1.msra.mxu0 0.0
    %3342 = vmatprep.subr.mxu0 0.0
    %3343 = vmatpush1.msra.mxu0 0.0
    %3344 = vmatprep.subr.mxu0 0.0
    %3345 = vmatpush1.msra.mxu0 0.0
    %3346 = vmatprep.subr.mxu0 0.0
    %3347 = vmatpush1.msra.mxu0 0.0
    %3348 = vmatprep.subr.mxu0 0.0
    %3349 = vmatpush1.msra.mxu0 0.0
    %3350 = vmatprep.subr.mxu0 0.0
    %3351 = vmatpush1.msra.mxu0 0.0
    %3352 = vmatprep.subr.mxu0 0.0
    %3353 = vmatpush1.msra.mxu0 0.0
    %3354 = vmatprep.subr.mxu0 0.0
    %3355 = vmatpush1.msra.mxu0 0.0
    %3356 = vmatprep.subr.mxu0 0.0
    %3357 = vmatpush1.msra.mxu0 0.0
    %3358 = vmatprep.subr.mxu0 0.0
    %3359 = vmatpush1.msra.mxu0 0.0
    %3360 = vmatprep.subr.mxu0 0.0
    %3361 = vmatpush1.msra.mxu0 0.0
    %3362 = vmatprep.subr.mxu0 0.0
    %3363 = vmatpush1.msra.mxu0 0.0
    %3364 = vmatprep.subr.mxu0 0.0
    %3365 = vmatpush1.msra.mxu0 0.0
    %3366 = vmatprep.subr.mxu0 0.0
    %3367 = vmatpush1.msra.mxu0 0.0
    %3368 = vmatprep.subr.mxu0 0.0
    %3369 = vmatpush1.msra.mxu0 0.0
    %3370 = vmatprep.subr.mxu0 0.0
    %3371 = vmatpush1.msra.mxu0 0.0
    %3372 = vmatprep.subr.mxu0 0.0
    %3373 = vmatpush1.msra.mxu0 0.0
    %3374 = vmatprep.subr.mxu0 0.0
    %3375 = vmatpush1.msra.mxu0 0.0
    %3376 = vmatprep.subr.mxu0 0.0
    %3377 = vmatpush1.msra.mxu0 0.0
    %3378 = vmatprep.subr.mxu0 0.0
    %3379 = vmatpush1.msra.mxu0 0.0
    %3380 = vmatprep.subr.mxu0 0.0
    %3381 = vmatpush1.msra.mxu0 0.0
    %3382 = vmatprep.subr.mxu0 0.0
    %3383 = vmatpush1.msra.mxu0 0.0
    %3384 = vmatprep.subr.mxu0 0.0
    %3385 = vmatpush1.msra.mxu0 0.0
    %3386 = vmatprep.subr.mxu0 0.0
    %3387 = vmatpush1.msra.mxu0 0.0
    %3388 = vmatprep.subr.mxu0 0.0
    %3389 = vmatpush1.msra.mxu0 0.0
    %3390 = vmatprep.subr.mxu0 0.0
    %3391 = vmatpush1.msra.mxu0 0.0
    %3392 = vmatprep.subr.mxu0 0.0
    %3393 = vmatpush1.msra.mxu0 0.0
    %3394 = vmatprep.subr.mxu0 0.0
    %3395 = vmatpush1.msra.mxu0 0.0
    %3396 = vmatprep.mubr.f32.mxu0 0.0
    %3397 = vmatmul.mubr.f32.gmra.mrb[0].mxu0 %v3321
    %v3398 = vpop.f32.mrb[0].mxu0
    %v3399 = vadd.f32 %v3319, %v3398
    %v3400 = vpop.f32.mrb[0].mxu0
    %3401 = vmatprep.mubr.f32.mxu0 0.0
    %3402 = vmatmul.mubr.f32.gmra.mrb[0].mxu0 %v3324
    %v3403 = vpop.f32.mrb[0].mxu0
    %v3404 = vadd.f32 %v3319, %v3403
    %v3405 = vpop.f32.mrb[0].mxu0
    %3406 = vmatprep.mubr.f32.mxu0 0.0
    %3407 = vmatmul.mubr.f32.gmra.mrb[0].mxu0 %v3327
    %v3408 = vpop.f32.mrb[0].mxu0
    %v3409 = vadd.f32 %v3319, %v3408
    %v3410 = vpop.f32.mrb[0].mxu0
    %3411 = vmatprep.mubr.f32.mxu0 0.0
    %3412 = vmatmul.mubr.f32.gmra.mrb[0].mxu0 %v3330
    %v3413 = vpop.f32.mrb[0].mxu0
    %v3414 = vadd.f32 %v3319, %v3413
    %v3415 = vpop.f32.mrb[0].mxu0
    %3416 = vdwg.mxu0
    %v3417 = vmax.f32 %v3399, 0.0
    %v3418 = vmax.f32 %v3404, 0.0
    %v3419 = vmax.f32 %v3409, 0.0
    %v3420 = vmax.f32 %v3414, 0.0
    %v3421 = vlaneseq
    %v3422 = vshrl.u32 %v3421, 7
    %v3423 = vsub.s32 3, %v3422
    %v3424 = vrot.slane %v1889, %v3423
    %v3426 = vsel %vm1694, %v3417, 0
    %v3429 = vsel %vm1694, %v3418, 0
    %v3432 = vsel %vm1694, %v3419, 0
    %v3435 = vsel %vm1694, %v3420, 0
    %3437 = vmatprep.subr.mxu0 0.0
    %3438 = vmatpush1.msra.mxu0 %v1880
    %3439 = vmatprep.subr.mxu0 0.0
    %3440 = vmatpush1.msra.mxu0 %v1881
    %3441 = vmatprep.subr.mxu0 0.0
    %3442 = vmatpush1.msra.mxu0 %v1882
    %3443 = vmatprep.subr.mxu0 0.0
    %3444 = vmatpush1.msra.mxu0 %v1883
    %3445 = vmatprep.subr.mxu0 0.0
    %3446 = vmatpush1.msra.mxu0 %v1884
    %3447 = vmatprep.subr.mxu0 0.0
    %3448 = vmatpush1.msra.mxu0 %v1885
    %3449 = vmatprep.subr.mxu0 0.0
    %3450 = vmatpush1.msra.mxu0 %v1886
    %3451 = vmatprep.subr.mxu0 0.0
    %3452 = vmatpush1.msra.mxu0 %v1887
    %3453 = vmatprep.subr.mxu0 0.0
    %3454 = vmatpush1.msra.mxu0 0.0
    %3455 = vmatprep.subr.mxu0 0.0
    %3456 = vmatpush1.msra.mxu0 0.0
    %3457 = vmatprep.subr.mxu0 0.0
    %3458 = vmatpush1.msra.mxu0 0.0
    %3459 = vmatprep.subr.mxu0 0.0
    %3460 = vmatpush1.msra.mxu0 0.0
    %3461 = vmatprep.subr.mxu0 0.0
    %3462 = vmatpush1.msra.mxu0 0.0
    %3463 = vmatprep.subr.mxu0 0.0
    %3464 = vmatpush1.msra.mxu0 0.0
    %3465 = vmatprep.subr.mxu0 0.0
    %3466 = vmatpush1.msra.mxu0 0.0
    %3467 = vmatprep.subr.mxu0 0.0
    %3468 = vmatpush1.msra.mxu0 0.0
    %3469 = vmatprep.subr.mxu0 0.0
    %3470 = vmatpush1.msra.mxu0 0.0
    %3471 = vmatprep.subr.mxu0 0.0
    %3472 = vmatpush1.msra.mxu0 0.0
    %3473 = vmatprep.subr.mxu0 0.0
    %3474 = vmatpush1.msra.mxu0 0.0
    %3475 = vmatprep.subr.mxu0 0.0
    %3476 = vmatpush1.msra.mxu0 0.0
    %3477 = vmatprep.subr.mxu0 0.0
    %3478 = vmatpush1.msra.mxu0 0.0
    %3479 = vmatprep.subr.mxu0 0.0
    %3480 = vmatpush1.msra.mxu0 0.0
    %3481 = vmatprep.subr.mxu0 0.0
    %3482 = vmatpush1.msra.mxu0 0.0
    %3483 = vmatprep.subr.mxu0 0.0
    %3484 = vmatpush1.msra.mxu0 0.0
    %3485 = vmatprep.subr.mxu0 0.0
    %3486 = vmatpush1.msra.mxu0 0.0
    %3487 = vmatprep.subr.mxu0 0.0
    %3488 = vmatpush1.msra.mxu0 0.0
    %3489 = vmatprep.subr.mxu0 0.0
    %3490 = vmatpush1.msra.mxu0 0.0
    %3491 = vmatprep.subr.mxu0 0.0
    %3492 = vmatpush1.msra.mxu0 0.0
    %3493 = vmatprep.subr.mxu0 0.0
    %3494 = vmatpush1.msra.mxu0 0.0
    %3495 = vmatprep.subr.mxu0 0.0
    %3496 = vmatpush1.msra.mxu0 0.0
    %3497 = vmatprep.subr.mxu0 0.0
    %3498 = vmatpush1.msra.mxu0 0.0
    %3499 = vmatprep.subr.mxu0 0.0
    %3500 = vmatpush1.msra.mxu0 0.0
    %3501 = vmatprep.mubr.f32.mxu0 0.0
    %3502 = vmatmul.mubr.f32.gmra.mrb[0].mxu0 %v3426
    %v3503 = vpop.f32.mrb[0].mxu0
    %v3504 = vadd.f32 %v3424, %v3503
    %v3505 = vpop.f32.mrb[0].mxu0
    %3506 = vmatprep.mubr.f32.mxu0 0.0
    %3507 = vmatmul.mubr.f32.gmra.mrb[0].mxu0 %v3429
    %v3508 = vpop.f32.mrb[0].mxu0
    %v3509 = vadd.f32 %v3424, %v3508
    %v3510 = vpop.f32.mrb[0].mxu0
    %3511 = vmatprep.mubr.f32.mxu0 0.0
    %3512 = vmatmul.mubr.f32.gmra.mrb[0].mxu0 %v3432
    %v3513 = vpop.f32.mrb[0].mxu0
    %v3514 = vadd.f32 %v3424, %v3513
    %v3515 = vpop.f32.mrb[0].mxu0
    %3516 = vmatprep.mubr.f32.mxu0 0.0
    %3517 = vmatmul.mubr.f32.gmra.mrb[0].mxu0 %v3435
    %v3518 = vpop.f32.mrb[0].mxu0
    %v3519 = vadd.f32 %v3424, %v3518
    %v3520 = vpop.f32.mrb[0].mxu0
    %3521 = vdwg.mxu0
    %v3522 = vadd.f32 %v3312, %v3504
    %v3523 = vadd.f32 %v3313, %v3509
    %v3524 = vadd.f32 %v3314, %v3514
    %v3525 = vadd.f32 %v3315, %v3519
    %v3526 = vsel %vm158, %v3522, 0.0
    %3527 = vadd.xlane.f32.xlu0 %v3526
    %v3528 = vpop.xlane.xlu0 %3527
    %v3529 = vsel %vm158, %v3523, 0.0
    %3530 = vadd.xlane.f32.xlu0 %v3529
    %v3531 = vpop.xlane.xlu0 %3530
    %v3532 = vsel %vm158, %v3524, 0.0
    %3533 = vadd.xlane.f32.xlu0 %v3532
    %v3534 = vpop.xlane.xlu0 %3533
    %v3535 = vsel %vm158, %v3525, 0.0
    %3536 = vadd.xlane.f32.xlu0 %v3535
    %v3537 = vpop.xlane.xlu0 %3536
    %v3538 = vmul.f32 %v3528, %v1528
    %v3539 = vmul.f32 %v3531, %v1528
    %v3540 = vmul.f32 %v3534, %v1528
    %v3541 = vmul.f32 %v3537, %v1528
    %v3542 = vsub.f32 %v3522, %v3538
    %v3543 = vsub.f32 %v3523, %v3539
    %v3544 = vsub.f32 %v3524, %v3540
    %v3545 = vsub.f32 %v3525, %v3541
    %v3546 = vmul.f32 %v3542, %v3542
    %v3547 = vmul.f32 %v3543, %v3543
    %v3548 = vmul.f32 %v3544, %v3544
    %v3549 = vmul.f32 %v3545, %v3545
    %v3550 = vsel %vm158, %v3546, 0.0
    %3551 = vadd.xlane.f32.xlu0 %v3550
    %v3552 = vpop.xlane.xlu0 %3551
    %v3553 = vsel %vm158, %v3547, 0.0
    %3554 = vadd.xlane.f32.xlu0 %v3553
    %v3555 = vpop.xlane.xlu0 %3554
    %v3556 = vsel %vm158, %v3548, 0.0
    %3557 = vadd.xlane.f32.xlu0 %v3556
    %v3558 = vpop.xlane.xlu0 %3557
    %v3559 = vsel %vm158, %v3549, 0.0
    %3560 = vadd.xlane.f32.xlu0 %v3559
    %v3561 = vpop.xlane.xlu0 %3560
    %v3562 = vmul.f32 %v3552, %v1528
    %v3563 = vmul.f32 %v3555, %v1528
    %v3564 = vmul.f32 %v3558, %v1528
    %v3565 = vmul.f32 %v3561, %v1528
    %v3566 = vadd.f32 %v3562, 1e-05
    %v3567 = vadd.f32 %v3563, 1e-05
    %v3568 = vadd.f32 %v3564, 1e-05
    %v3569 = vadd.f32 %v3565, 1e-05
    %v3570 = vrsqrt.pop %v3566
    %v3571 = vrsqrt.pop %v3567
    %v3572 = vrsqrt.pop %v3568
    %v3573 = vrsqrt.pop %v3569
    %v3574 = vmul.f32 %v3542, %v3570
    %v3575 = vmul.f32 %v3543, %v3571
    %v3576 = vmul.f32 %v3544, %v3572
    %v3577 = vmul.f32 %v3545, %v3573
    %v3578 = vlaneseq
    %v3579 = vshrl.u32 %v3578, 7
    %v3580 = vsub.s32 6, %v3579
    %v3581 = vrot.slane %v1889, %v3580
    %v3582 = vmul.f32 %v3574, %v3581
    %v3583 = vmul.f32 %v3575, %v3581
    %v3584 = vmul.f32 %v3576, %v3581
    %v3585 = vmul.f32 %v3577, %v3581
    %v3586 = vlaneseq
    %v3587 = vshrl.u32 %v3586, 7
    %v3588 = vsub.s32 7, %v3587
    %v3589 = vrot.slane %v1889, %v3588
    %v3590 = vadd.f32 %v3582, %v3589
    %v3591 = vadd.f32 %v3583, %v3589
    %v3592 = vadd.f32 %v3584, %v3589
    %v3593 = vadd.f32 %v3585, %v3589
    %v3594 = vld [vmem:[#allocation5] sm:$0xff]
    %v3595 = vld [vmem:[#allocation5 + $0x8] sm:$0xff]
    %v3596 = vld [vmem:[#allocation5 + $0x10] sm:$0xff]
    %v3597 = vld [vmem:[#allocation5 + $0x18] sm:$0xff]
    %v3598 = vld [vmem:[%s7] sm:$0x1]
    %v3600 = vlaneseq
    %v3601 = vshrl.u32 %v3600, 7
    %v3602 = vsub.s32 0, %v3601
    %v3603 = vrot.slane %v3598, %v3602
    %v3606 = vsel %vm158, %v3590, 0
    %v3609 = vsel %vm158, %v3591, 0
    %v3612 = vsel %vm158, %v3592, 0
    %v3615 = vsel %vm158, %v3593, 0
    %3617 = vmatprep.subr.mxu0 0.0
    %3618 = vmatpush1.msra.mxu0 %v3594
    %3619 = vmatprep.subr.mxu0 0.0
    %3620 = vmatpush1.msra.mxu0 %v3595
    %3621 = vmatprep.subr.mxu0 0.0
    %3622 = vmatpush1.msra.mxu0 %v3596
    %3623 = vmatprep.subr.mxu0 0.0
    %3624 = vmatpush1.msra.mxu0 %v3597
    %3625 = vmatprep.subr.mxu0 0.0
    %3626 = vmatpush1.msra.mxu0 0.0
    %3627 = vmatprep.subr.mxu0 0.0
    %3628 = vmatpush1.msra.mxu0 0.0
    %3629 = vmatprep.subr.mxu0 0.0
    %3630 = vmatpush1.msra.mxu0 0.0
    %3631 = vmatprep.subr.mxu0 0.0
    %3632 = vmatpush1.msra.mxu0 0.0
    %3633 = vmatprep.subr.mxu0 0.0
    %3634 = vmatpush1.msra.mxu0 0.0
    %3635 = vmatprep.subr.mxu0 0.0
    %3636 = vmatpush1.msra.mxu0 0.0
    %3637 = vmatprep.subr.mxu0 0.0
    %3638 = vmatpush1.msra.mxu0 0.0
    %3639 = vmatprep.subr.mxu0 0.0
    %3640 = vmatpush1.msra.mxu0 0.0
    %3641 = vmatprep.subr.mxu0 0.0
    %3642 = vmatpush1.msra.mxu0 0.0
    %3643 = vmatprep.subr.mxu0 0.0
    %3644 = vmatpush1.msra.mxu0 0.0
    %3645 = vmatprep.subr.mxu0 0.0
    %3646 = vmatpush1.msra.mxu0 0.0
    %3647 = vmatprep.subr.mxu0 0.0
    %3648 = vmatpush1.msra.mxu0 0.0
    %3649 = vmatprep.subr.mxu0 0.0
    %3650 = vmatpush1.msra.mxu0 0.0
    %3651 = vmatprep.subr.mxu0 0.0
    %3652 = vmatpush1.msra.mxu0 0.0
    %3653 = vmatprep.subr.mxu0 0.0
    %3654 = vmatpush1.msra.mxu0 0.0
    %3655 = vmatprep.subr.mxu0 0.0
    %3656 = vmatpush1.msra.mxu0 0.0
    %3657 = vmatprep.subr.mxu0 0.0
    %3658 = vmatpush1.msra.mxu0 0.0
    %3659 = vmatprep.subr.mxu0 0.0
    %3660 = vmatpush1.msra.mxu0 0.0
    %3661 = vmatprep.subr.mxu0 0.0
    %3662 = vmatpush1.msra.mxu0 0.0
    %3663 = vmatprep.subr.mxu0 0.0
    %3664 = vmatpush1.msra.mxu0 0.0
    %3665 = vmatprep.subr.mxu0 0.0
    %3666 = vmatpush1.msra.mxu0 0.0
    %3667 = vmatprep.subr.mxu0 0.0
    %3668 = vmatpush1.msra.mxu0 0.0
    %3669 = vmatprep.subr.mxu0 0.0
    %3670 = vmatpush1.msra.mxu0 0.0
    %3671 = vmatprep.subr.mxu0 0.0
    %3672 = vmatpush1.msra.mxu0 0.0
    %3673 = vmatprep.subr.mxu0 0.0
    %3674 = vmatpush1.msra.mxu0 0.0
    %3675 = vmatprep.subr.mxu0 0.0
    %3676 = vmatpush1.msra.mxu0 0.0
    %3677 = vmatprep.subr.mxu0 0.0
    %3678 = vmatpush1.msra.mxu0 0.0
    %3679 = vmatprep.subr.mxu0 0.0
    %3680 = vmatpush1.msra.mxu0 0.0
    %3681 = vmatprep.mubr.f32.mxu0 0.0
    %3682 = vmatmul.mubr.f32.gmra.mrb[0].mxu0 %v3606
    %v3683 = vpop.f32.mrb[0].mxu0
    %v3684 = vadd.f32 %v3603, %v3683
    %v3685 = vpop.f32.mrb[0].mxu0
    %3686 = vmatprep.mubr.f32.mxu0 0.0
    %3687 = vmatmul.mubr.f32.gmra.mrb[0].mxu0 %v3609
    %v3688 = vpop.f32.mrb[0].mxu0
    %v3689 = vadd.f32 %v3603, %v3688
    %v3690 = vpop.f32.mrb[0].mxu0
    %3691 = vmatprep.mubr.f32.mxu0 0.0
    %3692 = vmatmul.mubr.f32.gmra.mrb[0].mxu0 %v3612
    %v3693 = vpop.f32.mrb[0].mxu0
    %v3694 = vadd.f32 %v3603, %v3693
    %v3695 = vpop.f32.mrb[0].mxu0
    %3696 = vmatprep.mubr.f32.mxu0 0.0
    %3697 = vmatmul.mubr.f32.gmra.mrb[0].mxu0 %v3615
    %v3698 = vpop.f32.mrb[0].mxu0
    %v3699 = vadd.f32 %v3603, %v3698
    %v3700 = vpop.f32.mrb[0].mxu0
    %3701 = vdwg.mxu0
    %3702 = vst.msk [vmem:[#allocation7] sm:$0xff] %vm1694, %v3684
    %3703 = vst.msk [vmem:[#allocation7 + $0x8] sm:$0xff] %vm1694, %v3689
    %3704 = vst.msk [vmem:[#allocation7 + $0x10] sm:$0xff] %vm1694, %v3694
    %3705 = vst.msk [vmem:[#allocation7 + $0x18] sm:$0xff] %vm1694, %v3699
    // Predicated region
    $region42: #{tpu_custom_call.1} parent=1 // pred_check
      _
    $region43: #{tpu_custom_call.1} parent=1 // pred_check_branch
      %3707 = sbr.rel (0) target = $region45
    $region44: #{tpu_custom_call.1} parent=1 // pred_region
      %s3709 = ssub.s32 512, 512
      %3710 = vsyncadd [#allocation4], %s3709
      %s3711 = sshll.u32 [#allocation7], 4
      %s3712 = int_to_ptr.vmem [resolvable:$true] %s3711
      %3717 = dma.vmem_to_hbm [thread:$0]  %s3712, 512, %s8, [#allocation4], 128, 128, 8
    $region45: #{tpu_custom_call.1} parent=1 // pred_fallthru
      _
    // Predicated region
    $region46: #{tpu_custom_call.1} parent=1 // pred_check
      _
    $region47: #{tpu_custom_call.1} parent=1 // pred_check_branch
      %3719 = sbr.rel (0) target = $region49
    $region48: #{tpu_custom_call.1} parent=1 // pred_region
      %3720 = dma.done [#allocation4], 512
    $region49: #{tpu_custom_call.1} parent=1 // pred_fallthru
      _
    %3721 = vsyncpa [#allocation3], 1
    %3722 = vsyncpa [#allocation6], 1
    %3723 = vsyncpa [#allocation4], 1

</llo_original>
